<compile_context>
chip_gen: v5e
topology: v5e:2x2
jax: 0.10.0
libtpu: 0.0.40
codegen_flags: <defaults>
</compile_context>

<pallas_src>
import numpy as np
import jax
import jax.numpy as jnp
from jax.experimental import pallas as pl
from jax.experimental.pallas import tpu as pltpu


# ---- static network geometry (fc1 = Linear(16*7*7, 10) forces 28x28 inputs) ----
H1, W1 = 28, 28                      # conv1 spatial size
WP1 = W1 + 2                         # 30: padded row stride of conv1's flat frame
L1 = (H1 - 1) * WP1 + W1             # 838: valid flat length of conv1 output
P1 = (H1 - 2) * WP1 + (W1 - 2) + 1   # 807: pool1 gather-domain length

H2, W2 = 14, 14                      # conv2 spatial size (after pool1)
WP2 = W2 + 2                         # 16
S2 = (H2 + 2) * WP2                  # 256: padded-flat length of conv2's input
L2 = (H2 - 1) * WP2 + W2             # 222
P2 = (H2 - 2) * WP2 + (W2 - 2) + 1   # 205

C1, C2, NCLS = 8, 16, 10
HW3 = (H2 // 2) * (W2 // 2)          # 49 = 7*7
LANE_OUT = 128                       # class dim padded to one full lane group


# ---------------------------------------------------------------------------
# Pallas kernel: full forward pass for one image
# ---------------------------------------------------------------------------
def _cnn_fused_kernel(x_ref, w1_ref, b1_ref, w2_ref, b2_ref, sel1_ref, sel2_ref,
                      wfc_ref, bfc_ref, out_ref, act1_ref, x2_ref, act2_ref, p2_ref):
    f32 = jnp.float32

    # ---- conv1: 1 -> 8 channels, 3x3, pad 1 (VPU shift-and-accumulate) ------
    acc1 = None
    for kh in range(3):
        for kw in range(3):
            off = kh * WP1 + kw
            term = w1_ref[kh * 3 + kw] * x_ref[0, :, off:off + L1]   # (8,1)*(1,L1)
            acc1 = term if acc1 is None else acc1 + term
    act1_ref[...] = jnp.maximum(acc1 + b1_ref[...], 0.0)             # bias + ReLU

    # ---- maxpool 2x2/2 + relayout into conv2's padded 16x16 flat frame ------
    m1 = jnp.maximum(
        jnp.maximum(act1_ref[:, 0:P1], act1_ref[:, 1:P1 + 1]),
        jnp.maximum(act1_ref[:, WP1:WP1 + P1], act1_ref[:, WP1 + 1:WP1 + 1 + P1]))
    x2_ref[...] = jnp.dot(m1, sel1_ref[...], preferred_element_type=f32)   # (8, 256)

    # ---- conv2: 8 -> 16 channels, 3x3, pad 1 (9 accumulated MXU matmuls) ----
    acc2 = None
    for kh in range(3):
        for kw in range(3):
            off = kh * WP2 + kw
            term = jnp.dot(w2_ref[kh * 3 + kw], x2_ref[:, off:off + L2],
                           preferred_element_type=f32)                # (16, L2)
            acc2 = term if acc2 is None else acc2 + term
    act2_ref[...] = jnp.maximum(acc2 + b2_ref[...], 0.0)

    # ---- maxpool 2x2/2 -> (16, 49) in PyTorch (h, w) order -------------------
    m2 = jnp.maximum(
        jnp.maximum(act2_ref[:, 0:P2], act2_ref[:, 1:P2 + 1]),
        jnp.maximum(act2_ref[:, WP2:WP2 + P2], act2_ref[:, WP2 + 1:WP2 + 1 + P2]))
    p2_ref[...] = jnp.dot(m2, sel2_ref[...], preferred_element_type=f32)   # (16, 49)

    # ---- fc1: per-channel (1,49)@(49,128) matmuls, PyTorch (c,h,w) order -----
    # Class dim is zero-padded to 128 lanes -> the final store is unmasked.
    logits = bfc_ref[...]                                             # (1, 128)
    for c in range(C2):
        logits = logits + jnp.dot(p2_ref[c:c + 1, :], wfc_ref[c],
                                  preferred_element_type=f32)
    out_ref[0] = logits


# ---------------------------------------------------------------------------
# Host-side (one-time) packing helpers
# ---------------------------------------------------------------------------
def _pool_select_matrix(h_in, w_in, wp_in, wp_out, pad):
    """0/1 matrix gathering the stride-2 window anchors of a padded-flat conv
    output into the (optionally padded) flat frame of the next stage."""
    h_out, w_out = h_in // 2, w_in // 2
    rows = (h_in - 2) * wp_in + (w_in - 2) + 1
    cols = (h_out + 2 * pad) * wp_out
    sel = np.zeros((rows, cols), np.float32)
    for hh in range(h_out):
        for ww in range(w_out):
            sel[2 * hh * wp_in + 2 * ww, (hh + pad) * wp_out + (ww + pad)] = 1.0
    return sel


def pack_params(params):
    """One-time repack of PyTorch-layout parameters into kernel layouts."""
    w1 = jnp.asarray(params["w1"], jnp.float32)    # (8, 1, 3, 3)
    w2 = jnp.asarray(params["w2"], jnp.float32)    # (16, 8, 3, 3)
    wfc = jnp.asarray(params["wfc"], jnp.float32)  # (10, 784) cols in (c, h, w) order

    wfc_k = wfc.reshape(NCLS, C2, HW3).transpose(1, 2, 0)          # (16, 49, 10)
    wfc_k = jnp.pad(wfc_k, ((0, 0), (0, 0), (0, LANE_OUT - NCLS)))  # pad classes -> 128
    bfc_k = jnp.pad(jnp.asarray(params["bfc"], jnp.float32).reshape(1, NCLS),
                    ((0, 0), (0, LANE_OUT - NCLS)))

    return {
        "w1": w1.transpose(2, 3, 0, 1).reshape(9, C1, 1),       # [tap, c_out, c_in=1]
        "b1": jnp.asarray(params["b1"], jnp.float32).reshape(C1, 1),
        "w2": w2.transpose(2, 3, 0, 1).reshape(9, C2, C1),      # [tap, c_out, c_in]
        "b2": jnp.asarray(params["b2"], jnp.float32).reshape(C2, 1),
        "wfc": wfc_k,                                           # [c, h*7+w, class(128)]
        "bfc": bfc_k,                                           # (1, 128)
        "sel1": jnp.asarray(_pool_select_matrix(H1, W1, WP1, WP2, 1)),     # (807, 256)
        "sel2": jnp.asarray(_pool_select_matrix(H2, W2, WP2, W2 // 2, 0)), # (205, 49)
    }


# ---------------------------------------------------------------------------
# Forward pass
# ---------------------------------------------------------------------------
@jax.jit
def cnn_forward(x, packed):
    """x: (N, 1, 28, 28) float32 -> logits (N, 10). Matches CNN.forward."""
    n = x.shape[0]
    # Only per-call host glue: zero-pad H/W by 1 and flatten to the padded-flat
    # (row stride 30) layout whose 3x3 taps are single lane offsets.
    xp = jnp.pad(x[:, 0].astype(jnp.float32), ((0, 0), (1, 1), (1, 1)))   # (N, 30, 30)
    xflat = xp.reshape(n, 1, (H1 + 2) * WP1)                              # (N, 1, 900)

    out = pl.pallas_call(
        _cnn_fused_kernel,
        out_shape=jax.ShapeDtypeStruct((n, 1, LANE_OUT), jnp.float32),
        grid=(n,),
        in_specs=[
            pl.BlockSpec((1, 1, (H1 + 2) * WP1), lambda i: (i, 0, 0)),  # image
            pl.BlockSpec((9, C1, 1), lambda i: (0, 0, 0)),              # w1
            pl.BlockSpec((C1, 1), lambda i: (0, 0)),                    # b1
            pl.BlockSpec((9, C2, C1), lambda i: (0, 0, 0)),             # w2
            pl.BlockSpec((C2, 1), lambda i: (0, 0)),                    # b2
            pl.BlockSpec((P1, S2), lambda i: (0, 0)),                   # pool1 gather
            pl.BlockSpec((P2, HW3), lambda i: (0, 0)),                  # pool2 gather
            pl.BlockSpec((C2, HW3, LANE_OUT), lambda i: (0, 0, 0)),     # fc weight
            pl.BlockSpec((1, LANE_OUT), lambda i: (0, 0)),              # fc bias
        ],
        out_specs=pl.BlockSpec((1, 1, LANE_OUT), lambda i: (i, 0, 0)),
        scratch_shapes=[
            pltpu.VMEM((C1, L1), jnp.float32),    # conv1 output (relu'd), flat
            pltpu.VMEM((C1, S2), jnp.float32),    # conv2 padded-flat input
            pltpu.VMEM((C2, L2), jnp.float32),    # conv2 output (relu'd), flat
            pltpu.VMEM((C2, HW3), jnp.float32),   # pooled (16, 49) fc input
        ],
        compiler_params=pltpu.CompilerParams(
            dimension_semantics=("parallel",)),   # v7x megacore splits the batch
    )(xflat, packed["w1"], packed["b1"], packed["w2"], packed["b2"],
      packed["sel1"], packed["sel2"], packed["wfc"], packed["bfc"])
    return out.reshape(n, LANE_OUT)[:, :NCLS]


# ---------------------------------------------------------------------------
# Parameters, pure-JAX reference, and self-test
# ---------------------------------------------------------------------------
def init_params(key):
    """Deterministic synthetic parameters with the shapes CNN.__init__ implies."""
    k1, k2, k3, k4, k5, k6 = jax.random.split(key, 6)
    return {
        "w1": jax.random.normal(k1, (C1, 1, 3, 3), jnp.float32) * 0.1,
        "b1": jax.random.normal(k2, (C1,), jnp.float32) * 0.01,
        "w2": jax.random.normal(k3, (C2, C1, 3, 3), jnp.float32) * 0.1,
        "b2": jax.random.normal(k4, (C2,), jnp.float32) * 0.01,
        "wfc": jax.random.normal(k5, (NCLS, C2 * HW3), jnp.float32) * 0.05,
        "bfc": jax.random.normal(k6, (NCLS,), jnp.float32) * 0.01,
    }


def cnn_reference(x, params):
    """Pure-JAX replica of CNN.forward (correctness check only)."""
    dn = ("NCHW", "OIHW", "NCHW")
    y = jax.lax.conv_general_dilated(x, params["w1"], (1, 1), ((1, 1), (1, 1)),
                                     dimension_numbers=dn,
                                     precision=jax.lax.Precision.HIGHEST)
    y = jax.nn.relu(y + params["b1"].reshape(1, -1, 1, 1))
    y = jax.lax.reduce_window(y, -jnp.inf, jax.lax.max,
                              (1, 1, 2, 2), (1, 1, 2, 2), "VALID")
    y = jax.lax.conv_general_dilated(y, params["w2"], (1, 1), ((1, 1), (1, 1)),
                                     dimension_numbers=dn,
                                     precision=jax.lax.Precision.HIGHEST)
    y = jax.nn.relu(y + params["b2"].reshape(1, -1, 1, 1))
    y = jax.lax.reduce_window(y, -jnp.inf, jax.lax.max,
                              (1, 1, 2, 2), (1, 1, 2, 2), "VALID")
    y = y.reshape(y.shape[0], -1)
    return y @ params["wfc"].T + params["bfc"]


if __name__ == "__main__":
    key = jax.random.PRNGKey(0)
    kx, kp = jax.random.split(key)
    params = init_params(kp)
    # fc1 = Linear(16*7*7, 10) forces 28x28 spatial input; batch=2, in_channels=1.
    x = jax.random.normal(kx, (2, 1, 28, 28), jnp.float32)

    packed = pack_params(params)
    out = jax.block_until_ready(cnn_forward(x, packed))

    assert out.shape == (2, NCLS), out.shape
    assert bool(jnp.all(jnp.isfinite(out)))
    ref = cnn_reference(x, params)
    max_err = float(jnp.max(jnp.abs(out - ref)))
    assert bool(jnp.allclose(out, ref, atol=5e-3, rtol=5e-3)), max_err
    print("KERNEL_OK")
</pallas_src>

<mosaic_0001>
module attributes {stable_mosaic.version = 11 : i64} {
  func.func @_cnn_fused_kernel(%arg0: i32, %arg1: memref<1x1x900xf32, #tpu.memory_space<vmem>>, %arg2: memref<9x8x1xf32, #tpu.memory_space<vmem>>, %arg3: memref<8x1xf32, #tpu.memory_space<vmem>>, %arg4: memref<9x16x8xf32, #tpu.memory_space<vmem>>, %arg5: memref<16x1xf32, #tpu.memory_space<vmem>>, %arg6: memref<807x256xf32, #tpu.memory_space<vmem>>, %arg7: memref<205x49xf32, #tpu.memory_space<vmem>>, %arg8: memref<16x49x128xf32, #tpu.memory_space<vmem>>, %arg9: memref<1x128xf32, #tpu.memory_space<vmem>>, %arg10: memref<1x1x128xf32, #tpu.memory_space<vmem>>, %arg11: memref<8x838xf32, #tpu.memory_space<vmem>>, %arg12: memref<8x256xf32, #tpu.memory_space<vmem>>, %arg13: memref<16x222xf32, #tpu.memory_space<vmem>>, %arg14: memref<16x49xf32, #tpu.memory_space<vmem>>) attributes {dimension_semantics = [#tpu.dimension_semantics<parallel>], iteration_bounds = array<i64: 2>, scalar_prefetch = 0 : i64, scratch_operands = 4 : i64, tpu.core_type = #tpu.core_type<tc>, window_params = [{transform_indices = @transform_0, window_bounds = array<i64: 1, 1, 900>}, {pipeline_mode = #tpu.pipeline_mode<synchronous>, transform_indices = @transform_1, window_bounds = array<i64: 9, 8, 1>}, {pipeline_mode = #tpu.pipeline_mode<synchronous>, transform_indices = @transform_2, window_bounds = array<i64: 8, 1>}, {pipeline_mode = #tpu.pipeline_mode<synchronous>, transform_indices = @transform_3, window_bounds = array<i64: 9, 16, 8>}, {pipeline_mode = #tpu.pipeline_mode<synchronous>, transform_indices = @transform_4, window_bounds = array<i64: 16, 1>}, {pipeline_mode = #tpu.pipeline_mode<synchronous>, transform_indices = @transform_5, window_bounds = array<i64: 807, 256>}, {pipeline_mode = #tpu.pipeline_mode<synchronous>, transform_indices = @transform_6, window_bounds = array<i64: 205, 49>}, {pipeline_mode = #tpu.pipeline_mode<synchronous>, transform_indices = @transform_7, window_bounds = array<i64: 16, 49, 128>}, {pipeline_mode = #tpu.pipeline_mode<synchronous>, transform_indices = @transform_8, window_bounds = array<i64: 1, 128>}, {transform_indices = @transform_9, window_bounds = array<i64: 1, 1, 128>}]} {
    %c0 = arith.constant 0 : index
    %c0_0 = arith.constant 0 : index
    %c0_1 = arith.constant 0 : index
    %0 = vector.load %arg2[%c0, %c0_0, %c0_1] : memref<9x8x1xf32, #tpu.memory_space<vmem>>, vector<1x8x1xf32>
    %1 = vector.shape_cast %0 : vector<1x8x1xf32> to vector<8x1xf32>
    %c0_2 = arith.constant 0 : index
    %c0_3 = arith.constant 0 : index
    %c0_4 = arith.constant 0 : index
    %2 = vector.load %arg1[%c0_2, %c0_3, %c0_4] : memref<1x1x900xf32, #tpu.memory_space<vmem>>, vector<1x1x838xf32>
    %3 = vector.shape_cast %2 : vector<1x1x838xf32> to vector<1x838xf32>
    %4 = vector.broadcast %1 : vector<8x1xf32> to vector<8x838xf32>
    %5 = vector.broadcast %3 : vector<1x838xf32> to vector<8x838xf32>
    %6 = arith.mulf %4, %5 : vector<8x838xf32>
    %c1 = arith.constant 1 : index
    %c0_5 = arith.constant 0 : index
    %c0_6 = arith.constant 0 : index
    %7 = vector.load %arg2[%c1, %c0_5, %c0_6] : memref<9x8x1xf32, #tpu.memory_space<vmem>>, vector<1x8x1xf32>
    %8 = vector.shape_cast %7 : vector<1x8x1xf32> to vector<8x1xf32>
    %c0_7 = arith.constant 0 : index
    %c0_8 = arith.constant 0 : index
    %c1_9 = arith.constant 1 : index
    %9 = vector.load %arg1[%c0_7, %c0_8, %c1_9] : memref<1x1x900xf32, #tpu.memory_space<vmem>>, vector<1x1x838xf32>
    %10 = vector.shape_cast %9 : vector<1x1x838xf32> to vector<1x838xf32>
    %11 = vector.broadcast %8 : vector<8x1xf32> to vector<8x838xf32>
    %12 = vector.broadcast %10 : vector<1x838xf32> to vector<8x838xf32>
    %13 = arith.mulf %11, %12 : vector<8x838xf32>
    %14 = arith.addf %6, %13 : vector<8x838xf32>
    %c2 = arith.constant 2 : index
    %c0_10 = arith.constant 0 : index
    %c0_11 = arith.constant 0 : index
    %15 = vector.load %arg2[%c2, %c0_10, %c0_11] : memref<9x8x1xf32, #tpu.memory_space<vmem>>, vector<1x8x1xf32>
    %16 = vector.shape_cast %15 : vector<1x8x1xf32> to vector<8x1xf32>
    %c0_12 = arith.constant 0 : index
    %c0_13 = arith.constant 0 : index
    %c2_14 = arith.constant 2 : index
    %17 = vector.load %arg1[%c0_12, %c0_13, %c2_14] : memref<1x1x900xf32, #tpu.memory_space<vmem>>, vector<1x1x838xf32>
    %18 = vector.shape_cast %17 : vector<1x1x838xf32> to vector<1x838xf32>
    %19 = vector.broadcast %16 : vector<8x1xf32> to vector<8x838xf32>
    %20 = vector.broadcast %18 : vector<1x838xf32> to vector<8x838xf32>
    %21 = arith.mulf %19, %20 : vector<8x838xf32>
    %22 = arith.addf %14, %21 : vector<8x838xf32>
    %c3 = arith.constant 3 : index
    %c0_15 = arith.constant 0 : index
    %c0_16 = arith.constant 0 : index
    %23 = vector.load %arg2[%c3, %c0_15, %c0_16] : memref<9x8x1xf32, #tpu.memory_space<vmem>>, vector<1x8x1xf32>
    %24 = vector.shape_cast %23 : vector<1x8x1xf32> to vector<8x1xf32>
    %c0_17 = arith.constant 0 : index
    %c0_18 = arith.constant 0 : index
    %c30 = arith.constant 30 : index
    %25 = vector.load %arg1[%c0_17, %c0_18, %c30] : memref<1x1x900xf32, #tpu.memory_space<vmem>>, vector<1x1x838xf32>
    %26 = vector.shape_cast %25 : vector<1x1x838xf32> to vector<1x838xf32>
    %27 = vector.broadcast %24 : vector<8x1xf32> to vector<8x838xf32>
    %28 = vector.broadcast %26 : vector<1x838xf32> to vector<8x838xf32>
    %29 = arith.mulf %27, %28 : vector<8x838xf32>
    %30 = arith.addf %22, %29 : vector<8x838xf32>
    %c4 = arith.constant 4 : index
    %c0_19 = arith.constant 0 : index
    %c0_20 = arith.constant 0 : index
    %31 = vector.load %arg2[%c4, %c0_19, %c0_20] : memref<9x8x1xf32, #tpu.memory_space<vmem>>, vector<1x8x1xf32>
    %32 = vector.shape_cast %31 : vector<1x8x1xf32> to vector<8x1xf32>
    %c0_21 = arith.constant 0 : index
    %c0_22 = arith.constant 0 : index
    %c31 = arith.constant 31 : index
    %33 = vector.load %arg1[%c0_21, %c0_22, %c31] : memref<1x1x900xf32, #tpu.memory_space<vmem>>, vector<1x1x838xf32>
    %34 = vector.shape_cast %33 : vector<1x1x838xf32> to vector<1x838xf32>
    %35 = vector.broadcast %32 : vector<8x1xf32> to vector<8x838xf32>
    %36 = vector.broadcast %34 : vector<1x838xf32> to vector<8x838xf32>
    %37 = arith.mulf %35, %36 : vector<8x838xf32>
    %38 = arith.addf %30, %37 : vector<8x838xf32>
    %c5 = arith.constant 5 : index
    %c0_23 = arith.constant 0 : index
    %c0_24 = arith.constant 0 : index
    %39 = vector.load %arg2[%c5, %c0_23, %c0_24] : memref<9x8x1xf32, #tpu.memory_space<vmem>>, vector<1x8x1xf32>
    %40 = vector.shape_cast %39 : vector<1x8x1xf32> to vector<8x1xf32>
    %c0_25 = arith.constant 0 : index
    %c0_26 = arith.constant 0 : index
    %c32 = arith.constant 32 : index
    %41 = vector.load %arg1[%c0_25, %c0_26, %c32] : memref<1x1x900xf32, #tpu.memory_space<vmem>>, vector<1x1x838xf32>
    %42 = vector.shape_cast %41 : vector<1x1x838xf32> to vector<1x838xf32>
    %43 = vector.broadcast %40 : vector<8x1xf32> to vector<8x838xf32>
    %44 = vector.broadcast %42 : vector<1x838xf32> to vector<8x838xf32>
    %45 = arith.mulf %43, %44 : vector<8x838xf32>
    %46 = arith.addf %38, %45 : vector<8x838xf32>
    %c6 = arith.constant 6 : index
    %c0_27 = arith.constant 0 : index
    %c0_28 = arith.constant 0 : index
    %47 = vector.load %arg2[%c6, %c0_27, %c0_28] : memref<9x8x1xf32, #tpu.memory_space<vmem>>, vector<1x8x1xf32>
    %48 = vector.shape_cast %47 : vector<1x8x1xf32> to vector<8x1xf32>
    %c0_29 = arith.constant 0 : index
    %c0_30 = arith.constant 0 : index
    %c60 = arith.constant 60 : index
    %49 = vector.load %arg1[%c0_29, %c0_30, %c60] : memref<1x1x900xf32, #tpu.memory_space<vmem>>, vector<1x1x838xf32>
    %50 = vector.shape_cast %49 : vector<1x1x838xf32> to vector<1x838xf32>
    %51 = vector.broadcast %48 : vector<8x1xf32> to vector<8x838xf32>
    %52 = vector.broadcast %50 : vector<1x838xf32> to vector<8x838xf32>
    %53 = arith.mulf %51, %52 : vector<8x838xf32>
    %54 = arith.addf %46, %53 : vector<8x838xf32>
    %c7 = arith.constant 7 : index
    %c0_31 = arith.constant 0 : index
    %c0_32 = arith.constant 0 : index
    %55 = vector.load %arg2[%c7, %c0_31, %c0_32] : memref<9x8x1xf32, #tpu.memory_space<vmem>>, vector<1x8x1xf32>
    %56 = vector.shape_cast %55 : vector<1x8x1xf32> to vector<8x1xf32>
    %c0_33 = arith.constant 0 : index
    %c0_34 = arith.constant 0 : index
    %c61 = arith.constant 61 : index
    %57 = vector.load %arg1[%c0_33, %c0_34, %c61] : memref<1x1x900xf32, #tpu.memory_space<vmem>>, vector<1x1x838xf32>
    %58 = vector.shape_cast %57 : vector<1x1x838xf32> to vector<1x838xf32>
    %59 = vector.broadcast %56 : vector<8x1xf32> to vector<8x838xf32>
    %60 = vector.broadcast %58 : vector<1x838xf32> to vector<8x838xf32>
    %61 = arith.mulf %59, %60 : vector<8x838xf32>
    %62 = arith.addf %54, %61 : vector<8x838xf32>
    %c8 = arith.constant 8 : index
    %c0_35 = arith.constant 0 : index
    %c0_36 = arith.constant 0 : index
    %63 = vector.load %arg2[%c8, %c0_35, %c0_36] : memref<9x8x1xf32, #tpu.memory_space<vmem>>, vector<1x8x1xf32>
    %64 = vector.shape_cast %63 : vector<1x8x1xf32> to vector<8x1xf32>
    %c0_37 = arith.constant 0 : index
    %c0_38 = arith.constant 0 : index
    %c62 = arith.constant 62 : index
    %65 = vector.load %arg1[%c0_37, %c0_38, %c62] : memref<1x1x900xf32, #tpu.memory_space<vmem>>, vector<1x1x838xf32>
    %66 = vector.shape_cast %65 : vector<1x1x838xf32> to vector<1x838xf32>
    %67 = vector.broadcast %64 : vector<8x1xf32> to vector<8x838xf32>
    %68 = vector.broadcast %66 : vector<1x838xf32> to vector<8x838xf32>
    %69 = arith.mulf %67, %68 : vector<8x838xf32>
    %70 = arith.addf %62, %69 : vector<8x838xf32>
    %c0_39 = arith.constant 0 : index
    %c0_40 = arith.constant 0 : index
    %71 = vector.load %arg3[%c0_39, %c0_40] : memref<8x1xf32, #tpu.memory_space<vmem>>, vector<8x1xf32>
    %72 = vector.broadcast %71 : vector<8x1xf32> to vector<8x838xf32>
    %73 = arith.addf %70, %72 : vector<8x838xf32>
    %cst = arith.constant 0.000000e+00 : f32
    %74 = vector.broadcast %cst : f32 to vector<8x838xf32>
    %75 = arith.maximumf %73, %74 : vector<8x838xf32>
    %c0_41 = arith.constant 0 : index
    %c0_42 = arith.constant 0 : index
    %76 = vector.load %arg11[%c0_41, %c0_42] : memref<8x838xf32, #tpu.memory_space<vmem>>, vector<8x838xf32>
    tpu.vector_store %arg11[%c0_41, %c0_42], %75 {strides = array<i32>} : memref<8x838xf32, #tpu.memory_space<vmem>>, vector<8x838xf32>,
    %c0_43 = arith.constant 0 : index
    %c0_44 = arith.constant 0 : index
    %77 = vector.load %arg11[%c0_43, %c0_44] : memref<8x838xf32, #tpu.memory_space<vmem>>, vector<8x807xf32>
    %c0_45 = arith.constant 0 : index
    %c1_46 = arith.constant 1 : index
    %78 = vector.load %arg11[%c0_45, %c1_46] : memref<8x838xf32, #tpu.memory_space<vmem>>, vector<8x807xf32>
    %79 = arith.maximumf %77, %78 : vector<8x807xf32>
    %c0_47 = arith.constant 0 : index
    %c30_48 = arith.constant 30 : index
    %80 = vector.load %arg11[%c0_47, %c30_48] : memref<8x838xf32, #tpu.memory_space<vmem>>, vector<8x807xf32>
    %c0_49 = arith.constant 0 : index
    %c31_50 = arith.constant 31 : index
    %81 = vector.load %arg11[%c0_49, %c31_50] : memref<8x838xf32, #tpu.memory_space<vmem>>, vector<8x807xf32>
    %82 = arith.maximumf %80, %81 : vector<8x807xf32>
    %83 = arith.maximumf %79, %82 : vector<8x807xf32>
    %c0_51 = arith.constant 0 : index
    %c0_52 = arith.constant 0 : index
    %84 = vector.load %arg6[%c0_51, %c0_52] : memref<807x256xf32, #tpu.memory_space<vmem>>, vector<807x256xf32>
    %cst_53 = arith.constant dense<0.000000e+00> : vector<8x256xf32>
    %85 = tpu.matmul %83, %84, %cst_53 {dimension_numbers = #tpu.dot_dimension_numbers<[1], [0], [0], [1], [0, 0, 1, 1], [], []>} : vector<8x807xf32>, vector<807x256xf32>, vector<8x256xf32> -> vector<8x256xf32>
    %c0_54 = arith.constant 0 : index
    %c0_55 = arith.constant 0 : index
    %86 = vector.load %arg12[%c0_54, %c0_55] : memref<8x256xf32, #tpu.memory_space<vmem>>, vector<8x256xf32>
    tpu.vector_store %arg12[%c0_54, %c0_55], %85 {strides = array<i32>} : memref<8x256xf32, #tpu.memory_space<vmem>>, vector<8x256xf32>,
    %c0_56 = arith.constant 0 : index
    %c0_57 = arith.constant 0 : index
    %c0_58 = arith.constant 0 : index
    %87 = vector.load %arg4[%c0_56, %c0_57, %c0_58] : memref<9x16x8xf32, #tpu.memory_space<vmem>>, vector<1x16x8xf32>
    %88 = vector.shape_cast %87 : vector<1x16x8xf32> to vector<16x8xf32>
    %c0_59 = arith.constant 0 : index
    %c0_60 = arith.constant 0 : index
    %89 = vector.load %arg12[%c0_59, %c0_60] : memref<8x256xf32, #tpu.memory_space<vmem>>, vector<8x222xf32>
    %cst_61 = arith.constant dense<0.000000e+00> : vector<16x222xf32>
    %90 = tpu.matmul %88, %89, %cst_61 {dimension_numbers = #tpu.dot_dimension_numbers<[1], [0], [0], [1], [0, 0, 1, 1], [], []>} : vector<16x8xf32>, vector<8x222xf32>, vector<16x222xf32> -> vector<16x222xf32>
    %c1_62 = arith.constant 1 : index
    %c0_63 = arith.constant 0 : index
    %c0_64 = arith.constant 0 : index
    %91 = vector.load %arg4[%c1_62, %c0_63, %c0_64] : memref<9x16x8xf32, #tpu.memory_space<vmem>>, vector<1x16x8xf32>
    %92 = vector.shape_cast %91 : vector<1x16x8xf32> to vector<16x8xf32>
    %c0_65 = arith.constant 0 : index
    %c1_66 = arith.constant 1 : index
    %93 = vector.load %arg12[%c0_65, %c1_66] : memref<8x256xf32, #tpu.memory_space<vmem>>, vector<8x222xf32>
    %cst_67 = arith.constant dense<0.000000e+00> : vector<16x222xf32>
    %94 = tpu.matmul %92, %93, %cst_67 {dimension_numbers = #tpu.dot_dimension_numbers<[1], [0], [0], [1], [0, 0, 1, 1], [], []>} : vector<16x8xf32>, vector<8x222xf32>, vector<16x222xf32> -> vector<16x222xf32>
    %95 = arith.addf %90, %94 : vector<16x222xf32>
    %c2_68 = arith.constant 2 : index
    %c0_69 = arith.constant 0 : index
    %c0_70 = arith.constant 0 : index
    %96 = vector.load %arg4[%c2_68, %c0_69, %c0_70] : memref<9x16x8xf32, #tpu.memory_space<vmem>>, vector<1x16x8xf32>
    %97 = vector.shape_cast %96 : vector<1x16x8xf32> to vector<16x8xf32>
    %c0_71 = arith.constant 0 : index
    %c2_72 = arith.constant 2 : index
    %98 = vector.load %arg12[%c0_71, %c2_72] : memref<8x256xf32, #tpu.memory_space<vmem>>, vector<8x222xf32>
    %cst_73 = arith.constant dense<0.000000e+00> : vector<16x222xf32>
    %99 = tpu.matmul %97, %98, %cst_73 {dimension_numbers = #tpu.dot_dimension_numbers<[1], [0], [0], [1], [0, 0, 1, 1], [], []>} : vector<16x8xf32>, vector<8x222xf32>, vector<16x222xf32> -> vector<16x222xf32>
    %100 = arith.addf %95, %99 : vector<16x222xf32>
    %c3_74 = arith.constant 3 : index
    %c0_75 = arith.constant 0 : index
    %c0_76 = arith.constant 0 : index
    %101 = vector.load %arg4[%c3_74, %c0_75, %c0_76] : memref<9x16x8xf32, #tpu.memory_space<vmem>>, vector<1x16x8xf32>
    %102 = vector.shape_cast %101 : vector<1x16x8xf32> to vector<16x8xf32>
    %c0_77 = arith.constant 0 : index
    %c16 = arith.constant 16 : index
    %103 = vector.load %arg12[%c0_77, %c16] : memref<8x256xf32, #tpu.memory_space<vmem>>, vector<8x222xf32>
    %cst_78 = arith.constant dense<0.000000e+00> : vector<16x222xf32>
    %104 = tpu.matmul %102, %103, %cst_78 {dimension_numbers = #tpu.dot_dimension_numbers<[1], [0], [0], [1], [0, 0, 1, 1], [], []>} : vector<16x8xf32>, vector<8x222xf32>, vector<16x222xf32> -> vector<16x222xf32>
    %105 = arith.addf %100, %104 : vector<16x222xf32>
    %c4_79 = arith.constant 4 : index
    %c0_80 = arith.constant 0 : index
    %c0_81 = arith.constant 0 : index
    %106 = vector.load %arg4[%c4_79, %c0_80, %c0_81] : memref<9x16x8xf32, #tpu.memory_space<vmem>>, vector<1x16x8xf32>
    %107 = vector.shape_cast %106 : vector<1x16x8xf32> to vector<16x8xf32>
    %c0_82 = arith.constant 0 : index
    %c17 = arith.constant 17 : index
    %108 = vector.load %arg12[%c0_82, %c17] : memref<8x256xf32, #tpu.memory_space<vmem>>, vector<8x222xf32>
    %cst_83 = arith.constant dense<0.000000e+00> : vector<16x222xf32>
    %109 = tpu.matmul %107, %108, %cst_83 {dimension_numbers = #tpu.dot_dimension_numbers<[1], [0], [0], [1], [0, 0, 1, 1], [], []>} : vector<16x8xf32>, vector<8x222xf32>, vector<16x222xf32> -> vector<16x222xf32>
    %110 = arith.addf %105, %109 : vector<16x222xf32>
    %c5_84 = arith.constant 5 : index
    %c0_85 = arith.constant 0 : index
    %c0_86 = arith.constant 0 : index
    %111 = vector.load %arg4[%c5_84, %c0_85, %c0_86] : memref<9x16x8xf32, #tpu.memory_space<vmem>>, vector<1x16x8xf32>
    %112 = vector.shape_cast %111 : vector<1x16x8xf32> to vector<16x8xf32>
    %c0_87 = arith.constant 0 : index
    %c18 = arith.constant 18 : index
    %113 = vector.load %arg12[%c0_87, %c18] : memref<8x256xf32, #tpu.memory_space<vmem>>, vector<8x222xf32>
    %cst_88 = arith.constant dense<0.000000e+00> : vector<16x222xf32>
    %114 = tpu.matmul %112, %113, %cst_88 {dimension_numbers = #tpu.dot_dimension_numbers<[1], [0], [0], [1], [0, 0, 1, 1], [], []>} : vector<16x8xf32>, vector<8x222xf32>, vector<16x222xf32> -> vector<16x222xf32>
    %115 = arith.addf %110, %114 : vector<16x222xf32>
    %c6_89 = arith.constant 6 : index
    %c0_90 = arith.constant 0 : index
    %c0_91 = arith.constant 0 : index
    %116 = vector.load %arg4[%c6_89, %c0_90, %c0_91] : memref<9x16x8xf32, #tpu.memory_space<vmem>>, vector<1x16x8xf32>
    %117 = vector.shape_cast %116 : vector<1x16x8xf32> to vector<16x8xf32>
    %c0_92 = arith.constant 0 : index
    %c32_93 = arith.constant 32 : index
    %118 = vector.load %arg12[%c0_92, %c32_93] : memref<8x256xf32, #tpu.memory_space<vmem>>, vector<8x222xf32>
    %cst_94 = arith.constant dense<0.000000e+00> : vector<16x222xf32>
    %119 = tpu.matmul %117, %118, %cst_94 {dimension_numbers = #tpu.dot_dimension_numbers<[1], [0], [0], [1], [0, 0, 1, 1], [], []>} : vector<16x8xf32>, vector<8x222xf32>, vector<16x222xf32> -> vector<16x222xf32>
    %120 = arith.addf %115, %119 : vector<16x222xf32>
    %c7_95 = arith.constant 7 : index
    %c0_96 = arith.constant 0 : index
    %c0_97 = arith.constant 0 : index
    %121 = vector.load %arg4[%c7_95, %c0_96, %c0_97] : memref<9x16x8xf32, #tpu.memory_space<vmem>>, vector<1x16x8xf32>
    %122 = vector.shape_cast %121 : vector<1x16x8xf32> to vector<16x8xf32>
    %c0_98 = arith.constant 0 : index
    %c33 = arith.constant 33 : index
    %123 = vector.load %arg12[%c0_98, %c33] : memref<8x256xf32, #tpu.memory_space<vmem>>, vector<8x222xf32>
    %cst_99 = arith.constant dense<0.000000e+00> : vector<16x222xf32>
    %124 = tpu.matmul %122, %123, %cst_99 {dimension_numbers = #tpu.dot_dimension_numbers<[1], [0], [0], [1], [0, 0, 1, 1], [], []>} : vector<16x8xf32>, vector<8x222xf32>, vector<16x222xf32> -> vector<16x222xf32>
    %125 = arith.addf %120, %124 : vector<16x222xf32>
    %c8_100 = arith.constant 8 : index
    %c0_101 = arith.constant 0 : index
    %c0_102 = arith.constant 0 : index
    %126 = vector.load %arg4[%c8_100, %c0_101, %c0_102] : memref<9x16x8xf32, #tpu.memory_space<vmem>>, vector<1x16x8xf32>
    %127 = vector.shape_cast %126 : vector<1x16x8xf32> to vector<16x8xf32>
    %c0_103 = arith.constant 0 : index
    %c34 = arith.constant 34 : index
    %128 = vector.load %arg12[%c0_103, %c34] : memref<8x256xf32, #tpu.memory_space<vmem>>, vector<8x222xf32>
    %cst_104 = arith.constant dense<0.000000e+00> : vector<16x222xf32>
    %129 = tpu.matmul %127, %128, %cst_104 {dimension_numbers = #tpu.dot_dimension_numbers<[1], [0], [0], [1], [0, 0, 1, 1], [], []>} : vector<16x8xf32>, vector<8x222xf32>, vector<16x222xf32> -> vector<16x222xf32>
    %130 = arith.addf %125, %129 : vector<16x222xf32>
    %c0_105 = arith.constant 0 : index
    %c0_106 = arith.constant 0 : index
    %131 = vector.load %arg5[%c0_105, %c0_106] : memref<16x1xf32, #tpu.memory_space<vmem>>, vector<16x1xf32>
    %132 = vector.broadcast %131 : vector<16x1xf32> to vector<16x222xf32>
    %133 = arith.addf %130, %132 : vector<16x222xf32>
    %cst_107 = arith.constant 0.000000e+00 : f32
    %134 = vector.broadcast %cst_107 : f32 to vector<16x222xf32>
    %135 = arith.maximumf %133, %134 : vector<16x222xf32>
    %c0_108 = arith.constant 0 : index
    %c0_109 = arith.constant 0 : index
    %136 = vector.load %arg13[%c0_108, %c0_109] : memref<16x222xf32, #tpu.memory_space<vmem>>, vector<16x222xf32>
    tpu.vector_store %arg13[%c0_108, %c0_109], %135 {strides = array<i32>} : memref<16x222xf32, #tpu.memory_space<vmem>>, vector<16x222xf32>,
    %c0_110 = arith.constant 0 : index
    %c0_111 = arith.constant 0 : index
    %137 = vector.load %arg13[%c0_110, %c0_111] : memref<16x222xf32, #tpu.memory_space<vmem>>, vector<16x205xf32>
    %c0_112 = arith.constant 0 : index
    %c1_113 = arith.constant 1 : index
    %138 = vector.load %arg13[%c0_112, %c1_113] : memref<16x222xf32, #tpu.memory_space<vmem>>, vector<16x205xf32>
    %139 = arith.maximumf %137, %138 : vector<16x205xf32>
    %c0_114 = arith.constant 0 : index
    %c16_115 = arith.constant 16 : index
    %140 = vector.load %arg13[%c0_114, %c16_115] : memref<16x222xf32, #tpu.memory_space<vmem>>, vector<16x205xf32>
    %c0_116 = arith.constant 0 : index
    %c17_117 = arith.constant 17 : index
    %141 = vector.load %arg13[%c0_116, %c17_117] : memref<16x222xf32, #tpu.memory_space<vmem>>, vector<16x205xf32>
    %142 = arith.maximumf %140, %141 : vector<16x205xf32>
    %143 = arith.maximumf %139, %142 : vector<16x205xf32>
    %c0_118 = arith.constant 0 : index
    %c0_119 = arith.constant 0 : index
    %144 = vector.load %arg7[%c0_118, %c0_119] : memref<205x49xf32, #tpu.memory_space<vmem>>, vector<205x49xf32>
    %cst_120 = arith.constant dense<0.000000e+00> : vector<16x49xf32>
    %145 = tpu.matmul %143, %144, %cst_120 {dimension_numbers = #tpu.dot_dimension_numbers<[1], [0], [0], [1], [0, 0, 1, 1], [], []>} : vector<16x205xf32>, vector<205x49xf32>, vector<16x49xf32> -> vector<16x49xf32>
    %c0_121 = arith.constant 0 : index
    %c0_122 = arith.constant 0 : index
    %146 = vector.load %arg14[%c0_121, %c0_122] : memref<16x49xf32, #tpu.memory_space<vmem>>, vector<16x49xf32>
    tpu.vector_store %arg14[%c0_121, %c0_122], %145 {strides = array<i32>} : memref<16x49xf32, #tpu.memory_space<vmem>>, vector<16x49xf32>,
    %c0_123 = arith.constant 0 : index
    %c0_124 = arith.constant 0 : index
    %147 = vector.load %arg9[%c0_123, %c0_124] : memref<1x128xf32, #tpu.memory_space<vmem>>, vector<1x128xf32>
    %c0_125 = arith.constant 0 : index
    %c0_126 = arith.constant 0 : index
    %148 = vector.load %arg14[%c0_125, %c0_126] : memref<16x49xf32, #tpu.memory_space<vmem>>, vector<1x49xf32>
    %c0_127 = arith.constant 0 : index
    %c0_128 = arith.constant 0 : index
    %c0_129 = arith.constant 0 : index
    %149 = vector.load %arg8[%c0_127, %c0_128, %c0_129] : memref<16x49x128xf32, #tpu.memory_space<vmem>>, vector<1x49x128xf32>
    %150 = vector.shape_cast %149 : vector<1x49x128xf32> to vector<49x128xf32>
    %cst_130 = arith.constant dense<0.000000e+00> : vector<1x128xf32>
    %151 = tpu.matmul %148, %150, %cst_130 {dimension_numbers = #tpu.dot_dimension_numbers<[1], [0], [0], [1], [0, 0, 1, 1], [], []>} : vector<1x49xf32>, vector<49x128xf32>, vector<1x128xf32> -> vector<1x128xf32>
    %152 = arith.addf %147, %151 : vector<1x128xf32>
    %c1_131 = arith.constant 1 : index
    %c0_132 = arith.constant 0 : index
    %153 = vector.load %arg14[%c1_131, %c0_132] : memref<16x49xf32, #tpu.memory_space<vmem>>, vector<1x49xf32>
    %c1_133 = arith.constant 1 : index
    %c0_134 = arith.constant 0 : index
    %c0_135 = arith.constant 0 : index
    %154 = vector.load %arg8[%c1_133, %c0_134, %c0_135] : memref<16x49x128xf32, #tpu.memory_space<vmem>>, vector<1x49x128xf32>
    %155 = vector.shape_cast %154 : vector<1x49x128xf32> to vector<49x128xf32>
    %cst_136 = arith.constant dense<0.000000e+00> : vector<1x128xf32>
    %156 = tpu.matmul %153, %155, %cst_136 {dimension_numbers = #tpu.dot_dimension_numbers<[1], [0], [0], [1], [0, 0, 1, 1], [], []>} : vector<1x49xf32>, vector<49x128xf32>, vector<1x128xf32> -> vector<1x128xf32>
    %157 = arith.addf %152, %156 : vector<1x128xf32>
    %c2_137 = arith.constant 2 : index
    %c0_138 = arith.constant 0 : index
    %158 = vector.load %arg14[%c2_137, %c0_138] : memref<16x49xf32, #tpu.memory_space<vmem>>, vector<1x49xf32>
    %c2_139 = arith.constant 2 : index
    %c0_140 = arith.constant 0 : index
    %c0_141 = arith.constant 0 : index
    %159 = vector.load %arg8[%c2_139, %c0_140, %c0_141] : memref<16x49x128xf32, #tpu.memory_space<vmem>>, vector<1x49x128xf32>
    %160 = vector.shape_cast %159 : vector<1x49x128xf32> to vector<49x128xf32>
    %cst_142 = arith.constant dense<0.000000e+00> : vector<1x128xf32>
    %161 = tpu.matmul %158, %160, %cst_142 {dimension_numbers = #tpu.dot_dimension_numbers<[1], [0], [0], [1], [0, 0, 1, 1], [], []>} : vector<1x49xf32>, vector<49x128xf32>, vector<1x128xf32> -> vector<1x128xf32>
    %162 = arith.addf %157, %161 : vector<1x128xf32>
    %c3_143 = arith.constant 3 : index
    %c0_144 = arith.constant 0 : index
    %163 = vector.load %arg14[%c3_143, %c0_144] : memref<16x49xf32, #tpu.memory_space<vmem>>, vector<1x49xf32>
    %c3_145 = arith.constant 3 : index
    %c0_146 = arith.constant 0 : index
    %c0_147 = arith.constant 0 : index
    %164 = vector.load %arg8[%c3_145, %c0_146, %c0_147] : memref<16x49x128xf32, #tpu.memory_space<vmem>>, vector<1x49x128xf32>
    %165 = vector.shape_cast %164 : vector<1x49x128xf32> to vector<49x128xf32>
    %cst_148 = arith.constant dense<0.000000e+00> : vector<1x128xf32>
    %166 = tpu.matmul %163, %165, %cst_148 {dimension_numbers = #tpu.dot_dimension_numbers<[1], [0], [0], [1], [0, 0, 1, 1], [], []>} : vector<1x49xf32>, vector<49x128xf32>, vector<1x128xf32> -> vector<1x128xf32>
    %167 = arith.addf %162, %166 : vector<1x128xf32>
    %c4_149 = arith.constant 4 : index
    %c0_150 = arith.constant 0 : index
    %168 = vector.load %arg14[%c4_149, %c0_150] : memref<16x49xf32, #tpu.memory_space<vmem>>, vector<1x49xf32>
    %c4_151 = arith.constant 4 : index
    %c0_152 = arith.constant 0 : index
    %c0_153 = arith.constant 0 : index
    %169 = vector.load %arg8[%c4_151, %c0_152, %c0_153] : memref<16x49x128xf32, #tpu.memory_space<vmem>>, vector<1x49x128xf32>
    %170 = vector.shape_cast %169 : vector<1x49x128xf32> to vector<49x128xf32>
    %cst_154 = arith.constant dense<0.000000e+00> : vector<1x128xf32>
    %171 = tpu.matmul %168, %170, %cst_154 {dimension_numbers = #tpu.dot_dimension_numbers<[1], [0], [0], [1], [0, 0, 1, 1], [], []>} : vector<1x49xf32>, vector<49x128xf32>, vector<1x128xf32> -> vector<1x128xf32>
    %172 = arith.addf %167, %171 : vector<1x128xf32>
    %c5_155 = arith.constant 5 : index
    %c0_156 = arith.constant 0 : index
    %173 = vector.load %arg14[%c5_155, %c0_156] : memref<16x49xf32, #tpu.memory_space<vmem>>, vector<1x49xf32>
    %c5_157 = arith.constant 5 : index
    %c0_158 = arith.constant 0 : index
    %c0_159 = arith.constant 0 : index
    %174 = vector.load %arg8[%c5_157, %c0_158, %c0_159] : memref<16x49x128xf32, #tpu.memory_space<vmem>>, vector<1x49x128xf32>
    %175 = vector.shape_cast %174 : vector<1x49x128xf32> to vector<49x128xf32>
    %cst_160 = arith.constant dense<0.000000e+00> : vector<1x128xf32>
    %176 = tpu.matmul %173, %175, %cst_160 {dimension_numbers = #tpu.dot_dimension_numbers<[1], [0], [0], [1], [0, 0, 1, 1], [], []>} : vector<1x49xf32>, vector<49x128xf32>, vector<1x128xf32> -> vector<1x128xf32>
    %177 = arith.addf %172, %176 : vector<1x128xf32>
    %c6_161 = arith.constant 6 : index
    %c0_162 = arith.constant 0 : index
    %178 = vector.load %arg14[%c6_161, %c0_162] : memref<16x49xf32, #tpu.memory_space<vmem>>, vector<1x49xf32>
    %c6_163 = arith.constant 6 : index
    %c0_164 = arith.constant 0 : index
    %c0_165 = arith.constant 0 : index
    %179 = vector.load %arg8[%c6_163, %c0_164, %c0_165] : memref<16x49x128xf32, #tpu.memory_space<vmem>>, vector<1x49x128xf32>
    %180 = vector.shape_cast %179 : vector<1x49x128xf32> to vector<49x128xf32>
    %cst_166 = arith.constant dense<0.000000e+00> : vector<1x128xf32>
    %181 = tpu.matmul %178, %180, %cst_166 {dimension_numbers = #tpu.dot_dimension_numbers<[1], [0], [0], [1], [0, 0, 1, 1], [], []>} : vector<1x49xf32>, vector<49x128xf32>, vector<1x128xf32> -> vector<1x128xf32>
    %182 = arith.addf %177, %181 : vector<1x128xf32>
    %c7_167 = arith.constant 7 : index
    %c0_168 = arith.constant 0 : index
    %183 = vector.load %arg14[%c7_167, %c0_168] : memref<16x49xf32, #tpu.memory_space<vmem>>, vector<1x49xf32>
    %c7_169 = arith.constant 7 : index
    %c0_170 = arith.constant 0 : index
    %c0_171 = arith.constant 0 : index
    %184 = vector.load %arg8[%c7_169, %c0_170, %c0_171] : memref<16x49x128xf32, #tpu.memory_space<vmem>>, vector<1x49x128xf32>
    %185 = vector.shape_cast %184 : vector<1x49x128xf32> to vector<49x128xf32>
    %cst_172 = arith.constant dense<0.000000e+00> : vector<1x128xf32>
    %186 = tpu.matmul %183, %185, %cst_172 {dimension_numbers = #tpu.dot_dimension_numbers<[1], [0], [0], [1], [0, 0, 1, 1], [], []>} : vector<1x49xf32>, vector<49x128xf32>, vector<1x128xf32> -> vector<1x128xf32>
    %187 = arith.addf %182, %186 : vector<1x128xf32>
    %c8_173 = arith.constant 8 : index
    %c0_174 = arith.constant 0 : index
    %188 = vector.load %arg14[%c8_173, %c0_174] : memref<16x49xf32, #tpu.memory_space<vmem>>, vector<1x49xf32>
    %c8_175 = arith.constant 8 : index
    %c0_176 = arith.constant 0 : index
    %c0_177 = arith.constant 0 : index
    %189 = vector.load %arg8[%c8_175, %c0_176, %c0_177] : memref<16x49x128xf32, #tpu.memory_space<vmem>>, vector<1x49x128xf32>
    %190 = vector.shape_cast %189 : vector<1x49x128xf32> to vector<49x128xf32>
    %cst_178 = arith.constant dense<0.000000e+00> : vector<1x128xf32>
    %191 = tpu.matmul %188, %190, %cst_178 {dimension_numbers = #tpu.dot_dimension_numbers<[1], [0], [0], [1], [0, 0, 1, 1], [], []>} : vector<1x49xf32>, vector<49x128xf32>, vector<1x128xf32> -> vector<1x128xf32>
    %192 = arith.addf %187, %191 : vector<1x128xf32>
    %c9 = arith.constant 9 : index
    %c0_179 = arith.constant 0 : index
    %193 = vector.load %arg14[%c9, %c0_179] : memref<16x49xf32, #tpu.memory_space<vmem>>, vector<1x49xf32>
    %c9_180 = arith.constant 9 : index
    %c0_181 = arith.constant 0 : index
    %c0_182 = arith.constant 0 : index
    %194 = vector.load %arg8[%c9_180, %c0_181, %c0_182] : memref<16x49x128xf32, #tpu.memory_space<vmem>>, vector<1x49x128xf32>
    %195 = vector.shape_cast %194 : vector<1x49x128xf32> to vector<49x128xf32>
    %cst_183 = arith.constant dense<0.000000e+00> : vector<1x128xf32>
    %196 = tpu.matmul %193, %195, %cst_183 {dimension_numbers = #tpu.dot_dimension_numbers<[1], [0], [0], [1], [0, 0, 1, 1], [], []>} : vector<1x49xf32>, vector<49x128xf32>, vector<1x128xf32> -> vector<1x128xf32>
    %197 = arith.addf %192, %196 : vector<1x128xf32>
    %c10 = arith.constant 10 : index
    %c0_184 = arith.constant 0 : index
    %198 = vector.load %arg14[%c10, %c0_184] : memref<16x49xf32, #tpu.memory_space<vmem>>, vector<1x49xf32>
    %c10_185 = arith.constant 10 : index
    %c0_186 = arith.constant 0 : index
    %c0_187 = arith.constant 0 : index
    %199 = vector.load %arg8[%c10_185, %c0_186, %c0_187] : memref<16x49x128xf32, #tpu.memory_space<vmem>>, vector<1x49x128xf32>
    %200 = vector.shape_cast %199 : vector<1x49x128xf32> to vector<49x128xf32>
    %cst_188 = arith.constant dense<0.000000e+00> : vector<1x128xf32>
    %201 = tpu.matmul %198, %200, %cst_188 {dimension_numbers = #tpu.dot_dimension_numbers<[1], [0], [0], [1], [0, 0, 1, 1], [], []>} : vector<1x49xf32>, vector<49x128xf32>, vector<1x128xf32> -> vector<1x128xf32>
    %202 = arith.addf %197, %201 : vector<1x128xf32>
    %c11 = arith.constant 11 : index
    %c0_189 = arith.constant 0 : index
    %203 = vector.load %arg14[%c11, %c0_189] : memref<16x49xf32, #tpu.memory_space<vmem>>, vector<1x49xf32>
    %c11_190 = arith.constant 11 : index
    %c0_191 = arith.constant 0 : index
    %c0_192 = arith.constant 0 : index
    %204 = vector.load %arg8[%c11_190, %c0_191, %c0_192] : memref<16x49x128xf32, #tpu.memory_space<vmem>>, vector<1x49x128xf32>
    %205 = vector.shape_cast %204 : vector<1x49x128xf32> to vector<49x128xf32>
    %cst_193 = arith.constant dense<0.000000e+00> : vector<1x128xf32>
    %206 = tpu.matmul %203, %205, %cst_193 {dimension_numbers = #tpu.dot_dimension_numbers<[1], [0], [0], [1], [0, 0, 1, 1], [], []>} : vector<1x49xf32>, vector<49x128xf32>, vector<1x128xf32> -> vector<1x128xf32>
    %207 = arith.addf %202, %206 : vector<1x128xf32>
    %c12 = arith.constant 12 : index
    %c0_194 = arith.constant 0 : index
    %208 = vector.load %arg14[%c12, %c0_194] : memref<16x49xf32, #tpu.memory_space<vmem>>, vector<1x49xf32>
    %c12_195 = arith.constant 12 : index
    %c0_196 = arith.constant 0 : index
    %c0_197 = arith.constant 0 : index
    %209 = vector.load %arg8[%c12_195, %c0_196, %c0_197] : memref<16x49x128xf32, #tpu.memory_space<vmem>>, vector<1x49x128xf32>
    %210 = vector.shape_cast %209 : vector<1x49x128xf32> to vector<49x128xf32>
    %cst_198 = arith.constant dense<0.000000e+00> : vector<1x128xf32>
    %211 = tpu.matmul %208, %210, %cst_198 {dimension_numbers = #tpu.dot_dimension_numbers<[1], [0], [0], [1], [0, 0, 1, 1], [], []>} : vector<1x49xf32>, vector<49x128xf32>, vector<1x128xf32> -> vector<1x128xf32>
    %212 = arith.addf %207, %211 : vector<1x128xf32>
    %c13 = arith.constant 13 : index
    %c0_199 = arith.constant 0 : index
    %213 = vector.load %arg14[%c13, %c0_199] : memref<16x49xf32, #tpu.memory_space<vmem>>, vector<1x49xf32>
    %c13_200 = arith.constant 13 : index
    %c0_201 = arith.constant 0 : index
    %c0_202 = arith.constant 0 : index
    %214 = vector.load %arg8[%c13_200, %c0_201, %c0_202] : memref<16x49x128xf32, #tpu.memory_space<vmem>>, vector<1x49x128xf32>
    %215 = vector.shape_cast %214 : vector<1x49x128xf32> to vector<49x128xf32>
    %cst_203 = arith.constant dense<0.000000e+00> : vector<1x128xf32>
    %216 = tpu.matmul %213, %215, %cst_203 {dimension_numbers = #tpu.dot_dimension_numbers<[1], [0], [0], [1], [0, 0, 1, 1], [], []>} : vector<1x49xf32>, vector<49x128xf32>, vector<1x128xf32> -> vector<1x128xf32>
    %217 = arith.addf %212, %216 : vector<1x128xf32>
    %c14 = arith.constant 14 : index
    %c0_204 = arith.constant 0 : index
    %218 = vector.load %arg14[%c14, %c0_204] : memref<16x49xf32, #tpu.memory_space<vmem>>, vector<1x49xf32>
    %c14_205 = arith.constant 14 : index
    %c0_206 = arith.constant 0 : index
    %c0_207 = arith.constant 0 : index
    %219 = vector.load %arg8[%c14_205, %c0_206, %c0_207] : memref<16x49x128xf32, #tpu.memory_space<vmem>>, vector<1x49x128xf32>
    %220 = vector.shape_cast %219 : vector<1x49x128xf32> to vector<49x128xf32>
    %cst_208 = arith.constant dense<0.000000e+00> : vector<1x128xf32>
    %221 = tpu.matmul %218, %220, %cst_208 {dimension_numbers = #tpu.dot_dimension_numbers<[1], [0], [0], [1], [0, 0, 1, 1], [], []>} : vector<1x49xf32>, vector<49x128xf32>, vector<1x128xf32> -> vector<1x128xf32>
    %222 = arith.addf %217, %221 : vector<1x128xf32>
    %c15 = arith.constant 15 : index
    %c0_209 = arith.constant 0 : index
    %223 = vector.load %arg14[%c15, %c0_209] : memref<16x49xf32, #tpu.memory_space<vmem>>, vector<1x49xf32>
    %c15_210 = arith.constant 15 : index
    %c0_211 = arith.constant 0 : index
    %c0_212 = arith.constant 0 : index
    %224 = vector.load %arg8[%c15_210, %c0_211, %c0_212] : memref<16x49x128xf32, #tpu.memory_space<vmem>>, vector<1x49x128xf32>
    %225 = vector.shape_cast %224 : vector<1x49x128xf32> to vector<49x128xf32>
    %cst_213 = arith.constant dense<0.000000e+00> : vector<1x128xf32>
    %226 = tpu.matmul %223, %225, %cst_213 {dimension_numbers = #tpu.dot_dimension_numbers<[1], [0], [0], [1], [0, 0, 1, 1], [], []>} : vector<1x49xf32>, vector<49x128xf32>, vector<1x128xf32> -> vector<1x128xf32>
    %227 = arith.addf %222, %226 : vector<1x128xf32>
    %c0_214 = arith.constant 0 : index
    %c0_215 = arith.constant 0 : index
    %c0_216 = arith.constant 0 : index
    %228 = vector.load %arg10[%c0_214, %c0_215, %c0_216] : memref<1x1x128xf32, #tpu.memory_space<vmem>>, vector<1x1x128xf32>
    %229 = vector.shape_cast %228 : vector<1x1x128xf32> to vector<1x128xf32>
    %230 = vector.shape_cast %227 : vector<1x128xf32> to vector<1x1x128xf32>
    tpu.vector_store %arg10[%c0_214, %c0_215, %c0_216], %230 {strides = array<i32>} : memref<1x1x128xf32, #tpu.memory_space<vmem>>, vector<1x1x128xf32>,
    return
  }
  func.func @transform_0(%arg0: i32) -> (i32, i32, i32) {
    %c0_i32 = arith.constant 0 : i32
    %c0_i32_0 = arith.constant 0 : i32
    %c0_i32_1 = arith.constant 0 : i32
    return %arg0, %c0_i32, %c0_i32_0 : i32, i32, i32
  }
  func.func @transform_1(%arg0: i32) -> (i32, i32, i32) {
    %c0_i32 = arith.constant 0 : i32
    %c0_i32_0 = arith.constant 0 : i32
    %c0_i32_1 = arith.constant 0 : i32
    %c0_i32_2 = arith.constant 0 : i32
    return %c0_i32, %c0_i32_0, %c0_i32_1 : i32, i32, i32
  }
  func.func @transform_2(%arg0: i32) -> (i32, i32) {
    %c0_i32 = arith.constant 0 : i32
    %c0_i32_0 = arith.constant 0 : i32
    %c0_i32_1 = arith.constant 0 : i32
    return %c0_i32, %c0_i32_0 : i32, i32
  }
  func.func @transform_3(%arg0: i32) -> (i32, i32, i32) {
    %c0_i32 = arith.constant 0 : i32
    %c0_i32_0 = arith.constant 0 : i32
    %c0_i32_1 = arith.constant 0 : i32
    %c0_i32_2 = arith.constant 0 : i32
    return %c0_i32, %c0_i32_0, %c0_i32_1 : i32, i32, i32
  }
  func.func @transform_4(%arg0: i32) -> (i32, i32) {
    %c0_i32 = arith.constant 0 : i32
    %c0_i32_0 = arith.constant 0 : i32
    %c0_i32_1 = arith.constant 0 : i32
    return %c0_i32, %c0_i32_0 : i32, i32
  }
  func.func @transform_5(%arg0: i32) -> (i32, i32) {
    %c0_i32 = arith.constant 0 : i32
    %c0_i32_0 = arith.constant 0 : i32
    %c0_i32_1 = arith.constant 0 : i32
    return %c0_i32, %c0_i32_0 : i32, i32
  }
  func.func @transform_6(%arg0: i32) -> (i32, i32) {
    %c0_i32 = arith.constant 0 : i32
    %c0_i32_0 = arith.constant 0 : i32
    %c0_i32_1 = arith.constant 0 : i32
    return %c0_i32, %c0_i32_0 : i32, i32
  }
  func.func @transform_7(%arg0: i32) -> (i32, i32, i32) {
    %c0_i32 = arith.constant 0 : i32
    %c0_i32_0 = arith.constant 0 : i32
    %c0_i32_1 = arith.constant 0 : i32
    %c0_i32_2 = arith.constant 0 : i32
    return %c0_i32, %c0_i32_0, %c0_i32_1 : i32, i32, i32
  }
  func.func @transform_8(%arg0: i32) -> (i32, i32) {
    %c0_i32 = arith.constant 0 : i32
    %c0_i32_0 = arith.constant 0 : i32
    %c0_i32_1 = arith.constant 0 : i32
    return %c0_i32, %c0_i32_0 : i32, i32
  }
  func.func @transform_9(%arg0: i32) -> (i32, i32, i32) {
    %c0_i32 = arith.constant 0 : i32
    %c0_i32_0 = arith.constant 0 : i32
    %c0_i32_1 = arith.constant 0 : i32
    return %arg0, %c0_i32, %c0_i32_0 : i32, i32, i32
  }
}

</mosaic_0001>

<llo_original>
// kernel: cnn_forward.1
$region0: #{cnn_forward.1}
  #allocation0 [shape = 'u32[]', space=smem, size = 0x4, offset = 0x4, fixed_abs, tag = 'smem constant byte address 0x4 - core index']
  #allocation1 [shape = 'u32[72,128]{1,0:T(1,128)}', space=vmem, size = 0x9000, scoped, tag = 'internal scratch']
  #allocation2 [shape = 'f32[8,838]{1,0:T(8,128)}', space=vmem, size = 0x7000, scoped, tag = 'scratch operand']
  #allocation3 [shape = 'f32[8,256]{1,0:T(8,128)}', space=vmem, size = 0x2000, scoped, tag = 'scratch operand']
  #allocation4 [shape = 'f32[16,222]{1,0:T(8,128)}', space=vmem, size = 0x4000, scoped, tag = 'scratch operand']
  #allocation5 [shape = 'f32[16,49]{1,0:T(8,128)}', space=vmem, size = 0x2000, scoped, tag = 'scratch operand']
  %s0 = inlined_call_operand.vmem [shape: f32[2,1,900], index: 0, kind: input, shape index: {}]
  %s1 = inlined_call_operand.vmem [shape: f32[9,8,1], index: 1, kind: input, shape index: {}]
  %s2 = inlined_call_operand.vmem [shape: f32[8,1], index: 2, kind: input, shape index: {}]
  %s3 = inlined_call_operand.vmem [shape: f32[9,16,8], index: 3, kind: input, shape index: {}]
  %s4 = inlined_call_operand.vmem [shape: f32[16,1], index: 4, kind: input, shape index: {}]
  %s5 = inlined_call_operand.vmem [shape: f32[807,256], index: 5, kind: input, shape index: {}]
  %s6 = inlined_call_operand.vmem [shape: f32[205,49], index: 6, kind: input, shape index: {}]
  %s7 = inlined_call_operand.vmem [shape: f32[16,49,128], index: 7, kind: input, shape index: {}]
  %s8 = inlined_call_operand.vmem [shape: f32[1,128], index: 8, kind: input, shape index: {}]
  %s9 = inlined_call_operand.hbm [shape: f32[2,1,128], index: 9, kind: output, shape index: {}]
  %s10 = sld [smem:[#allocation0]]
  $region69: #{cnn_forward.1} parent=0
    _
  %s12 = ssub.s32 1, %s10
  %s13 = scalar_select 0, %s12, %s10
  $region1: #{cnn_forward.1} parent=0
    #allocation6 [shape = 'u8[1024]{0}', space=vmem, size = 0x400, scoped, tag = 'output window, operand 0']
    #allocation7 [shape = 's32[2]{0}', space=sflag, size = 0x8, scoped, tag = 'scoped memory for cnn_forward.1']
    %14 = vsyncpa [#allocation7], 0
    %s15 = scalar_lea.sflag [#allocation7], 1
    %16 = vsyncpa %s15, 0
    loop: start=0, step=1, limit=4
    $region2: #{cnn_forward.1} parent=1 // loop_pre_header
      _
    $region3: #{cnn_forward.1} parent=1 // loop_header
      %s18 = sphi 0, %s22
      %p19 = scmp.ge.s32.totalorder %s18, 4
      %s28 = sphi 0, %s30
      %s31 = sphi 0, %s28
      %s32 = sphi 0, %s31
      %s48 = sphi 0, %s32
      %s52 = sphi 0, %s52
      %s54 = sphi 0, %s52
      %s55 = sphi 0, %s54
      %s69 = sphi 0, %s55
      %s73 = sphi 0, %s73
      %s75 = sphi 0, %s73
      %s76 = sphi 0, %s75
      %s90 = sphi 0, %s76
      %s94 = sphi 0, %s94
      %s96 = sphi 0, %s94
      %s97 = sphi 0, %s96
      %s111 = sphi 0, %s97
      %s115 = sphi 0, %s115
      %s117 = sphi 0, %s115
      %s118 = sphi 0, %s117
      %s132 = sphi 0, %s118
      %s136 = sphi 0, %s136
      %s138 = sphi 0, %s136
      %s139 = sphi 0, %s138
      %s153 = sphi 0, %s139
      %s157 = sphi 0, %s157
      %s159 = sphi 0, %s157
      %s160 = sphi 0, %s159
      %s174 = sphi 0, %s160
      %s178 = sphi 0, %s178
      %s180 = sphi 0, %s178
      %s181 = sphi 0, %s180
      %s195 = sphi 0, %s181
      %s199 = sphi 0, %s199
      %s201 = sphi 0, %s199
      %s202 = sphi 0, %s201
      %s216 = sphi 0, %s202
      %s222 = sphi 0, %s224
      %s225 = sphi 0, %s222
      %s226 = sphi 0, %s225
      %s242 = sphi 0, %s226
    $region4: #{cnn_forward.1} parent=1 // loop_header_branch
      %21 = sbr.rel (%p19) target = $region8
    $region5: #{cnn_forward.1} parent=1 // loop_body
      %s23 = ssub.s32 %s18, 1
      %s24 = ssub.s32 %s18, 2
      %s25 = sadd.s32 %s18, 1
      %s26 = ssub.s32 %s18, %s25
      %p27 = scmp.eq.s32.totalorder %s26, 0
      %s29 = sadd.s32 %s28, 1
      %s30 = scalar_select %p27, %s28, %s29
      %p33 = pneg %p27
      %p34 = scmp.eq.s32.totalorder %s18, 1
      %p35 = por %p33, %p34
      %p36 = scmp.ne.s32.totalorder %s28, %s31
      %p37 = scmp.eq.s32.totalorder %s18, 0
      %p38 = por %p36, %p37
      %p39 = scmp.ne.s32.totalorder %s28, %s31
      %p40 = scmp.eq.s32.totalorder %s23, 1
      %p41 = por %p39, %p40
      %p42 = scmp.ne.s32.totalorder %s31, %s32
      %p43 = scmp.eq.s32.totalorder %s23, 0
      %p44 = por %p42, %p43
      %p45 = scmp.ne.s32.totalorder %s31, %s32
      %p46 = scmp.eq.s32.totalorder %s24, 1
      %p47 = por %p45, %p46
      %p49 = scmp.ne.s32.totalorder %s32, %s48
      %p50 = scmp.eq.s32.totalorder %s24, 0
      %p51 = por %p49, %p50
      %s53 = sadd.s32 %s52, 1
      %p56 = scmp.eq.s32.totalorder %s18, 1
      %p57 = scmp.ne.s32.totalorder %s52, %s54
      %p58 = scmp.eq.s32.totalorder %s18, 0
      %p59 = por %p57, %p58
      %p60 = scmp.ne.s32.totalorder %s52, %s54
      %p61 = scmp.eq.s32.totalorder %s23, 1
      %p62 = por %p60, %p61
      %p63 = scmp.ne.s32.totalorder %s54, %s55
      %p64 = scmp.eq.s32.totalorder %s23, 0
      %p65 = por %p63, %p64
      %p66 = scmp.ne.s32.totalorder %s54, %s55
      %p67 = scmp.eq.s32.totalorder %s24, 1
      %p68 = por %p66, %p67
      %p70 = scmp.ne.s32.totalorder %s55, %s69
      %p71 = scmp.eq.s32.totalorder %s24, 0
      %p72 = por %p70, %p71
      %s74 = sadd.s32 %s73, 1
      %p77 = scmp.eq.s32.totalorder %s18, 1
      %p78 = scmp.ne.s32.totalorder %s73, %s75
      %p79 = scmp.eq.s32.totalorder %s18, 0
      %p80 = por %p78, %p79
      %p81 = scmp.ne.s32.totalorder %s73, %s75
      %p82 = scmp.eq.s32.totalorder %s23, 1
      %p83 = por %p81, %p82
      %p84 = scmp.ne.s32.totalorder %s75, %s76
      %p85 = scmp.eq.s32.totalorder %s23, 0
      %p86 = por %p84, %p85
      %p87 = scmp.ne.s32.totalorder %s75, %s76
      %p88 = scmp.eq.s32.totalorder %s24, 1
      %p89 = por %p87, %p88
      %p91 = scmp.ne.s32.totalorder %s76, %s90
      %p92 = scmp.eq.s32.totalorder %s24, 0
      %p93 = por %p91, %p92
      %s95 = sadd.s32 %s94, 1
      %p98 = scmp.eq.s32.totalorder %s18, 1
      %p99 = scmp.ne.s32.totalorder %s94, %s96
      %p100 = scmp.eq.s32.totalorder %s18, 0
      %p101 = por %p99, %p100
      %p102 = scmp.ne.s32.totalorder %s94, %s96
      %p103 = scmp.eq.s32.totalorder %s23, 1
      %p104 = por %p102, %p103
      %p105 = scmp.ne.s32.totalorder %s96, %s97
      %p106 = scmp.eq.s32.totalorder %s23, 0
      %p107 = por %p105, %p106
      %p108 = scmp.ne.s32.totalorder %s96, %s97
      %p109 = scmp.eq.s32.totalorder %s24, 1
      %p110 = por %p108, %p109
      %p112 = scmp.ne.s32.totalorder %s97, %s111
      %p113 = scmp.eq.s32.totalorder %s24, 0
      %p114 = por %p112, %p113
      %s116 = sadd.s32 %s115, 1
      %p119 = scmp.eq.s32.totalorder %s18, 1
      %p120 = scmp.ne.s32.totalorder %s115, %s117
      %p121 = scmp.eq.s32.totalorder %s18, 0
      %p122 = por %p120, %p121
      %p123 = scmp.ne.s32.totalorder %s115, %s117
      %p124 = scmp.eq.s32.totalorder %s23, 1
      %p125 = por %p123, %p124
      %p126 = scmp.ne.s32.totalorder %s117, %s118
      %p127 = scmp.eq.s32.totalorder %s23, 0
      %p128 = por %p126, %p127
      %p129 = scmp.ne.s32.totalorder %s117, %s118
      %p130 = scmp.eq.s32.totalorder %s24, 1
      %p131 = por %p129, %p130
      %p133 = scmp.ne.s32.totalorder %s118, %s132
      %p134 = scmp.eq.s32.totalorder %s24, 0
      %p135 = por %p133, %p134
      %s137 = sadd.s32 %s136, 1
      %p140 = scmp.eq.s32.totalorder %s18, 1
      %p141 = scmp.ne.s32.totalorder %s136, %s138
      %p142 = scmp.eq.s32.totalorder %s18, 0
      %p143 = por %p141, %p142
      %p144 = scmp.ne.s32.totalorder %s136, %s138
      %p145 = scmp.eq.s32.totalorder %s23, 1
      %p146 = por %p144, %p145
      %p147 = scmp.ne.s32.totalorder %s138, %s139
      %p148 = scmp.eq.s32.totalorder %s23, 0
      %p149 = por %p147, %p148
      %p150 = scmp.ne.s32.totalorder %s138, %s139
      %p151 = scmp.eq.s32.totalorder %s24, 1
      %p152 = por %p150, %p151
      %p154 = scmp.ne.s32.totalorder %s139, %s153
      %p155 = scmp.eq.s32.totalorder %s24, 0
      %p156 = por %p154, %p155
      %s158 = sadd.s32 %s157, 1
      %p161 = scmp.eq.s32.totalorder %s18, 1
      %p162 = scmp.ne.s32.totalorder %s157, %s159
      %p163 = scmp.eq.s32.totalorder %s18, 0
      %p164 = por %p162, %p163
      %p165 = scmp.ne.s32.totalorder %s157, %s159
      %p166 = scmp.eq.s32.totalorder %s23, 1
      %p167 = por %p165, %p166
      %p168 = scmp.ne.s32.totalorder %s159, %s160
      %p169 = scmp.eq.s32.totalorder %s23, 0
      %p170 = por %p168, %p169
      %p171 = scmp.ne.s32.totalorder %s159, %s160
      %p172 = scmp.eq.s32.totalorder %s24, 1
      %p173 = por %p171, %p172
      %p175 = scmp.ne.s32.totalorder %s160, %s174
      %p176 = scmp.eq.s32.totalorder %s24, 0
      %p177 = por %p175, %p176
      %s179 = sadd.s32 %s178, 1
      %p182 = scmp.eq.s32.totalorder %s18, 1
      %p183 = scmp.ne.s32.totalorder %s178, %s180
      %p184 = scmp.eq.s32.totalorder %s18, 0
      %p185 = por %p183, %p184
      %p186 = scmp.ne.s32.totalorder %s178, %s180
      %p187 = scmp.eq.s32.totalorder %s23, 1
      %p188 = por %p186, %p187
      %p189 = scmp.ne.s32.totalorder %s180, %s181
      %p190 = scmp.eq.s32.totalorder %s23, 0
      %p191 = por %p189, %p190
      %p192 = scmp.ne.s32.totalorder %s180, %s181
      %p193 = scmp.eq.s32.totalorder %s24, 1
      %p194 = por %p192, %p193
      %p196 = scmp.ne.s32.totalorder %s181, %s195
      %p197 = scmp.eq.s32.totalorder %s24, 0
      %p198 = por %p196, %p197
      %s200 = sadd.s32 %s199, 1
      %p203 = scmp.eq.s32.totalorder %s18, 1
      %p204 = scmp.ne.s32.totalorder %s199, %s201
      %p205 = scmp.eq.s32.totalorder %s18, 0
      %p206 = por %p204, %p205
      %p207 = scmp.ne.s32.totalorder %s199, %s201
      %p208 = scmp.eq.s32.totalorder %s23, 1
      %p209 = por %p207, %p208
      %p210 = scmp.ne.s32.totalorder %s201, %s202
      %p211 = scmp.eq.s32.totalorder %s23, 0
      %p212 = por %p210, %p211
      %p213 = scmp.ne.s32.totalorder %s201, %s202
      %p214 = scmp.eq.s32.totalorder %s24, 1
      %p215 = por %p213, %p214
      %p217 = scmp.ne.s32.totalorder %s202, %s216
      %p218 = scmp.eq.s32.totalorder %s24, 0
      %p219 = por %p217, %p218
      %s220 = ssub.s32 %s18, %s25
      %p221 = scmp.eq.s32.totalorder %s220, 0
      %s223 = sadd.s32 %s222, 1
      %s224 = scalar_select %p221, %s222, %s223
      %p227 = pneg %p221
      %p228 = scmp.eq.s32.totalorder %s18, 1
      %p229 = por %p227, %p228
      %p230 = scmp.ne.s32.totalorder %s222, %s225
      %p231 = scmp.eq.s32.totalorder %s18, 0
      %p232 = por %p230, %p231
      %p233 = scmp.ne.s32.totalorder %s222, %s225
      %p234 = scmp.eq.s32.totalorder %s23, 1
      %p235 = por %p233, %p234
      %p236 = scmp.ne.s32.totalorder %s225, %s226
      %p237 = scmp.eq.s32.totalorder %s23, 0
      %p238 = por %p236, %p237
      %p239 = scmp.ne.s32.totalorder %s225, %s226
      %p240 = scmp.eq.s32.totalorder %s24, 1
      %p241 = por %p239, %p240
      %p243 = scmp.ne.s32.totalorder %s226, %s242
      %p244 = scmp.eq.s32.totalorder %s24, 0
      %p245 = por %p243, %p244
      %p246 = scmp.le.s32.totalorder 1, %s18
      %p247 = scmp.lt.s32.totalorder %s18, 3
      %p248 = pnand %p246, %p247
      %p249 = pneg %p248
      // Predicated region
      $region9: #{cnn_forward.1} parent=5 // pred_check
        _
      $region10: #{cnn_forward.1} parent=5 // pred_check_branch
        %251 = sbr.rel (%p248) target = $region12
      $region11: #{cnn_forward.1} parent=5 // pred_region
        %s252 = ssub.s32 %s18, 1
        // Predicated region
        $region13: #{cnn_forward.1} parent=11 // pred_check
          %p253 = pneg %p65
        $region14: #{cnn_forward.1} parent=11 // pred_check_branch
          %255 = sbr.rel (%p253) target = $region16
        $region15: #{cnn_forward.1} parent=11 // pred_region
          _
        $region16: #{cnn_forward.1} parent=11 // pred_fallthru
          _
        // Predicated region
        $region17: #{cnn_forward.1} parent=11 // pred_check
          %p256 = pneg %p86
        $region18: #{cnn_forward.1} parent=11 // pred_check_branch
          %258 = sbr.rel (%p256) target = $region20
        $region19: #{cnn_forward.1} parent=11 // pred_region
          _
        $region20: #{cnn_forward.1} parent=11 // pred_fallthru
          _
        // Predicated region
        $region21: #{cnn_forward.1} parent=11 // pred_check
          %p259 = pneg %p107
        $region22: #{cnn_forward.1} parent=11 // pred_check_branch
          %261 = sbr.rel (%p259) target = $region24
        $region23: #{cnn_forward.1} parent=11 // pred_region
          _
        $region24: #{cnn_forward.1} parent=11 // pred_fallthru
          _
        // Predicated region
        $region25: #{cnn_forward.1} parent=11 // pred_check
          %p262 = pneg %p128
        $region26: #{cnn_forward.1} parent=11 // pred_check_branch
          %264 = sbr.rel (%p262) target = $region28
        $region27: #{cnn_forward.1} parent=11 // pred_region
          _
        $region28: #{cnn_forward.1} parent=11 // pred_fallthru
          _
        // Predicated region
        $region29: #{cnn_forward.1} parent=11 // pred_check
          %p265 = pneg %p149
        $region30: #{cnn_forward.1} parent=11 // pred_check_branch
          %267 = sbr.rel (%p265) target = $region32
        $region31: #{cnn_forward.1} parent=11 // pred_region
          _
        $region32: #{cnn_forward.1} parent=11 // pred_fallthru
          _
        // Predicated region
        $region33: #{cnn_forward.1} parent=11 // pred_check
          %p268 = pneg %p170
        $region34: #{cnn_forward.1} parent=11 // pred_check_branch
          %270 = sbr.rel (%p268) target = $region36
        $region35: #{cnn_forward.1} parent=11 // pred_region
          _
        $region36: #{cnn_forward.1} parent=11 // pred_fallthru
          _
        // Predicated region
        $region37: #{cnn_forward.1} parent=11 // pred_check
          %p271 = pneg %p191
        $region38: #{cnn_forward.1} parent=11 // pred_check_branch
          %273 = sbr.rel (%p271) target = $region40
        $region39: #{cnn_forward.1} parent=11 // pred_region
          _
        $region40: #{cnn_forward.1} parent=11 // pred_fallthru
          _
        // Predicated region
        $region41: #{cnn_forward.1} parent=11 // pred_check
          %p274 = pneg %p212
        $region42: #{cnn_forward.1} parent=11 // pred_check_branch
          %276 = sbr.rel (%p274) target = $region44
        $region43: #{cnn_forward.1} parent=11 // pred_region
          _
        $region44: #{cnn_forward.1} parent=11 // pred_fallthru
          _
      $region12: #{cnn_forward.1} parent=5 // pred_fallthru
        _
      %p277 = scmp.lt.s32.totalorder %s18, 2
      // Predicated region
      $region45: #{cnn_forward.1} parent=5 // pred_check
        %p278 = pneg %p277
      $region46: #{cnn_forward.1} parent=5 // pred_check_branch
        %280 = sbr.rel (%p278) target = $region48
      $region47: #{cnn_forward.1} parent=5 // pred_region
        // Predicated region
        $region49: #{cnn_forward.1} parent=47 // pred_check
          %p281 = pneg %p38
        $region50: #{cnn_forward.1} parent=47 // pred_check_branch
          %283 = sbr.rel (%p281) target = $region52
        $region51: #{cnn_forward.1} parent=47 // pred_region
          %p284 = scmp.lt.s32.totalorder %s18, 1
          %s285 = scalar_select %p284, %s18, 1
          %s286 = smul.addr %s285, 8
          %s287 = scalar_lea.vmem %s0, %s286
        $region52: #{cnn_forward.1} parent=47 // pred_fallthru
          _
      $region48: #{cnn_forward.1} parent=5 // pred_fallthru
        _
      %p288 = scmp.le.s32.totalorder 1, %s18
      %p289 = scmp.lt.s32.totalorder %s18, 3
      %p290 = pnand %p288, %p289
      %p291 = pneg %p290
      // Predicated region
      $region53: #{cnn_forward.1} parent=5 // pred_check
        _
      $region54: #{cnn_forward.1} parent=5 // pred_check_branch
        %293 = sbr.rel (%p290) target = $region56
      $region55: #{cnn_forward.1} parent=5 // pred_region
        %s294 = ssub.s32 %s18, 1
        %p295 = scmp.lt.s32.totalorder %s23, 1
        %s296 = scalar_select %p295, %s23, 1
        %s297 = smul.addr %s296, 8
        %s298 = scalar_lea.vmem %s0, %s297
        %p299 = pneg %p44
        %p300 = pneg %p41
        %p301 = pneg %p65
        %p302 = pneg %p62
        %p303 = pneg %p86
        %p304 = pneg %p83
        %p305 = pneg %p107
        %p306 = pneg %p104
        %p307 = pneg %p128
        %p308 = pneg %p125
        %p309 = pneg %p149
        %p310 = pneg %p146
        %p311 = pneg %p170
        %p312 = pneg %p167
        %p313 = pneg %p191
        %p314 = pneg %p188
        %p315 = pneg %p212
        %p316 = pneg %p209
        %p317 = pneg %p238
        %p318 = pneg %p235
        %s319 = sand.u32 %s225, 1
        %s320 = scalar_lea.sflag [#allocation7], %s319
        %s321 = sand.u32 %s225, 1
        %s322 = scalar_lea.vmem [#allocation6], %s321
        %p323 = scmp.lt.s32.totalorder %s23, 1
        %s324 = scalar_select %p323, %s23, 1
        %s325 = smul.addr %s324, 8
        %s326 = scalar_lea.vmem %s0, %s325
        %v327 = vld [vmem:[%s1] sm:$0xff]
        %v328 = vld [vmem:[%s326] sm:$0x7f]
        %330 = vset.pattern.permute.xlu0 0
        %331 = vperm.xlu0 %330, %v327
        %v332 = vpop.permute.xlu0 %331
        %v335 = vperm.slane %v328, 0
        %v336 = vperm.slane %v328, 1
        %v337 = vperm.slane %v328, 2
        %v338 = vperm.slane %v328, 3
        %v339 = vperm.slane %v328, 4
        %v340 = vperm.slane %v328, 5
        %v341 = vperm.slane %v328, 6
        %v349 = vmul.f32 %v332, %v335
        %v350 = vmul.f32 %v332, %v336
        %v351 = vmul.f32 %v332, %v337
        %v352 = vmul.f32 %v332, %v338
        %v353 = vmul.f32 %v332, %v339
        %v354 = vmul.f32 %v332, %v340
        %v355 = vmul.f32 %v332, %v341
        %s356 = scalar_lea.vmem %s1, 8
        %v357 = vld [vmem:[%s356] sm:$0xff]
        %359 = vset.pattern.permute.xlu0 0
        %360 = vperm.xlu0 %359, %v357
        %v361 = vpop.permute.xlu0 %360
        %v363 = vmul.f32 %v361, %v335
        %v364 = vmul.f32 %v361, %v336
        %v365 = vmul.f32 %v361, %v337
        %v366 = vmul.f32 %v361, %v338
        %v367 = vmul.f32 %v361, %v339
        %v368 = vmul.f32 %v361, %v340
        %v369 = vmul.f32 %v361, %v341
        %377 = vrot.lane.b32.xlu0 %v363, 127
        %v378 = vpop.permute.xlu0 %377
        %379 = vrot.lane.b32.xlu0 %v364, 127
        %v380 = vpop.permute.xlu0 %379
        %381 = vrot.lane.b32.xlu0 %v365, 127
        %v382 = vpop.permute.xlu0 %381
        %383 = vrot.lane.b32.xlu0 %v366, 127
        %v384 = vpop.permute.xlu0 %383
        %385 = vrot.lane.b32.xlu0 %v367, 127
        %v386 = vpop.permute.xlu0 %385
        %387 = vrot.lane.b32.xlu0 %v368, 127
        %v388 = vpop.permute.xlu0 %387
        %389 = vrot.lane.b32.xlu0 %v369, 127
        %v390 = vpop.permute.xlu0 %389
        %vm391 = vcmask 1039360
        %v392 = vsel %vm391, %v378, %v380
        %v393 = vsel %vm391, %v380, %v382
        %v394 = vsel %vm391, %v382, %v384
        %v395 = vsel %vm391, %v384, %v386
        %v396 = vsel %vm391, %v386, %v388
        %v397 = vsel %vm391, %v388, %v390
        %v405 = vadd.f32 %v349, %v392
        %v406 = vadd.f32 %v350, %v393
        %v407 = vadd.f32 %v351, %v394
        %v408 = vadd.f32 %v352, %v395
        %v409 = vadd.f32 %v353, %v396
        %v410 = vadd.f32 %v354, %v397
        %v411 = vadd.f32 %v355, %v390
        %s412 = scalar_lea.vmem %s1, 16
        %v413 = vld [vmem:[%s412] sm:$0xff]
        %415 = vset.pattern.permute.xlu0 0
        %416 = vperm.xlu0 %415, %v413
        %v417 = vpop.permute.xlu0 %416
        %v419 = vmul.f32 %v417, %v335
        %v420 = vmul.f32 %v417, %v336
        %v421 = vmul.f32 %v417, %v337
        %v422 = vmul.f32 %v417, %v338
        %v423 = vmul.f32 %v417, %v339
        %v424 = vmul.f32 %v417, %v340
        %v425 = vmul.f32 %v417, %v341
        %433 = vrot.lane.b32.xlu0 %v419, 126
        %v434 = vpop.permute.xlu0 %433
        %435 = vrot.lane.b32.xlu0 %v420, 126
        %v436 = vpop.permute.xlu0 %435
        %437 = vrot.lane.b32.xlu0 %v421, 126
        %v438 = vpop.permute.xlu0 %437
        %439 = vrot.lane.b32.xlu0 %v422, 126
        %v440 = vpop.permute.xlu0 %439
        %441 = vrot.lane.b32.xlu0 %v423, 126
        %v442 = vpop.permute.xlu0 %441
        %443 = vrot.lane.b32.xlu0 %v424, 126
        %v444 = vpop.permute.xlu0 %443
        %445 = vrot.lane.b32.xlu0 %v425, 126
        %v446 = vpop.permute.xlu0 %445
        %vm447 = vcmask 1031168
        %v448 = vsel %vm447, %v434, %v436
        %v449 = vsel %vm447, %v436, %v438
        %v450 = vsel %vm447, %v438, %v440
        %v451 = vsel %vm447, %v440, %v442
        %v452 = vsel %vm447, %v442, %v444
        %v453 = vsel %vm447, %v444, %v446
        %v461 = vadd.f32 %v405, %v448
        %v462 = vadd.f32 %v406, %v449
        %v463 = vadd.f32 %v407, %v450
        %v464 = vadd.f32 %v408, %v451
        %v465 = vadd.f32 %v409, %v452
        %v466 = vadd.f32 %v410, %v453
        %v467 = vadd.f32 %v411, %v446
        %s468 = scalar_lea.vmem %s1, 24
        %v469 = vld [vmem:[%s468] sm:$0xff]
        %471 = vset.pattern.permute.xlu0 0
        %472 = vperm.xlu0 %471, %v469
        %v473 = vpop.permute.xlu0 %472
        %v475 = vmul.f32 %v473, %v335
        %v476 = vmul.f32 %v473, %v336
        %v477 = vmul.f32 %v473, %v337
        %v478 = vmul.f32 %v473, %v338
        %v479 = vmul.f32 %v473, %v339
        %v480 = vmul.f32 %v473, %v340
        %v481 = vmul.f32 %v473, %v341
        %489 = vrot.lane.b32.xlu0 %v475, 98
        %v490 = vpop.permute.xlu0 %489
        %491 = vrot.lane.b32.xlu0 %v476, 98
        %v492 = vpop.permute.xlu0 %491
        %493 = vrot.lane.b32.xlu0 %v477, 98
        %v494 = vpop.permute.xlu0 %493
        %495 = vrot.lane.b32.xlu0 %v478, 98
        %v496 = vpop.permute.xlu0 %495
        %497 = vrot.lane.b32.xlu0 %v479, 98
        %v498 = vpop.permute.xlu0 %497
        %499 = vrot.lane.b32.xlu0 %v480, 98
        %v500 = vpop.permute.xlu0 %499
        %501 = vrot.lane.b32.xlu0 %v481, 98
        %v502 = vpop.permute.xlu0 %501
        %vm503 = vcmask 801792
        %v504 = vsel %vm503, %v490, %v492
        %v505 = vsel %vm503, %v492, %v494
        %v506 = vsel %vm503, %v494, %v496
        %v507 = vsel %vm503, %v496, %v498
        %v508 = vsel %vm503, %v498, %v500
        %v509 = vsel %vm503, %v500, %v502
        %v517 = vadd.f32 %v461, %v504
        %v518 = vadd.f32 %v462, %v505
        %v519 = vadd.f32 %v463, %v506
        %v520 = vadd.f32 %v464, %v507
        %v521 = vadd.f32 %v465, %v508
        %v522 = vadd.f32 %v466, %v509
        %v523 = vadd.f32 %v467, %v502
        %s524 = scalar_lea.vmem %s1, 32
        %v525 = vld [vmem:[%s524] sm:$0xff]
        %527 = vset.pattern.permute.xlu0 0
        %528 = vperm.xlu0 %527, %v525
        %v529 = vpop.permute.xlu0 %528
        %v531 = vmul.f32 %v529, %v335
        %v532 = vmul.f32 %v529, %v336
        %v533 = vmul.f32 %v529, %v337
        %v534 = vmul.f32 %v529, %v338
        %v535 = vmul.f32 %v529, %v339
        %v536 = vmul.f32 %v529, %v340
        %v537 = vmul.f32 %v529, %v341
        %545 = vrot.lane.b32.xlu0 %v531, 97
        %v546 = vpop.permute.xlu0 %545
        %547 = vrot.lane.b32.xlu0 %v532, 97
        %v548 = vpop.permute.xlu0 %547
        %549 = vrot.lane.b32.xlu0 %v533, 97
        %v550 = vpop.permute.xlu0 %549
        %551 = vrot.lane.b32.xlu0 %v534, 97
        %v552 = vpop.permute.xlu0 %551
        %553 = vrot.lane.b32.xlu0 %v535, 97
        %v554 = vpop.permute.xlu0 %553
        %555 = vrot.lane.b32.xlu0 %v536, 97
        %v556 = vpop.permute.xlu0 %555
        %557 = vrot.lane.b32.xlu0 %v537, 97
        %v558 = vpop.permute.xlu0 %557
        %vm559 = vcmask 793600
        %v560 = vsel %vm559, %v546, %v548
        %v561 = vsel %vm559, %v548, %v550
        %v562 = vsel %vm559, %v550, %v552
        %v563 = vsel %vm559, %v552, %v554
        %v564 = vsel %vm559, %v554, %v556
        %v565 = vsel %vm559, %v556, %v558
        %v573 = vadd.f32 %v517, %v560
        %v574 = vadd.f32 %v518, %v561
        %v575 = vadd.f32 %v519, %v562
        %v576 = vadd.f32 %v520, %v563
        %v577 = vadd.f32 %v521, %v564
        %v578 = vadd.f32 %v522, %v565
        %v579 = vadd.f32 %v523, %v558
        %s580 = scalar_lea.vmem %s1, 40
        %v581 = vld [vmem:[%s580] sm:$0xff]
        %583 = vset.pattern.permute.xlu0 0
        %584 = vperm.xlu0 %583, %v581
        %v585 = vpop.permute.xlu0 %584
        %v587 = vmul.f32 %v585, %v335
        %v588 = vmul.f32 %v585, %v336
        %v589 = vmul.f32 %v585, %v337
        %v590 = vmul.f32 %v585, %v338
        %v591 = vmul.f32 %v585, %v339
        %v592 = vmul.f32 %v585, %v340
        %v593 = vmul.f32 %v585, %v341
        %601 = vrot.lane.b32.xlu0 %v587, 96
        %v602 = vpop.permute.xlu0 %601
        %603 = vrot.lane.b32.xlu0 %v588, 96
        %v604 = vpop.permute.xlu0 %603
        %605 = vrot.lane.b32.xlu0 %v589, 96
        %v606 = vpop.permute.xlu0 %605
        %607 = vrot.lane.b32.xlu0 %v590, 96
        %v608 = vpop.permute.xlu0 %607
        %609 = vrot.lane.b32.xlu0 %v591, 96
        %v610 = vpop.permute.xlu0 %609
        %611 = vrot.lane.b32.xlu0 %v592, 96
        %v612 = vpop.permute.xlu0 %611
        %613 = vrot.lane.b32.xlu0 %v593, 96
        %v614 = vpop.permute.xlu0 %613
        %vm615 = vcmask 785408
        %v616 = vsel %vm615, %v602, %v604
        %v617 = vsel %vm615, %v604, %v606
        %v618 = vsel %vm615, %v606, %v608
        %v619 = vsel %vm615, %v608, %v610
        %v620 = vsel %vm615, %v610, %v612
        %v621 = vsel %vm615, %v612, %v614
        %v629 = vadd.f32 %v573, %v616
        %v630 = vadd.f32 %v574, %v617
        %v631 = vadd.f32 %v575, %v618
        %v632 = vadd.f32 %v576, %v619
        %v633 = vadd.f32 %v577, %v620
        %v634 = vadd.f32 %v578, %v621
        %v635 = vadd.f32 %v579, %v614
        %s636 = scalar_lea.vmem %s1, 48
        %v637 = vld [vmem:[%s636] sm:$0xff]
        %v638 = vld [vmem:[%s326] sm:$0xff]
        %640 = vset.pattern.permute.xlu0 0
        %641 = vperm.xlu0 %640, %v637
        %v642 = vpop.permute.xlu0 %641
        %v645 = vperm.slane %v638, 0
        %v646 = vperm.slane %v638, 1
        %v647 = vperm.slane %v638, 2
        %v648 = vperm.slane %v638, 3
        %v649 = vperm.slane %v638, 4
        %v650 = vperm.slane %v638, 5
        %v651 = vperm.slane %v638, 6
        %v652 = vperm.slane %v638, 7
        %v661 = vmul.f32 %v642, %v645
        %v662 = vmul.f32 %v642, %v646
        %v663 = vmul.f32 %v642, %v647
        %v664 = vmul.f32 %v642, %v648
        %v665 = vmul.f32 %v642, %v649
        %v666 = vmul.f32 %v642, %v650
        %v667 = vmul.f32 %v642, %v651
        %v668 = vmul.f32 %v642, %v652
        %677 = vrot.lane.b32.xlu0 %v661, 68
        %v678 = vpop.permute.xlu0 %677
        %679 = vrot.lane.b32.xlu0 %v662, 68
        %v680 = vpop.permute.xlu0 %679
        %681 = vrot.lane.b32.xlu0 %v663, 68
        %v682 = vpop.permute.xlu0 %681
        %683 = vrot.lane.b32.xlu0 %v664, 68
        %v684 = vpop.permute.xlu0 %683
        %685 = vrot.lane.b32.xlu0 %v665, 68
        %v686 = vpop.permute.xlu0 %685
        %687 = vrot.lane.b32.xlu0 %v666, 68
        %v688 = vpop.permute.xlu0 %687
        %689 = vrot.lane.b32.xlu0 %v667, 68
        %v690 = vpop.permute.xlu0 %689
        %691 = vrot.lane.b32.xlu0 %v668, 68
        %v692 = vpop.permute.xlu0 %691
        %vm693 = vcmask 556032
        %v694 = vsel %vm693, %v678, %v680
        %v695 = vsel %vm693, %v680, %v682
        %v696 = vsel %vm693, %v682, %v684
        %v697 = vsel %vm693, %v684, %v686
        %v698 = vsel %vm693, %v686, %v688
        %v699 = vsel %vm693, %v688, %v690
        %v700 = vsel %vm693, %v690, %v692
        %v708 = vadd.f32 %v629, %v694
        %v709 = vadd.f32 %v630, %v695
        %v710 = vadd.f32 %v631, %v696
        %v711 = vadd.f32 %v632, %v697
        %v712 = vadd.f32 %v633, %v698
        %v713 = vadd.f32 %v634, %v699
        %v714 = vadd.f32 %v635, %v700
        %s715 = scalar_lea.vmem %s1, 56
        %v716 = vld [vmem:[%s715] sm:$0xff]
        %718 = vset.pattern.permute.xlu0 0
        %719 = vperm.xlu0 %718, %v716
        %v720 = vpop.permute.xlu0 %719
        %v722 = vmul.f32 %v720, %v645
        %v723 = vmul.f32 %v720, %v646
        %v724 = vmul.f32 %v720, %v647
        %v725 = vmul.f32 %v720, %v648
        %v726 = vmul.f32 %v720, %v649
        %v727 = vmul.f32 %v720, %v650
        %v728 = vmul.f32 %v720, %v651
        %v729 = vmul.f32 %v720, %v652
        %738 = vrot.lane.b32.xlu0 %v722, 67
        %v739 = vpop.permute.xlu0 %738
        %740 = vrot.lane.b32.xlu0 %v723, 67
        %v741 = vpop.permute.xlu0 %740
        %742 = vrot.lane.b32.xlu0 %v724, 67
        %v743 = vpop.permute.xlu0 %742
        %744 = vrot.lane.b32.xlu0 %v725, 67
        %v745 = vpop.permute.xlu0 %744
        %746 = vrot.lane.b32.xlu0 %v726, 67
        %v747 = vpop.permute.xlu0 %746
        %748 = vrot.lane.b32.xlu0 %v727, 67
        %v749 = vpop.permute.xlu0 %748
        %750 = vrot.lane.b32.xlu0 %v728, 67
        %v751 = vpop.permute.xlu0 %750
        %752 = vrot.lane.b32.xlu0 %v729, 67
        %v753 = vpop.permute.xlu0 %752
        %vm754 = vcmask 547840
        %v755 = vsel %vm754, %v739, %v741
        %v756 = vsel %vm754, %v741, %v743
        %v757 = vsel %vm754, %v743, %v745
        %v758 = vsel %vm754, %v745, %v747
        %v759 = vsel %vm754, %v747, %v749
        %v760 = vsel %vm754, %v749, %v751
        %v761 = vsel %vm754, %v751, %v753
        %v769 = vadd.f32 %v708, %v755
        %v770 = vadd.f32 %v709, %v756
        %v771 = vadd.f32 %v710, %v757
        %v772 = vadd.f32 %v711, %v758
        %v773 = vadd.f32 %v712, %v759
        %v774 = vadd.f32 %v713, %v760
        %v775 = vadd.f32 %v714, %v761
        %s776 = scalar_lea.vmem %s1, 64
        %v777 = vld [vmem:[%s776] sm:$0xff]
        %779 = vset.pattern.permute.xlu0 0
        %780 = vperm.xlu0 %779, %v777
        %v781 = vpop.permute.xlu0 %780
        %v783 = vmul.f32 %v781, %v645
        %v784 = vmul.f32 %v781, %v646
        %v785 = vmul.f32 %v781, %v647
        %v786 = vmul.f32 %v781, %v648
        %v787 = vmul.f32 %v781, %v649
        %v788 = vmul.f32 %v781, %v650
        %v789 = vmul.f32 %v781, %v651
        %v790 = vmul.f32 %v781, %v652
        %799 = vrot.lane.b32.xlu0 %v783, 66
        %v800 = vpop.permute.xlu0 %799
        %801 = vrot.lane.b32.xlu0 %v784, 66
        %v802 = vpop.permute.xlu0 %801
        %803 = vrot.lane.b32.xlu0 %v785, 66
        %v804 = vpop.permute.xlu0 %803
        %805 = vrot.lane.b32.xlu0 %v786, 66
        %v806 = vpop.permute.xlu0 %805
        %807 = vrot.lane.b32.xlu0 %v787, 66
        %v808 = vpop.permute.xlu0 %807
        %809 = vrot.lane.b32.xlu0 %v788, 66
        %v810 = vpop.permute.xlu0 %809
        %811 = vrot.lane.b32.xlu0 %v789, 66
        %v812 = vpop.permute.xlu0 %811
        %813 = vrot.lane.b32.xlu0 %v790, 66
        %v814 = vpop.permute.xlu0 %813
        %vm815 = vcmask 539648
        %v816 = vsel %vm815, %v800, %v802
        %v817 = vsel %vm815, %v802, %v804
        %v818 = vsel %vm815, %v804, %v806
        %v819 = vsel %vm815, %v806, %v808
        %v820 = vsel %vm815, %v808, %v810
        %v821 = vsel %vm815, %v810, %v812
        %v822 = vsel %vm815, %v812, %v814
        %v830 = vadd.f32 %v769, %v816
        %v831 = vadd.f32 %v770, %v817
        %v832 = vadd.f32 %v771, %v818
        %v833 = vadd.f32 %v772, %v819
        %v834 = vadd.f32 %v773, %v820
        %v835 = vadd.f32 %v774, %v821
        %v836 = vadd.f32 %v775, %v822
        %v837 = vld [vmem:[%s2] sm:$0xff]
        %839 = vset.pattern.permute.xlu0 0
        %840 = vperm.xlu0 %839, %v837
        %v841 = vpop.permute.xlu0 %840
        %v843 = vadd.f32 %v830, %v841
        %v844 = vadd.f32 %v831, %v841
        %v845 = vadd.f32 %v832, %v841
        %v846 = vadd.f32 %v833, %v841
        %v847 = vadd.f32 %v834, %v841
        %v848 = vadd.f32 %v835, %v841
        %v849 = vadd.f32 %v836, %v841
        %v850 = vmax.f32 %v843, 0.0
        %v851 = vmax.f32 %v844, 0.0
        %v852 = vmax.f32 %v845, 0.0
        %v853 = vmax.f32 %v846, 0.0
        %v854 = vmax.f32 %v847, 0.0
        %v855 = vmax.f32 %v848, 0.0
        %v856 = vmax.f32 %v849, 0.0
        %857 = vst [vmem:[#allocation2] sm:$0xff] %v850
        %858 = vst [vmem:[#allocation2 + $0x8] sm:$0xff] %v851
        %859 = vst [vmem:[#allocation2 + $0x10] sm:$0xff] %v852
        %860 = vst [vmem:[#allocation2 + $0x18] sm:$0xff] %v853
        %861 = vst [vmem:[#allocation2 + $0x20] sm:$0xff] %v854
        %862 = vst [vmem:[#allocation2 + $0x28] sm:$0xff] %v855
        %vm863 = vcmask 572416
        %864 = vst.msk [vmem:[#allocation2 + $0x30] sm:$0xff] %vm863, %v856
        %v865 = vld [vmem:[#allocation2] sm:$0xff]
        %v866 = vld [vmem:[#allocation2 + $0x8] sm:$0xff]
        %v867 = vld [vmem:[#allocation2 + $0x10] sm:$0xff]
        %v868 = vld [vmem:[#allocation2 + $0x18] sm:$0xff]
        %v869 = vld [vmem:[#allocation2 + $0x20] sm:$0xff]
        %v870 = vld [vmem:[#allocation2 + $0x28] sm:$0xff]
        %v871 = vld [vmem:[#allocation2 + $0x30] sm:$0xff]
        %879 = vrot.lane.b32.xlu0 %v865, 127
        %v880 = vpop.permute.xlu0 %879
        %881 = vrot.lane.b32.xlu0 %v866, 127
        %v882 = vpop.permute.xlu0 %881
        %883 = vrot.lane.b32.xlu0 %v867, 127
        %v884 = vpop.permute.xlu0 %883
        %885 = vrot.lane.b32.xlu0 %v868, 127
        %v886 = vpop.permute.xlu0 %885
        %887 = vrot.lane.b32.xlu0 %v869, 127
        %v888 = vpop.permute.xlu0 %887
        %889 = vrot.lane.b32.xlu0 %v870, 127
        %v890 = vpop.permute.xlu0 %889
        %891 = vrot.lane.b32.xlu0 %v871, 127
        %v892 = vpop.permute.xlu0 %891
        %v893 = vsel %vm391, %v880, %v882
        %v894 = vsel %vm391, %v882, %v884
        %v895 = vsel %vm391, %v884, %v886
        %v896 = vsel %vm391, %v886, %v888
        %v897 = vsel %vm391, %v888, %v890
        %v898 = vsel %vm391, %v890, %v892
        %v906 = vmax.f32 %v865, %v893
        %v907 = vmax.f32 %v866, %v894
        %v908 = vmax.f32 %v867, %v895
        %v909 = vmax.f32 %v868, %v896
        %v910 = vmax.f32 %v869, %v897
        %v911 = vmax.f32 %v870, %v898
        %v912 = vmax.f32 %v871, %v892
        %920 = vrot.lane.b32.xlu0 %v906, 98
        %v921 = vpop.permute.xlu0 %920
        %922 = vrot.lane.b32.xlu0 %v907, 98
        %v923 = vpop.permute.xlu0 %922
        %924 = vrot.lane.b32.xlu0 %v908, 98
        %v925 = vpop.permute.xlu0 %924
        %926 = vrot.lane.b32.xlu0 %v909, 98
        %v927 = vpop.permute.xlu0 %926
        %928 = vrot.lane.b32.xlu0 %v910, 98
        %v929 = vpop.permute.xlu0 %928
        %930 = vrot.lane.b32.xlu0 %v911, 98
        %v931 = vpop.permute.xlu0 %930
        %932 = vrot.lane.b32.xlu0 %v912, 98
        %v933 = vpop.permute.xlu0 %932
        %v934 = vsel %vm503, %v921, %v923
        %v935 = vsel %vm503, %v923, %v925
        %v936 = vsel %vm503, %v925, %v927
        %v937 = vsel %vm503, %v927, %v929
        %v938 = vsel %vm503, %v929, %v931
        %v939 = vsel %vm503, %v931, %v933
        %v947 = vmax.f32 %v906, %v934
        %v948 = vmax.f32 %v907, %v935
        %v949 = vmax.f32 %v908, %v936
        %v950 = vmax.f32 %v909, %v937
        %v951 = vmax.f32 %v910, %v938
        %v952 = vmax.f32 %v911, %v939
        %v953 = vmax.f32 %v912, %v933
        %v954 = vld [vmem:[%s5] sm:$0xff]
        %v955 = vld [vmem:[%s5 + $0x8] sm:$0xff]
        %v956 = vld [vmem:[%s5 + $0x10] sm:$0xff]
        %v957 = vld [vmem:[%s5 + $0x18] sm:$0xff]
        %v958 = vld [vmem:[%s5 + $0x20] sm:$0xff]
        %v959 = vld [vmem:[%s5 + $0x28] sm:$0xff]
        %v960 = vld [vmem:[%s5 + $0x30] sm:$0xff]
        %v961 = vld [vmem:[%s5 + $0x38] sm:$0xff]
        %v962 = vld [vmem:[%s5 + $0x40] sm:$0xff]
        %v963 = vld [vmem:[%s5 + $0x48] sm:$0xff]
        %v964 = vld [vmem:[%s5 + $0x50] sm:$0xff]
        %v965 = vld [vmem:[%s5 + $0x58] sm:$0xff]
        %v966 = vld [vmem:[%s5 + $0x60] sm:$0xff]
        %v967 = vld [vmem:[%s5 + $0x68] sm:$0xff]
        %v968 = vld [vmem:[%s5 + $0x70] sm:$0xff]
        %v969 = vld [vmem:[%s5 + $0x78] sm:$0xff]
        %v970 = vld [vmem:[%s5 + $0x80] sm:$0xff]
        %v971 = vld [vmem:[%s5 + $0x88] sm:$0xff]
        %v972 = vld [vmem:[%s5 + $0x90] sm:$0xff]
        %v973 = vld [vmem:[%s5 + $0x98] sm:$0xff]
        %v974 = vld [vmem:[%s5 + $0xa0] sm:$0xff]
        %v975 = vld [vmem:[%s5 + $0xa8] sm:$0xff]
        %v976 = vld [vmem:[%s5 + $0xb0] sm:$0xff]
        %v977 = vld [vmem:[%s5 + $0xb8] sm:$0xff]
        %v978 = vld [vmem:[%s5 + $0xc0] sm:$0xff]
        %v979 = vld [vmem:[%s5 + $0xc8] sm:$0xff]
        %v980 = vld [vmem:[%s5 + $0xd0] sm:$0xff]
        %v981 = vld [vmem:[%s5 + $0xd8] sm:$0xff]
        %v982 = vld [vmem:[%s5 + $0xe0] sm:$0xff]
        %v983 = vld [vmem:[%s5 + $0xe8] sm:$0xff]
        %v984 = vld [vmem:[%s5 + $0xf0] sm:$0xff]
        %v985 = vld [vmem:[%s5 + $0xf8] sm:$0xff]
        %v986 = vld [vmem:[%s5 + $0x100] sm:$0xff]
        %v987 = vld [vmem:[%s5 + $0x108] sm:$0xff]
        %v988 = vld [vmem:[%s5 + $0x110] sm:$0xff]
        %v989 = vld [vmem:[%s5 + $0x118] sm:$0xff]
        %v990 = vld [vmem:[%s5 + $0x120] sm:$0xff]
        %v991 = vld [vmem:[%s5 + $0x128] sm:$0xff]
        %v992 = vld [vmem:[%s5 + $0x130] sm:$0xff]
        %v993 = vld [vmem:[%s5 + $0x138] sm:$0xff]
        %v994 = vld [vmem:[%s5 + $0x140] sm:$0xff]
        %v995 = vld [vmem:[%s5 + $0x148] sm:$0xff]
        %v996 = vld [vmem:[%s5 + $0x150] sm:$0xff]
        %v997 = vld [vmem:[%s5 + $0x158] sm:$0xff]
        %v998 = vld [vmem:[%s5 + $0x160] sm:$0xff]
        %v999 = vld [vmem:[%s5 + $0x168] sm:$0xff]
        %v1000 = vld [vmem:[%s5 + $0x170] sm:$0xff]
        %v1001 = vld [vmem:[%s5 + $0x178] sm:$0xff]
        %v1002 = vld [vmem:[%s5 + $0x180] sm:$0xff]
        %v1003 = vld [vmem:[%s5 + $0x188] sm:$0xff]
        %v1004 = vld [vmem:[%s5 + $0x190] sm:$0xff]
        %v1005 = vld [vmem:[%s5 + $0x198] sm:$0xff]
        %v1006 = vld [vmem:[%s5 + $0x1a0] sm:$0xff]
        %v1007 = vld [vmem:[%s5 + $0x1a8] sm:$0xff]
        %v1008 = vld [vmem:[%s5 + $0x1b0] sm:$0xff]
        %v1009 = vld [vmem:[%s5 + $0x1b8] sm:$0xff]
        %v1010 = vld [vmem:[%s5 + $0x1c0] sm:$0xff]
        %v1011 = vld [vmem:[%s5 + $0x1c8] sm:$0xff]
        %v1012 = vld [vmem:[%s5 + $0x1d0] sm:$0xff]
        %v1013 = vld [vmem:[%s5 + $0x1d8] sm:$0xff]
        %v1014 = vld [vmem:[%s5 + $0x1e0] sm:$0xff]
        %v1015 = vld [vmem:[%s5 + $0x1e8] sm:$0xff]
        %v1016 = vld [vmem:[%s5 + $0x1f0] sm:$0xff]
        %v1017 = vld [vmem:[%s5 + $0x1f8] sm:$0xff]
        %v1018 = vld [vmem:[%s5 + $0x200] sm:$0xff]
        %v1019 = vld [vmem:[%s5 + $0x208] sm:$0xff]
        %v1020 = vld [vmem:[%s5 + $0x210] sm:$0xff]
        %v1021 = vld [vmem:[%s5 + $0x218] sm:$0xff]
        %v1022 = vld [vmem:[%s5 + $0x220] sm:$0xff]
        %v1023 = vld [vmem:[%s5 + $0x228] sm:$0xff]
        %v1024 = vld [vmem:[%s5 + $0x230] sm:$0xff]
        %v1025 = vld [vmem:[%s5 + $0x238] sm:$0xff]
        %v1026 = vld [vmem:[%s5 + $0x240] sm:$0xff]
        %v1027 = vld [vmem:[%s5 + $0x248] sm:$0xff]
        %v1028 = vld [vmem:[%s5 + $0x250] sm:$0xff]
        %v1029 = vld [vmem:[%s5 + $0x258] sm:$0xff]
        %v1030 = vld [vmem:[%s5 + $0x260] sm:$0xff]
        %v1031 = vld [vmem:[%s5 + $0x268] sm:$0xff]
        %v1032 = vld [vmem:[%s5 + $0x270] sm:$0xff]
        %v1033 = vld [vmem:[%s5 + $0x278] sm:$0xff]
        %v1034 = vld [vmem:[%s5 + $0x280] sm:$0xff]
        %v1035 = vld [vmem:[%s5 + $0x288] sm:$0xff]
        %v1036 = vld [vmem:[%s5 + $0x290] sm:$0xff]
        %v1037 = vld [vmem:[%s5 + $0x298] sm:$0xff]
        %v1038 = vld [vmem:[%s5 + $0x2a0] sm:$0xff]
        %v1039 = vld [vmem:[%s5 + $0x2a8] sm:$0xff]
        %v1040 = vld [vmem:[%s5 + $0x2b0] sm:$0xff]
        %v1041 = vld [vmem:[%s5 + $0x2b8] sm:$0xff]
        %v1042 = vld [vmem:[%s5 + $0x2c0] sm:$0xff]
        %v1043 = vld [vmem:[%s5 + $0x2c8] sm:$0xff]
        %v1044 = vld [vmem:[%s5 + $0x2d0] sm:$0xff]
        %v1045 = vld [vmem:[%s5 + $0x2d8] sm:$0xff]
        %v1046 = vld [vmem:[%s5 + $0x2e0] sm:$0xff]
        %v1047 = vld [vmem:[%s5 + $0x2e8] sm:$0xff]
        %v1048 = vld [vmem:[%s5 + $0x2f0] sm:$0xff]
        %v1049 = vld [vmem:[%s5 + $0x2f8] sm:$0xff]
        %v1050 = vld [vmem:[%s5 + $0x300] sm:$0xff]
        %v1051 = vld [vmem:[%s5 + $0x308] sm:$0xff]
        %v1052 = vld [vmem:[%s5 + $0x310] sm:$0xff]
        %v1053 = vld [vmem:[%s5 + $0x318] sm:$0xff]
        %v1054 = vld [vmem:[%s5 + $0x320] sm:$0xff]
        %v1055 = vld [vmem:[%s5 + $0x328] sm:$0xff]
        %v1056 = vld [vmem:[%s5 + $0x330] sm:$0xff]
        %v1057 = vld [vmem:[%s5 + $0x338] sm:$0xff]
        %v1058 = vld [vmem:[%s5 + $0x340] sm:$0xff]
        %v1059 = vld [vmem:[%s5 + $0x348] sm:$0xff]
        %v1060 = vld [vmem:[%s5 + $0x350] sm:$0xff]
        %v1061 = vld [vmem:[%s5 + $0x358] sm:$0xff]
        %v1062 = vld [vmem:[%s5 + $0x360] sm:$0xff]
        %v1063 = vld [vmem:[%s5 + $0x368] sm:$0xff]
        %v1064 = vld [vmem:[%s5 + $0x370] sm:$0xff]
        %v1065 = vld [vmem:[%s5 + $0x378] sm:$0xff]
        %v1066 = vld [vmem:[%s5 + $0x380] sm:$0xff]
        %v1067 = vld [vmem:[%s5 + $0x388] sm:$0xff]
        %v1068 = vld [vmem:[%s5 + $0x390] sm:$0xff]
        %v1069 = vld [vmem:[%s5 + $0x398] sm:$0xff]
        %v1070 = vld [vmem:[%s5 + $0x3a0] sm:$0xff]
        %v1071 = vld [vmem:[%s5 + $0x3a8] sm:$0xff]
        %v1072 = vld [vmem:[%s5 + $0x3b0] sm:$0xff]
        %v1073 = vld [vmem:[%s5 + $0x3b8] sm:$0xff]
        %v1074 = vld [vmem:[%s5 + $0x3c0] sm:$0xff]
        %v1075 = vld [vmem:[%s5 + $0x3c8] sm:$0xff]
        %v1076 = vld [vmem:[%s5 + $0x3d0] sm:$0xff]
        %v1077 = vld [vmem:[%s5 + $0x3d8] sm:$0xff]
        %v1078 = vld [vmem:[%s5 + $0x3e0] sm:$0xff]
        %v1079 = vld [vmem:[%s5 + $0x3e8] sm:$0xff]
        %v1080 = vld [vmem:[%s5 + $0x3f0] sm:$0xff]
        %v1081 = vld [vmem:[%s5 + $0x3f8] sm:$0xff]
        %v1082 = vld [vmem:[%s5 + $0x400] sm:$0xff]
        %v1083 = vld [vmem:[%s5 + $0x408] sm:$0xff]
        %v1084 = vld [vmem:[%s5 + $0x410] sm:$0xff]
        %v1085 = vld [vmem:[%s5 + $0x418] sm:$0xff]
        %v1086 = vld [vmem:[%s5 + $0x420] sm:$0xff]
        %v1087 = vld [vmem:[%s5 + $0x428] sm:$0xff]
        %v1088 = vld [vmem:[%s5 + $0x430] sm:$0xff]
        %v1089 = vld [vmem:[%s5 + $0x438] sm:$0xff]
        %v1090 = vld [vmem:[%s5 + $0x440] sm:$0xff]
        %v1091 = vld [vmem:[%s5 + $0x448] sm:$0xff]
        %v1092 = vld [vmem:[%s5 + $0x450] sm:$0xff]
        %v1093 = vld [vmem:[%s5 + $0x458] sm:$0xff]
        %v1094 = vld [vmem:[%s5 + $0x460] sm:$0xff]
        %v1095 = vld [vmem:[%s5 + $0x468] sm:$0xff]
        %v1096 = vld [vmem:[%s5 + $0x470] sm:$0xff]
        %v1097 = vld [vmem:[%s5 + $0x478] sm:$0xff]
        %v1098 = vld [vmem:[%s5 + $0x480] sm:$0xff]
        %v1099 = vld [vmem:[%s5 + $0x488] sm:$0xff]
        %v1100 = vld [vmem:[%s5 + $0x490] sm:$0xff]
        %v1101 = vld [vmem:[%s5 + $0x498] sm:$0xff]
        %v1102 = vld [vmem:[%s5 + $0x4a0] sm:$0xff]
        %v1103 = vld [vmem:[%s5 + $0x4a8] sm:$0xff]
        %v1104 = vld [vmem:[%s5 + $0x4b0] sm:$0xff]
        %v1105 = vld [vmem:[%s5 + $0x4b8] sm:$0xff]
        %v1106 = vld [vmem:[%s5 + $0x4c0] sm:$0xff]
        %v1107 = vld [vmem:[%s5 + $0x4c8] sm:$0xff]
        %v1108 = vld [vmem:[%s5 + $0x4d0] sm:$0xff]
        %v1109 = vld [vmem:[%s5 + $0x4d8] sm:$0xff]
        %v1110 = vld [vmem:[%s5 + $0x4e0] sm:$0xff]
        %v1111 = vld [vmem:[%s5 + $0x4e8] sm:$0xff]
        %v1112 = vld [vmem:[%s5 + $0x4f0] sm:$0xff]
        %v1113 = vld [vmem:[%s5 + $0x4f8] sm:$0xff]
        %v1114 = vld [vmem:[%s5 + $0x500] sm:$0xff]
        %v1115 = vld [vmem:[%s5 + $0x508] sm:$0xff]
        %v1116 = vld [vmem:[%s5 + $0x510] sm:$0xff]
        %v1117 = vld [vmem:[%s5 + $0x518] sm:$0xff]
        %v1118 = vld [vmem:[%s5 + $0x520] sm:$0xff]
        %v1119 = vld [vmem:[%s5 + $0x528] sm:$0xff]
        %v1120 = vld [vmem:[%s5 + $0x530] sm:$0xff]
        %v1121 = vld [vmem:[%s5 + $0x538] sm:$0xff]
        %v1122 = vld [vmem:[%s5 + $0x540] sm:$0xff]
        %v1123 = vld [vmem:[%s5 + $0x548] sm:$0xff]
        %v1124 = vld [vmem:[%s5 + $0x550] sm:$0xff]
        %v1125 = vld [vmem:[%s5 + $0x558] sm:$0xff]
        %v1126 = vld [vmem:[%s5 + $0x560] sm:$0xff]
        %v1127 = vld [vmem:[%s5 + $0x568] sm:$0xff]
        %v1128 = vld [vmem:[%s5 + $0x570] sm:$0xff]
        %v1129 = vld [vmem:[%s5 + $0x578] sm:$0xff]
        %v1130 = vld [vmem:[%s5 + $0x580] sm:$0xff]
        %v1131 = vld [vmem:[%s5 + $0x588] sm:$0xff]
        %v1132 = vld [vmem:[%s5 + $0x590] sm:$0xff]
        %v1133 = vld [vmem:[%s5 + $0x598] sm:$0xff]
        %v1134 = vld [vmem:[%s5 + $0x5a0] sm:$0xff]
        %v1135 = vld [vmem:[%s5 + $0x5a8] sm:$0xff]
        %v1136 = vld [vmem:[%s5 + $0x5b0] sm:$0xff]
        %v1137 = vld [vmem:[%s5 + $0x5b8] sm:$0xff]
        %v1138 = vld [vmem:[%s5 + $0x5c0] sm:$0xff]
        %v1139 = vld [vmem:[%s5 + $0x5c8] sm:$0xff]
        %v1140 = vld [vmem:[%s5 + $0x5d0] sm:$0xff]
        %v1141 = vld [vmem:[%s5 + $0x5d8] sm:$0xff]
        %v1142 = vld [vmem:[%s5 + $0x5e0] sm:$0xff]
        %v1143 = vld [vmem:[%s5 + $0x5e8] sm:$0xff]
        %v1144 = vld [vmem:[%s5 + $0x5f0] sm:$0xff]
        %v1145 = vld [vmem:[%s5 + $0x5f8] sm:$0xff]
        %v1146 = vld [vmem:[%s5 + $0x600] sm:$0xff]
        %v1147 = vld [vmem:[%s5 + $0x608] sm:$0xff]
        %v1148 = vld [vmem:[%s5 + $0x610] sm:$0xff]
        %v1149 = vld [vmem:[%s5 + $0x618] sm:$0xff]
        %v1150 = vld [vmem:[%s5 + $0x620] sm:$0xff]
        %v1151 = vld [vmem:[%s5 + $0x628] sm:$0xff]
        %v1152 = vld [vmem:[%s5 + $0x630] sm:$0xff]
        %v1153 = vld [vmem:[%s5 + $0x638] sm:$0xff]
        %v1154 = vld [vmem:[%s5 + $0x640] sm:$0x7f]
        %v1155 = vld [vmem:[%s5 + $0x648] sm:$0x7f]
        %vm1156 = vcmask 318464
        %v1158 = vsel %vm1156, %v953, 0
        %vm1160 = vcmask 1046528
        %v1162 = vsel %vm1160, %v1154, 0
        %v1165 = vsel %vm1160, %v1155, 0
        %1167 = vmatpush.msra.mxu0 %v984
        %1168 = vmatpush.msra.mxu0 %v982
        %1169 = vmatpush.msra.mxu0 %v980
        %1170 = vmatpush.msra.mxu0 %v978
        %1171 = vmatpush.msra.mxu0 %v976
        %1172 = vmatpush.msra.mxu0 %v974
        %1173 = vmatpush.msra.mxu0 %v972
        %1174 = vmatpush.msra.mxu0 %v970
        %1175 = vmatpush.msra.mxu0 %v968
        %1176 = vmatpush.msra.mxu0 %v966
        %1177 = vmatpush.msra.mxu0 %v964
        %1178 = vmatpush.msra.mxu0 %v962
        %1179 = vmatpush.msra.mxu0 %v960
        %1180 = vmatpush.msra.mxu0 %v958
        %1181 = vmatpush.msra.mxu0 %v956
        %1182 = vmatpush.msra.mxu0 %v954
        %1183 = vmatmul.f32.gmra.mxu0 %v947
        %v1184 = vpop.f32.mrf.mxu0
        %v1185 = vadd.f32 0.0, %v1184
        %1186 = vdwg.mxu0
        %1187 = vmatpush.msra.mxu0 %v1016
        %1188 = vmatpush.msra.mxu0 %v1014
        %1189 = vmatpush.msra.mxu0 %v1012
        %1190 = vmatpush.msra.mxu0 %v1010
        %1191 = vmatpush.msra.mxu0 %v1008
        %1192 = vmatpush.msra.mxu0 %v1006
        %1193 = vmatpush.msra.mxu0 %v1004
        %1194 = vmatpush.msra.mxu0 %v1002
        %1195 = vmatpush.msra.mxu0 %v1000
        %1196 = vmatpush.msra.mxu0 %v998
        %1197 = vmatpush.msra.mxu0 %v996
        %1198 = vmatpush.msra.mxu0 %v994
        %1199 = vmatpush.msra.mxu0 %v992
        %1200 = vmatpush.msra.mxu0 %v990
        %1201 = vmatpush.msra.mxu0 %v988
        %1202 = vmatpush.msra.mxu0 %v986
        %1203 = vmatmul.f32.gmra.mxu0 %v948
        %v1204 = vpop.f32.mrf.mxu0
        %v1205 = vadd.f32 %v1185, %v1204
        %1206 = vdwg.mxu0
        %1207 = vmatpush.msra.mxu0 %v1048
        %1208 = vmatpush.msra.mxu0 %v1046
        %1209 = vmatpush.msra.mxu0 %v1044
        %1210 = vmatpush.msra.mxu0 %v1042
        %1211 = vmatpush.msra.mxu0 %v1040
        %1212 = vmatpush.msra.mxu0 %v1038
        %1213 = vmatpush.msra.mxu0 %v1036
        %1214 = vmatpush.msra.mxu0 %v1034
        %1215 = vmatpush.msra.mxu0 %v1032
        %1216 = vmatpush.msra.mxu0 %v1030
        %1217 = vmatpush.msra.mxu0 %v1028
        %1218 = vmatpush.msra.mxu0 %v1026
        %1219 = vmatpush.msra.mxu0 %v1024
        %1220 = vmatpush.msra.mxu0 %v1022
        %1221 = vmatpush.msra.mxu0 %v1020
        %1222 = vmatpush.msra.mxu0 %v1018
        %1223 = vmatmul.f32.gmra.mxu0 %v949
        %v1224 = vpop.f32.mrf.mxu0
        %v1225 = vadd.f32 %v1205, %v1224
        %1226 = vdwg.mxu0
        %1227 = vmatpush.msra.mxu0 %v1080
        %1228 = vmatpush.msra.mxu0 %v1078
        %1229 = vmatpush.msra.mxu0 %v1076
        %1230 = vmatpush.msra.mxu0 %v1074
        %1231 = vmatpush.msra.mxu0 %v1072
        %1232 = vmatpush.msra.mxu0 %v1070
        %1233 = vmatpush.msra.mxu0 %v1068
        %1234 = vmatpush.msra.mxu0 %v1066
        %1235 = vmatpush.msra.mxu0 %v1064
        %1236 = vmatpush.msra.mxu0 %v1062
        %1237 = vmatpush.msra.mxu0 %v1060
        %1238 = vmatpush.msra.mxu0 %v1058
        %1239 = vmatpush.msra.mxu0 %v1056
        %1240 = vmatpush.msra.mxu0 %v1054
        %1241 = vmatpush.msra.mxu0 %v1052
        %1242 = vmatpush.msra.mxu0 %v1050
        %1243 = vmatmul.f32.gmra.mxu0 %v950
        %v1244 = vpop.f32.mrf.mxu0
        %v1245 = vadd.f32 %v1225, %v1244
        %1246 = vdwg.mxu0
        %1247 = vmatpush.msra.mxu0 %v1112
        %1248 = vmatpush.msra.mxu0 %v1110
        %1249 = vmatpush.msra.mxu0 %v1108
        %1250 = vmatpush.msra.mxu0 %v1106
        %1251 = vmatpush.msra.mxu0 %v1104
        %1252 = vmatpush.msra.mxu0 %v1102
        %1253 = vmatpush.msra.mxu0 %v1100
        %1254 = vmatpush.msra.mxu0 %v1098
        %1255 = vmatpush.msra.mxu0 %v1096
        %1256 = vmatpush.msra.mxu0 %v1094
        %1257 = vmatpush.msra.mxu0 %v1092
        %1258 = vmatpush.msra.mxu0 %v1090
        %1259 = vmatpush.msra.mxu0 %v1088
        %1260 = vmatpush.msra.mxu0 %v1086
        %1261 = vmatpush.msra.mxu0 %v1084
        %1262 = vmatpush.msra.mxu0 %v1082
        %1263 = vmatmul.f32.gmra.mxu0 %v951
        %v1264 = vpop.f32.mrf.mxu0
        %v1265 = vadd.f32 %v1245, %v1264
        %1266 = vdwg.mxu0
        %1267 = vmatpush.msra.mxu0 %v1144
        %1268 = vmatpush.msra.mxu0 %v1142
        %1269 = vmatpush.msra.mxu0 %v1140
        %1270 = vmatpush.msra.mxu0 %v1138
        %1271 = vmatpush.msra.mxu0 %v1136
        %1272 = vmatpush.msra.mxu0 %v1134
        %1273 = vmatpush.msra.mxu0 %v1132
        %1274 = vmatpush.msra.mxu0 %v1130
        %1275 = vmatpush.msra.mxu0 %v1128
        %1276 = vmatpush.msra.mxu0 %v1126
        %1277 = vmatpush.msra.mxu0 %v1124
        %1278 = vmatpush.msra.mxu0 %v1122
        %1279 = vmatpush.msra.mxu0 %v1120
        %1280 = vmatpush.msra.mxu0 %v1118
        %1281 = vmatpush.msra.mxu0 %v1116
        %1282 = vmatpush.msra.mxu0 %v1114
        %1283 = vmatmul.f32.gmra.mxu0 %v952
        %v1284 = vpop.f32.mrf.mxu0
        %v1285 = vadd.f32 %v1265, %v1284
        %1286 = vdwg.mxu0
        %1287 = vmatpush.msra.mxu0 0.0
        %1288 = vmatpush.msra.mxu0 0.0
        %1289 = vmatpush.msra.mxu0 0.0
        %1290 = vmatpush.msra.mxu0 0.0
        %1291 = vmatpush.msra.mxu0 0.0
        %1292 = vmatpush.msra.mxu0 0.0
        %1293 = vmatpush.msra.mxu0 0.0
        %1294 = vmatpush.msra.mxu0 0.0
        %1295 = vmatpush.msra.mxu0 0.0
        %1296 = vmatpush.msra.mxu0 0.0
        %1297 = vmatpush.msra.mxu0 0.0
        %1298 = vmatpush.msra.mxu0 %v1162
        %1299 = vmatpush.msra.mxu0 %v1152
        %1300 = vmatpush.msra.mxu0 %v1150
        %1301 = vmatpush.msra.mxu0 %v1148
        %1302 = vmatpush.msra.mxu0 %v1146
        %1303 = vmatmul.f32.gmra.mxu0 %v1158
        %v1304 = vpop.f32.mrf.mxu0
        %v1305 = vadd.f32 %v1285, %v1304
        %1306 = vdwg.mxu0
        %1307 = vmatpush.msra.mxu0 %v985
        %1308 = vmatpush.msra.mxu0 %v983
        %1309 = vmatpush.msra.mxu0 %v981
        %1310 = vmatpush.msra.mxu0 %v979
        %1311 = vmatpush.msra.mxu0 %v977
        %1312 = vmatpush.msra.mxu0 %v975
        %1313 = vmatpush.msra.mxu0 %v973
        %1314 = vmatpush.msra.mxu0 %v971
        %1315 = vmatpush.msra.mxu0 %v969
        %1316 = vmatpush.msra.mxu0 %v967
        %1317 = vmatpush.msra.mxu0 %v965
        %1318 = vmatpush.msra.mxu0 %v963
        %1319 = vmatpush.msra.mxu0 %v961
        %1320 = vmatpush.msra.mxu0 %v959
        %1321 = vmatpush.msra.mxu0 %v957
        %1322 = vmatpush.msra.mxu0 %v955
        %1323 = vmatmul.f32.gmra.mxu0 %v947
        %v1324 = vpop.f32.mrf.mxu0
        %v1325 = vadd.f32 0.0, %v1324
        %1326 = vdwg.mxu0
        %1327 = vmatpush.msra.mxu0 %v1017
        %1328 = vmatpush.msra.mxu0 %v1015
        %1329 = vmatpush.msra.mxu0 %v1013
        %1330 = vmatpush.msra.mxu0 %v1011
        %1331 = vmatpush.msra.mxu0 %v1009
        %1332 = vmatpush.msra.mxu0 %v1007
        %1333 = vmatpush.msra.mxu0 %v1005
        %1334 = vmatpush.msra.mxu0 %v1003
        %1335 = vmatpush.msra.mxu0 %v1001
        %1336 = vmatpush.msra.mxu0 %v999
        %1337 = vmatpush.msra.mxu0 %v997
        %1338 = vmatpush.msra.mxu0 %v995
        %1339 = vmatpush.msra.mxu0 %v993
        %1340 = vmatpush.msra.mxu0 %v991
        %1341 = vmatpush.msra.mxu0 %v989
        %1342 = vmatpush.msra.mxu0 %v987
        %1343 = vmatmul.f32.gmra.mxu0 %v948
        %v1344 = vpop.f32.mrf.mxu0
        %v1345 = vadd.f32 %v1325, %v1344
        %1346 = vdwg.mxu0
        %1347 = vmatpush.msra.mxu0 %v1049
        %1348 = vmatpush.msra.mxu0 %v1047
        %1349 = vmatpush.msra.mxu0 %v1045
        %1350 = vmatpush.msra.mxu0 %v1043
        %1351 = vmatpush.msra.mxu0 %v1041
        %1352 = vmatpush.msra.mxu0 %v1039
        %1353 = vmatpush.msra.mxu0 %v1037
        %1354 = vmatpush.msra.mxu0 %v1035
        %1355 = vmatpush.msra.mxu0 %v1033
        %1356 = vmatpush.msra.mxu0 %v1031
        %1357 = vmatpush.msra.mxu0 %v1029
        %1358 = vmatpush.msra.mxu0 %v1027
        %1359 = vmatpush.msra.mxu0 %v1025
        %1360 = vmatpush.msra.mxu0 %v1023
        %1361 = vmatpush.msra.mxu0 %v1021
        %1362 = vmatpush.msra.mxu0 %v1019
        %1363 = vmatmul.f32.gmra.mxu0 %v949
        %v1364 = vpop.f32.mrf.mxu0
        %v1365 = vadd.f32 %v1345, %v1364
        %1366 = vdwg.mxu0
        %1367 = vmatpush.msra.mxu0 %v1081
        %1368 = vmatpush.msra.mxu0 %v1079
        %1369 = vmatpush.msra.mxu0 %v1077
        %1370 = vmatpush.msra.mxu0 %v1075
        %1371 = vmatpush.msra.mxu0 %v1073
        %1372 = vmatpush.msra.mxu0 %v1071
        %1373 = vmatpush.msra.mxu0 %v1069
        %1374 = vmatpush.msra.mxu0 %v1067
        %1375 = vmatpush.msra.mxu0 %v1065
        %1376 = vmatpush.msra.mxu0 %v1063
        %1377 = vmatpush.msra.mxu0 %v1061
        %1378 = vmatpush.msra.mxu0 %v1059
        %1379 = vmatpush.msra.mxu0 %v1057
        %1380 = vmatpush.msra.mxu0 %v1055
        %1381 = vmatpush.msra.mxu0 %v1053
        %1382 = vmatpush.msra.mxu0 %v1051
        %1383 = vmatmul.f32.gmra.mxu0 %v950
        %v1384 = vpop.f32.mrf.mxu0
        %v1385 = vadd.f32 %v1365, %v1384
        %1386 = vdwg.mxu0
        %1387 = vmatpush.msra.mxu0 %v1113
        %1388 = vmatpush.msra.mxu0 %v1111
        %1389 = vmatpush.msra.mxu0 %v1109
        %1390 = vmatpush.msra.mxu0 %v1107
        %1391 = vmatpush.msra.mxu0 %v1105
        %1392 = vmatpush.msra.mxu0 %v1103
        %1393 = vmatpush.msra.mxu0 %v1101
        %1394 = vmatpush.msra.mxu0 %v1099
        %1395 = vmatpush.msra.mxu0 %v1097
        %1396 = vmatpush.msra.mxu0 %v1095
        %1397 = vmatpush.msra.mxu0 %v1093
        %1398 = vmatpush.msra.mxu0 %v1091
        %1399 = vmatpush.msra.mxu0 %v1089
        %1400 = vmatpush.msra.mxu0 %v1087
        %1401 = vmatpush.msra.mxu0 %v1085
        %1402 = vmatpush.msra.mxu0 %v1083
        %1403 = vmatmul.f32.gmra.mxu0 %v951
        %v1404 = vpop.f32.mrf.mxu0
        %v1405 = vadd.f32 %v1385, %v1404
        %1406 = vdwg.mxu0
        %1407 = vmatpush.msra.mxu0 %v1145
        %1408 = vmatpush.msra.mxu0 %v1143
        %1409 = vmatpush.msra.mxu0 %v1141
        %1410 = vmatpush.msra.mxu0 %v1139
        %1411 = vmatpush.msra.mxu0 %v1137
        %1412 = vmatpush.msra.mxu0 %v1135
        %1413 = vmatpush.msra.mxu0 %v1133
        %1414 = vmatpush.msra.mxu0 %v1131
        %1415 = vmatpush.msra.mxu0 %v1129
        %1416 = vmatpush.msra.mxu0 %v1127
        %1417 = vmatpush.msra.mxu0 %v1125
        %1418 = vmatpush.msra.mxu0 %v1123
        %1419 = vmatpush.msra.mxu0 %v1121
        %1420 = vmatpush.msra.mxu0 %v1119
        %1421 = vmatpush.msra.mxu0 %v1117
        %1422 = vmatpush.msra.mxu0 %v1115
        %1423 = vmatmul.f32.gmra.mxu0 %v952
        %v1424 = vpop.f32.mrf.mxu0
        %v1425 = vadd.f32 %v1405, %v1424
        %1426 = vdwg.mxu0
        %1427 = vmatpush.msra.mxu0 0.0
        %1428 = vmatpush.msra.mxu0 0.0
        %1429 = vmatpush.msra.mxu0 0.0
        %1430 = vmatpush.msra.mxu0 0.0
        %1431 = vmatpush.msra.mxu0 0.0
        %1432 = vmatpush.msra.mxu0 0.0
        %1433 = vmatpush.msra.mxu0 0.0
        %1434 = vmatpush.msra.mxu0 0.0
        %1435 = vmatpush.msra.mxu0 0.0
        %1436 = vmatpush.msra.mxu0 0.0
        %1437 = vmatpush.msra.mxu0 0.0
        %1438 = vmatpush.msra.mxu0 %v1165
        %1439 = vmatpush.msra.mxu0 %v1153
        %1440 = vmatpush.msra.mxu0 %v1151
        %1441 = vmatpush.msra.mxu0 %v1149
        %1442 = vmatpush.msra.mxu0 %v1147
        %1443 = vmatmul.f32.gmra.mxu0 %v1158
        %v1444 = vpop.f32.mrf.mxu0
        %v1445 = vadd.f32 %v1425, %v1444
        %1446 = vdwg.mxu0
        %1447 = vst [vmem:[#allocation3] sm:$0xff] %v1305
        %1448 = vst [vmem:[#allocation3 + $0x8] sm:$0xff] %v1445
        %v1449 = vld [vmem:[%s3] sm:$0xff]
        %v1450 = vld [vmem:[%s3 + $0x8] sm:$0xff]
        %v1451 = vld [vmem:[#allocation3] sm:$0xff]
        %v1452 = vld [vmem:[#allocation3 + $0x8] sm:$0xff]
        %s1453 = scalar_lea.vmem %s3, 16
        %v1454 = vld [vmem:[%s1453] sm:$0xff]
        %v1455 = vld [vmem:[%s1453 + $0x8] sm:$0xff]
        %1458 = vrot.lane.b32.xlu0 %v1451, 127
        %v1459 = vpop.permute.xlu0 %1458
        %1460 = vrot.lane.b32.xlu0 %v1452, 127
        %v1461 = vpop.permute.xlu0 %1460
        %v1462 = vsel %vm391, %v1459, %v1461
        %vm1465 = vcmask 64512
        %v1467 = vsel %vm1465, %v1454, 0
        %v1470 = vsel %vm1465, %v1455, 0
        %1472 = vmatpush.msra.mxu0 0.0
        %1473 = vmatpush.msra.mxu0 0.0
        %1474 = vmatpush.msra.mxu0 0.0
        %1475 = vmatpush.msra.mxu0 0.0
        %1476 = vmatpush.msra.mxu0 0.0
        %1477 = vmatpush.msra.mxu0 0.0
        %1478 = vmatpush.msra.mxu0 0.0
        %1479 = vmatpush.msra.mxu0 0.0
        %1480 = vmatpush.msra.mxu0 0.0
        %1481 = vmatpush.msra.mxu0 0.0
        %1482 = vmatpush.msra.mxu0 0.0
        %1483 = vmatpush.msra.mxu0 0.0
        %1484 = vmatpush.msra.mxu0 0.0
        %1485 = vmatpush.msra.mxu0 0.0
        %1486 = vmatpush.msra.mxu0 0.0
        %1487 = vmatpush.msra.mxu0 %v1462
        %1488 = vmatmul.f32.gmra.mxu0 %v1467
        %v1489 = vpop.f32.mrf.mxu0
        %v1490 = vadd.f32 0.0, %v1489
        %1491 = vmatmul.f32.gmra.mxu0 %v1470
        %v1492 = vpop.f32.mrf.mxu0
        %v1493 = vadd.f32 0.0, %v1492
        %1494 = vdwg.mxu0
        %1495 = vmatpush.msra.mxu0 0.0
        %1496 = vmatpush.msra.mxu0 0.0
        %1497 = vmatpush.msra.mxu0 0.0
        %1498 = vmatpush.msra.mxu0 0.0
        %1499 = vmatpush.msra.mxu0 0.0
        %1500 = vmatpush.msra.mxu0 0.0
        %1501 = vmatpush.msra.mxu0 0.0
        %1502 = vmatpush.msra.mxu0 0.0
        %1503 = vmatpush.msra.mxu0 0.0
        %1504 = vmatpush.msra.mxu0 0.0
        %1505 = vmatpush.msra.mxu0 0.0
        %1506 = vmatpush.msra.mxu0 0.0
        %1507 = vmatpush.msra.mxu0 0.0
        %1508 = vmatpush.msra.mxu0 0.0
        %1509 = vmatpush.msra.mxu0 0.0
        %1510 = vmatpush.msra.mxu0 %v1461
        %1511 = vmatmul.f32.gmra.mxu0 %v1467
        %v1512 = vpop.f32.mrf.mxu0
        %v1513 = vadd.f32 0.0, %v1512
        %1514 = vmatmul.f32.gmra.mxu0 %v1470
        %v1515 = vpop.f32.mrf.mxu0
        %v1516 = vadd.f32 0.0, %v1515
        %1517 = vdwg.mxu0
        %v1519 = vsel %vm1465, %v1449, 0
        %v1522 = vsel %vm1465, %v1450, 0
        %1524 = vmatpush.msra.mxu0 0.0
        %1525 = vmatpush.msra.mxu0 0.0
        %1526 = vmatpush.msra.mxu0 0.0
        %1527 = vmatpush.msra.mxu0 0.0
        %1528 = vmatpush.msra.mxu0 0.0
        %1529 = vmatpush.msra.mxu0 0.0
        %1530 = vmatpush.msra.mxu0 0.0
        %1531 = vmatpush.msra.mxu0 0.0
        %1532 = vmatpush.msra.mxu0 0.0
        %1533 = vmatpush.msra.mxu0 0.0
        %1534 = vmatpush.msra.mxu0 0.0
        %1535 = vmatpush.msra.mxu0 0.0
        %1536 = vmatpush.msra.mxu0 0.0
        %1537 = vmatpush.msra.mxu0 0.0
        %1538 = vmatpush.msra.mxu0 0.0
        %1539 = vmatpush.msra.mxu0 %v1451
        %1540 = vmatmul.f32.gmra.mxu0 %v1519
        %v1541 = vpop.f32.mrf.mxu0
        %v1542 = vadd.f32 %v1490, %v1541
        %1543 = vmatmul.f32.gmra.mxu0 %v1522
        %v1544 = vpop.f32.mrf.mxu0
        %v1545 = vadd.f32 %v1493, %v1544
        %1546 = vdwg.mxu0
        %1547 = vmatpush.msra.mxu0 0.0
        %1548 = vmatpush.msra.mxu0 0.0
        %1549 = vmatpush.msra.mxu0 0.0
        %1550 = vmatpush.msra.mxu0 0.0
        %1551 = vmatpush.msra.mxu0 0.0
        %1552 = vmatpush.msra.mxu0 0.0
        %1553 = vmatpush.msra.mxu0 0.0
        %1554 = vmatpush.msra.mxu0 0.0
        %1555 = vmatpush.msra.mxu0 0.0
        %1556 = vmatpush.msra.mxu0 0.0
        %1557 = vmatpush.msra.mxu0 0.0
        %1558 = vmatpush.msra.mxu0 0.0
        %1559 = vmatpush.msra.mxu0 0.0
        %1560 = vmatpush.msra.mxu0 0.0
        %1561 = vmatpush.msra.mxu0 0.0
        %1562 = vmatpush.msra.mxu0 %v1452
        %1563 = vmatmul.f32.gmra.mxu0 %v1519
        %v1564 = vpop.f32.mrf.mxu0
        %v1565 = vadd.f32 %v1513, %v1564
        %1566 = vmatmul.f32.gmra.mxu0 %v1522
        %v1567 = vpop.f32.mrf.mxu0
        %v1568 = vadd.f32 %v1516, %v1567
        %1569 = vdwg.mxu0
        %s1570 = scalar_lea.vmem %s3, 32
        %v1571 = vld [vmem:[%s1570] sm:$0xff]
        %v1572 = vld [vmem:[%s1570 + $0x8] sm:$0xff]
        %1573 = vrot.lane.b32.xlu0 %v1451, 126
        %v1574 = vpop.permute.xlu0 %1573
        %1575 = vrot.lane.b32.xlu0 %v1452, 126
        %v1576 = vpop.permute.xlu0 %1575
        %v1577 = vsel %vm447, %v1574, %v1576
        %v1581 = vsel %vm1465, %v1571, 0
        %v1584 = vsel %vm1465, %v1572, 0
        %1586 = vmatpush.msra.mxu0 0.0
        %1587 = vmatpush.msra.mxu0 0.0
        %1588 = vmatpush.msra.mxu0 0.0
        %1589 = vmatpush.msra.mxu0 0.0
        %1590 = vmatpush.msra.mxu0 0.0
        %1591 = vmatpush.msra.mxu0 0.0
        %1592 = vmatpush.msra.mxu0 0.0
        %1593 = vmatpush.msra.mxu0 0.0
        %1594 = vmatpush.msra.mxu0 0.0
        %1595 = vmatpush.msra.mxu0 0.0
        %1596 = vmatpush.msra.mxu0 0.0
        %1597 = vmatpush.msra.mxu0 0.0
        %1598 = vmatpush.msra.mxu0 0.0
        %1599 = vmatpush.msra.mxu0 0.0
        %1600 = vmatpush.msra.mxu0 0.0
        %1601 = vmatpush.msra.mxu0 %v1577
        %1602 = vmatmul.f32.gmra.mxu0 %v1581
        %v1603 = vpop.f32.mrf.mxu0
        %v1604 = vadd.f32 0.0, %v1603
        %1605 = vmatmul.f32.gmra.mxu0 %v1584
        %v1606 = vpop.f32.mrf.mxu0
        %v1607 = vadd.f32 0.0, %v1606
        %1608 = vdwg.mxu0
        %1609 = vmatpush.msra.mxu0 0.0
        %1610 = vmatpush.msra.mxu0 0.0
        %1611 = vmatpush.msra.mxu0 0.0
        %1612 = vmatpush.msra.mxu0 0.0
        %1613 = vmatpush.msra.mxu0 0.0
        %1614 = vmatpush.msra.mxu0 0.0
        %1615 = vmatpush.msra.mxu0 0.0
        %1616 = vmatpush.msra.mxu0 0.0
        %1617 = vmatpush.msra.mxu0 0.0
        %1618 = vmatpush.msra.mxu0 0.0
        %1619 = vmatpush.msra.mxu0 0.0
        %1620 = vmatpush.msra.mxu0 0.0
        %1621 = vmatpush.msra.mxu0 0.0
        %1622 = vmatpush.msra.mxu0 0.0
        %1623 = vmatpush.msra.mxu0 0.0
        %1624 = vmatpush.msra.mxu0 %v1576
        %1625 = vmatmul.f32.gmra.mxu0 %v1581
        %v1626 = vpop.f32.mrf.mxu0
        %v1627 = vadd.f32 0.0, %v1626
        %1628 = vmatmul.f32.gmra.mxu0 %v1584
        %v1629 = vpop.f32.mrf.mxu0
        %v1630 = vadd.f32 0.0, %v1629
        %1631 = vdwg.mxu0
        %v1632 = vadd.f32 %v1542, %v1604
        %v1633 = vadd.f32 %v1565, %v1627
        %v1634 = vadd.f32 %v1545, %v1607
        %v1635 = vadd.f32 %v1568, %v1630
        %s1636 = scalar_lea.vmem %s3, 48
        %v1637 = vld [vmem:[%s1636] sm:$0xff]
        %v1638 = vld [vmem:[%s1636 + $0x8] sm:$0xff]
        %1639 = vrot.lane.b32.xlu0 %v1451, 112
        %v1640 = vpop.permute.xlu0 %1639
        %1641 = vrot.lane.b32.xlu0 %v1452, 112
        %v1642 = vpop.permute.xlu0 %1641
        %vm1643 = vcmask 916480
        %v1644 = vsel %vm1643, %v1640, %v1642
        %v1648 = vsel %vm1465, %v1637, 0
        %v1651 = vsel %vm1465, %v1638, 0
        %1653 = vmatpush.msra.mxu0 0.0
        %1654 = vmatpush.msra.mxu0 0.0
        %1655 = vmatpush.msra.mxu0 0.0
        %1656 = vmatpush.msra.mxu0 0.0
        %1657 = vmatpush.msra.mxu0 0.0
        %1658 = vmatpush.msra.mxu0 0.0
        %1659 = vmatpush.msra.mxu0 0.0
        %1660 = vmatpush.msra.mxu0 0.0
        %1661 = vmatpush.msra.mxu0 0.0
        %1662 = vmatpush.msra.mxu0 0.0
        %1663 = vmatpush.msra.mxu0 0.0
        %1664 = vmatpush.msra.mxu0 0.0
        %1665 = vmatpush.msra.mxu0 0.0
        %1666 = vmatpush.msra.mxu0 0.0
        %1667 = vmatpush.msra.mxu0 0.0
        %1668 = vmatpush.msra.mxu0 %v1644
        %1669 = vmatmul.f32.gmra.mxu0 %v1648
        %v1670 = vpop.f32.mrf.mxu0
        %v1671 = vadd.f32 0.0, %v1670
        %1672 = vmatmul.f32.gmra.mxu0 %v1651
        %v1673 = vpop.f32.mrf.mxu0
        %v1674 = vadd.f32 0.0, %v1673
        %1675 = vdwg.mxu0
        %1676 = vmatpush.msra.mxu0 0.0
        %1677 = vmatpush.msra.mxu0 0.0
        %1678 = vmatpush.msra.mxu0 0.0
        %1679 = vmatpush.msra.mxu0 0.0
        %1680 = vmatpush.msra.mxu0 0.0
        %1681 = vmatpush.msra.mxu0 0.0
        %1682 = vmatpush.msra.mxu0 0.0
        %1683 = vmatpush.msra.mxu0 0.0
        %1684 = vmatpush.msra.mxu0 0.0
        %1685 = vmatpush.msra.mxu0 0.0
        %1686 = vmatpush.msra.mxu0 0.0
        %1687 = vmatpush.msra.mxu0 0.0
        %1688 = vmatpush.msra.mxu0 0.0
        %1689 = vmatpush.msra.mxu0 0.0
        %1690 = vmatpush.msra.mxu0 0.0
        %1691 = vmatpush.msra.mxu0 %v1642
        %1692 = vmatmul.f32.gmra.mxu0 %v1648
        %v1693 = vpop.f32.mrf.mxu0
        %v1694 = vadd.f32 0.0, %v1693
        %1695 = vmatmul.f32.gmra.mxu0 %v1651
        %v1696 = vpop.f32.mrf.mxu0
        %v1697 = vadd.f32 0.0, %v1696
        %1698 = vdwg.mxu0
        %v1699 = vadd.f32 %v1632, %v1671
        %v1700 = vadd.f32 %v1633, %v1694
        %v1701 = vadd.f32 %v1634, %v1674
        %v1702 = vadd.f32 %v1635, %v1697
        %s1703 = scalar_lea.vmem %s3, 64
        %v1704 = vld [vmem:[%s1703] sm:$0xff]
        %v1705 = vld [vmem:[%s1703 + $0x8] sm:$0xff]
        %1706 = vrot.lane.b32.xlu0 %v1451, 111
        %v1707 = vpop.permute.xlu0 %1706
        %1708 = vrot.lane.b32.xlu0 %v1452, 111
        %v1709 = vpop.permute.xlu0 %1708
        %vm1710 = vcmask 908288
        %v1711 = vsel %vm1710, %v1707, %v1709
        %v1715 = vsel %vm1465, %v1704, 0
        %v1718 = vsel %vm1465, %v1705, 0
        %1720 = vmatpush.msra.mxu0 0.0
        %1721 = vmatpush.msra.mxu0 0.0
        %1722 = vmatpush.msra.mxu0 0.0
        %1723 = vmatpush.msra.mxu0 0.0
        %1724 = vmatpush.msra.mxu0 0.0
        %1725 = vmatpush.msra.mxu0 0.0
        %1726 = vmatpush.msra.mxu0 0.0
        %1727 = vmatpush.msra.mxu0 0.0
        %1728 = vmatpush.msra.mxu0 0.0
        %1729 = vmatpush.msra.mxu0 0.0
        %1730 = vmatpush.msra.mxu0 0.0
        %1731 = vmatpush.msra.mxu0 0.0
        %1732 = vmatpush.msra.mxu0 0.0
        %1733 = vmatpush.msra.mxu0 0.0
        %1734 = vmatpush.msra.mxu0 0.0
        %1735 = vmatpush.msra.mxu0 %v1711
        %1736 = vmatmul.f32.gmra.mxu0 %v1715
        %v1737 = vpop.f32.mrf.mxu0
        %v1738 = vadd.f32 0.0, %v1737
        %1739 = vmatmul.f32.gmra.mxu0 %v1718
        %v1740 = vpop.f32.mrf.mxu0
        %v1741 = vadd.f32 0.0, %v1740
        %1742 = vdwg.mxu0
        %1743 = vmatpush.msra.mxu0 0.0
        %1744 = vmatpush.msra.mxu0 0.0
        %1745 = vmatpush.msra.mxu0 0.0
        %1746 = vmatpush.msra.mxu0 0.0
        %1747 = vmatpush.msra.mxu0 0.0
        %1748 = vmatpush.msra.mxu0 0.0
        %1749 = vmatpush.msra.mxu0 0.0
        %1750 = vmatpush.msra.mxu0 0.0
        %1751 = vmatpush.msra.mxu0 0.0
        %1752 = vmatpush.msra.mxu0 0.0
        %1753 = vmatpush.msra.mxu0 0.0
        %1754 = vmatpush.msra.mxu0 0.0
        %1755 = vmatpush.msra.mxu0 0.0
        %1756 = vmatpush.msra.mxu0 0.0
        %1757 = vmatpush.msra.mxu0 0.0
        %1758 = vmatpush.msra.mxu0 %v1709
        %1759 = vmatmul.f32.gmra.mxu0 %v1715
        %v1760 = vpop.f32.mrf.mxu0
        %v1761 = vadd.f32 0.0, %v1760
        %1762 = vmatmul.f32.gmra.mxu0 %v1718
        %v1763 = vpop.f32.mrf.mxu0
        %v1764 = vadd.f32 0.0, %v1763
        %1765 = vdwg.mxu0
        %v1766 = vadd.f32 %v1699, %v1738
        %v1767 = vadd.f32 %v1700, %v1761
        %v1768 = vadd.f32 %v1701, %v1741
        %v1769 = vadd.f32 %v1702, %v1764
        %s1770 = scalar_lea.vmem %s3, 80
        %v1771 = vld [vmem:[%s1770] sm:$0xff]
        %v1772 = vld [vmem:[%s1770 + $0x8] sm:$0xff]
        %1773 = vrot.lane.b32.xlu0 %v1451, 110
        %v1774 = vpop.permute.xlu0 %1773
        %1775 = vrot.lane.b32.xlu0 %v1452, 110
        %v1776 = vpop.permute.xlu0 %1775
        %vm1777 = vcmask 900096
        %v1778 = vsel %vm1777, %v1774, %v1776
        %v1782 = vsel %vm1465, %v1771, 0
        %v1785 = vsel %vm1465, %v1772, 0
        %1787 = vmatpush.msra.mxu0 0.0
        %1788 = vmatpush.msra.mxu0 0.0
        %1789 = vmatpush.msra.mxu0 0.0
        %1790 = vmatpush.msra.mxu0 0.0
        %1791 = vmatpush.msra.mxu0 0.0
        %1792 = vmatpush.msra.mxu0 0.0
        %1793 = vmatpush.msra.mxu0 0.0
        %1794 = vmatpush.msra.mxu0 0.0
        %1795 = vmatpush.msra.mxu0 0.0
        %1796 = vmatpush.msra.mxu0 0.0
        %1797 = vmatpush.msra.mxu0 0.0
        %1798 = vmatpush.msra.mxu0 0.0
        %1799 = vmatpush.msra.mxu0 0.0
        %1800 = vmatpush.msra.mxu0 0.0
        %1801 = vmatpush.msra.mxu0 0.0
        %1802 = vmatpush.msra.mxu0 %v1778
        %1803 = vmatmul.f32.gmra.mxu0 %v1782
        %v1804 = vpop.f32.mrf.mxu0
        %v1805 = vadd.f32 0.0, %v1804
        %1806 = vmatmul.f32.gmra.mxu0 %v1785
        %v1807 = vpop.f32.mrf.mxu0
        %v1808 = vadd.f32 0.0, %v1807
        %1809 = vdwg.mxu0
        %1810 = vmatpush.msra.mxu0 0.0
        %1811 = vmatpush.msra.mxu0 0.0
        %1812 = vmatpush.msra.mxu0 0.0
        %1813 = vmatpush.msra.mxu0 0.0
        %1814 = vmatpush.msra.mxu0 0.0
        %1815 = vmatpush.msra.mxu0 0.0
        %1816 = vmatpush.msra.mxu0 0.0
        %1817 = vmatpush.msra.mxu0 0.0
        %1818 = vmatpush.msra.mxu0 0.0
        %1819 = vmatpush.msra.mxu0 0.0
        %1820 = vmatpush.msra.mxu0 0.0
        %1821 = vmatpush.msra.mxu0 0.0
        %1822 = vmatpush.msra.mxu0 0.0
        %1823 = vmatpush.msra.mxu0 0.0
        %1824 = vmatpush.msra.mxu0 0.0
        %1825 = vmatpush.msra.mxu0 %v1776
        %1826 = vmatmul.f32.gmra.mxu0 %v1782
        %v1827 = vpop.f32.mrf.mxu0
        %v1828 = vadd.f32 0.0, %v1827
        %1829 = vmatmul.f32.gmra.mxu0 %v1785
        %v1830 = vpop.f32.mrf.mxu0
        %v1831 = vadd.f32 0.0, %v1830
        %1832 = vdwg.mxu0
        %v1833 = vadd.f32 %v1766, %v1805
        %v1834 = vadd.f32 %v1767, %v1828
        %v1835 = vadd.f32 %v1768, %v1808
        %v1836 = vadd.f32 %v1769, %v1831
        %s1837 = scalar_lea.vmem %s3, 96
        %v1838 = vld [vmem:[%s1837] sm:$0xff]
        %v1839 = vld [vmem:[%s1837 + $0x8] sm:$0xff]
        %1840 = vrot.lane.b32.xlu0 %v1451, 96
        %v1841 = vpop.permute.xlu0 %1840
        %1842 = vrot.lane.b32.xlu0 %v1452, 96
        %v1843 = vpop.permute.xlu0 %1842
        %v1844 = vsel %vm615, %v1841, %v1843
        %v1848 = vsel %vm1465, %v1838, 0
        %v1851 = vsel %vm1465, %v1839, 0
        %1853 = vmatpush.msra.mxu0 0.0
        %1854 = vmatpush.msra.mxu0 0.0
        %1855 = vmatpush.msra.mxu0 0.0
        %1856 = vmatpush.msra.mxu0 0.0
        %1857 = vmatpush.msra.mxu0 0.0
        %1858 = vmatpush.msra.mxu0 0.0
        %1859 = vmatpush.msra.mxu0 0.0
        %1860 = vmatpush.msra.mxu0 0.0
        %1861 = vmatpush.msra.mxu0 0.0
        %1862 = vmatpush.msra.mxu0 0.0
        %1863 = vmatpush.msra.mxu0 0.0
        %1864 = vmatpush.msra.mxu0 0.0
        %1865 = vmatpush.msra.mxu0 0.0
        %1866 = vmatpush.msra.mxu0 0.0
        %1867 = vmatpush.msra.mxu0 0.0
        %1868 = vmatpush.msra.mxu0 %v1844
        %1869 = vmatmul.f32.gmra.mxu0 %v1848
        %v1870 = vpop.f32.mrf.mxu0
        %v1871 = vadd.f32 0.0, %v1870
        %1872 = vmatmul.f32.gmra.mxu0 %v1851
        %v1873 = vpop.f32.mrf.mxu0
        %v1874 = vadd.f32 0.0, %v1873
        %1875 = vdwg.mxu0
        %1876 = vmatpush.msra.mxu0 0.0
        %1877 = vmatpush.msra.mxu0 0.0
        %1878 = vmatpush.msra.mxu0 0.0
        %1879 = vmatpush.msra.mxu0 0.0
        %1880 = vmatpush.msra.mxu0 0.0
        %1881 = vmatpush.msra.mxu0 0.0
        %1882 = vmatpush.msra.mxu0 0.0
        %1883 = vmatpush.msra.mxu0 0.0
        %1884 = vmatpush.msra.mxu0 0.0
        %1885 = vmatpush.msra.mxu0 0.0
        %1886 = vmatpush.msra.mxu0 0.0
        %1887 = vmatpush.msra.mxu0 0.0
        %1888 = vmatpush.msra.mxu0 0.0
        %1889 = vmatpush.msra.mxu0 0.0
        %1890 = vmatpush.msra.mxu0 0.0
        %1891 = vmatpush.msra.mxu0 %v1843
        %1892 = vmatmul.f32.gmra.mxu0 %v1848
        %v1893 = vpop.f32.mrf.mxu0
        %v1894 = vadd.f32 0.0, %v1893
        %1895 = vmatmul.f32.gmra.mxu0 %v1851
        %v1896 = vpop.f32.mrf.mxu0
        %v1897 = vadd.f32 0.0, %v1896
        %1898 = vdwg.mxu0
        %v1899 = vadd.f32 %v1833, %v1871
        %v1900 = vadd.f32 %v1834, %v1894
        %v1901 = vadd.f32 %v1835, %v1874
        %v1902 = vadd.f32 %v1836, %v1897
        %s1903 = scalar_lea.vmem %s3, 112
        %v1904 = vld [vmem:[%s1903] sm:$0xff]
        %v1905 = vld [vmem:[%s1903 + $0x8] sm:$0xff]
        %1906 = vrot.lane.b32.xlu0 %v1451, 95
        %v1907 = vpop.permute.xlu0 %1906
        %1908 = vrot.lane.b32.xlu0 %v1452, 95
        %v1909 = vpop.permute.xlu0 %1908
        %vm1910 = vcmask 777216
        %v1911 = vsel %vm1910, %v1907, %v1909
        %v1915 = vsel %vm1465, %v1904, 0
        %v1918 = vsel %vm1465, %v1905, 0
        %1920 = vmatpush.msra.mxu0 0.0
        %1921 = vmatpush.msra.mxu0 0.0
        %1922 = vmatpush.msra.mxu0 0.0
        %1923 = vmatpush.msra.mxu0 0.0
        %1924 = vmatpush.msra.mxu0 0.0
        %1925 = vmatpush.msra.mxu0 0.0
        %1926 = vmatpush.msra.mxu0 0.0
        %1927 = vmatpush.msra.mxu0 0.0
        %1928 = vmatpush.msra.mxu0 0.0
        %1929 = vmatpush.msra.mxu0 0.0
        %1930 = vmatpush.msra.mxu0 0.0
        %1931 = vmatpush.msra.mxu0 0.0
        %1932 = vmatpush.msra.mxu0 0.0
        %1933 = vmatpush.msra.mxu0 0.0
        %1934 = vmatpush.msra.mxu0 0.0
        %1935 = vmatpush.msra.mxu0 %v1911
        %1936 = vmatmul.f32.gmra.mxu0 %v1915
        %v1937 = vpop.f32.mrf.mxu0
        %v1938 = vadd.f32 0.0, %v1937
        %1939 = vmatmul.f32.gmra.mxu0 %v1918
        %v1940 = vpop.f32.mrf.mxu0
        %v1941 = vadd.f32 0.0, %v1940
        %1942 = vdwg.mxu0
        %1943 = vmatpush.msra.mxu0 0.0
        %1944 = vmatpush.msra.mxu0 0.0
        %1945 = vmatpush.msra.mxu0 0.0
        %1946 = vmatpush.msra.mxu0 0.0
        %1947 = vmatpush.msra.mxu0 0.0
        %1948 = vmatpush.msra.mxu0 0.0
        %1949 = vmatpush.msra.mxu0 0.0
        %1950 = vmatpush.msra.mxu0 0.0
        %1951 = vmatpush.msra.mxu0 0.0
        %1952 = vmatpush.msra.mxu0 0.0
        %1953 = vmatpush.msra.mxu0 0.0
        %1954 = vmatpush.msra.mxu0 0.0
        %1955 = vmatpush.msra.mxu0 0.0
        %1956 = vmatpush.msra.mxu0 0.0
        %1957 = vmatpush.msra.mxu0 0.0
        %1958 = vmatpush.msra.mxu0 %v1909
        %1959 = vmatmul.f32.gmra.mxu0 %v1915
        %v1960 = vpop.f32.mrf.mxu0
        %v1961 = vadd.f32 0.0, %v1960
        %1962 = vmatmul.f32.gmra.mxu0 %v1918
        %v1963 = vpop.f32.mrf.mxu0
        %v1964 = vadd.f32 0.0, %v1963
        %1965 = vdwg.mxu0
        %v1966 = vadd.f32 %v1899, %v1938
        %v1967 = vadd.f32 %v1900, %v1961
        %v1968 = vadd.f32 %v1901, %v1941
        %v1969 = vadd.f32 %v1902, %v1964
        %s1970 = scalar_lea.vmem %s3, 128
        %v1971 = vld [vmem:[%s1970] sm:$0xff]
        %v1972 = vld [vmem:[%s1970 + $0x8] sm:$0xff]
        %1973 = vrot.lane.b32.xlu0 %v1451, 94
        %v1974 = vpop.permute.xlu0 %1973
        %1975 = vrot.lane.b32.xlu0 %v1452, 94
        %v1976 = vpop.permute.xlu0 %1975
        %vm1977 = vcmask 769024
        %v1978 = vsel %vm1977, %v1974, %v1976
        %v1982 = vsel %vm1465, %v1971, 0
        %v1985 = vsel %vm1465, %v1972, 0
        %1987 = vmatpush.msra.mxu0 0.0
        %1988 = vmatpush.msra.mxu0 0.0
        %1989 = vmatpush.msra.mxu0 0.0
        %1990 = vmatpush.msra.mxu0 0.0
        %1991 = vmatpush.msra.mxu0 0.0
        %1992 = vmatpush.msra.mxu0 0.0
        %1993 = vmatpush.msra.mxu0 0.0
        %1994 = vmatpush.msra.mxu0 0.0
        %1995 = vmatpush.msra.mxu0 0.0
        %1996 = vmatpush.msra.mxu0 0.0
        %1997 = vmatpush.msra.mxu0 0.0
        %1998 = vmatpush.msra.mxu0 0.0
        %1999 = vmatpush.msra.mxu0 0.0
        %2000 = vmatpush.msra.mxu0 0.0
        %2001 = vmatpush.msra.mxu0 0.0
        %2002 = vmatpush.msra.mxu0 %v1978
        %2003 = vmatmul.f32.gmra.mxu0 %v1982
        %v2004 = vpop.f32.mrf.mxu0
        %v2005 = vadd.f32 0.0, %v2004
        %2006 = vmatmul.f32.gmra.mxu0 %v1985
        %v2007 = vpop.f32.mrf.mxu0
        %v2008 = vadd.f32 0.0, %v2007
        %2009 = vdwg.mxu0
        %2010 = vmatpush.msra.mxu0 0.0
        %2011 = vmatpush.msra.mxu0 0.0
        %2012 = vmatpush.msra.mxu0 0.0
        %2013 = vmatpush.msra.mxu0 0.0
        %2014 = vmatpush.msra.mxu0 0.0
        %2015 = vmatpush.msra.mxu0 0.0
        %2016 = vmatpush.msra.mxu0 0.0
        %2017 = vmatpush.msra.mxu0 0.0
        %2018 = vmatpush.msra.mxu0 0.0
        %2019 = vmatpush.msra.mxu0 0.0
        %2020 = vmatpush.msra.mxu0 0.0
        %2021 = vmatpush.msra.mxu0 0.0
        %2022 = vmatpush.msra.mxu0 0.0
        %2023 = vmatpush.msra.mxu0 0.0
        %2024 = vmatpush.msra.mxu0 0.0
        %2025 = vmatpush.msra.mxu0 %v1976
        %2026 = vmatmul.f32.gmra.mxu0 %v1982
        %v2027 = vpop.f32.mrf.mxu0
        %v2028 = vadd.f32 0.0, %v2027
        %2029 = vmatmul.f32.gmra.mxu0 %v1985
        %v2030 = vpop.f32.mrf.mxu0
        %v2031 = vadd.f32 0.0, %v2030
        %2032 = vdwg.mxu0
        %v2033 = vadd.f32 %v1966, %v2005
        %v2034 = vadd.f32 %v1967, %v2028
        %v2035 = vadd.f32 %v1968, %v2008
        %v2036 = vadd.f32 %v1969, %v2031
        %v2037 = vld [vmem:[%s4] sm:$0xff]
        %v2038 = vld [vmem:[%s4 + $0x8] sm:$0xff]
        %2040 = vset.pattern.permute.xlu0 0
        %2041 = vperm.xlu0 %2040, %v2037
        %v2042 = vpop.permute.xlu0 %2041
        %2045 = vset.pattern.permute.xlu0 0
        %2046 = vperm.xlu0 %2045, %v2038
        %v2047 = vpop.permute.xlu0 %2046
        %v2049 = vadd.f32 %v2033, %v2042
        %v2050 = vadd.f32 %v2034, %v2042
        %v2051 = vadd.f32 %v2035, %v2047
        %v2052 = vadd.f32 %v2036, %v2047
        %v2053 = vmax.f32 %v2049, 0.0
        %v2054 = vmax.f32 %v2050, 0.0
        %v2055 = vmax.f32 %v2051, 0.0
        %v2056 = vmax.f32 %v2052, 0.0
        %2057 = vst [vmem:[#allocation4] sm:$0xff] %v2053
        %2058 = vst.msk [vmem:[#allocation4 + $0x8] sm:$0xff] %vm1977, %v2054
        %2059 = vst [vmem:[#allocation4 + $0x10] sm:$0xff] %v2055
        %2060 = vst.msk [vmem:[#allocation4 + $0x18] sm:$0xff] %vm1977, %v2056
        %v2061 = vld [vmem:[#allocation4] sm:$0xff]
        %v2062 = vld [vmem:[#allocation4 + $0x8] sm:$0xff]
        %v2063 = vld [vmem:[#allocation4 + $0x10] sm:$0xff]
        %v2064 = vld [vmem:[#allocation4 + $0x18] sm:$0xff]
        %2069 = vrot.lane.b32.xlu0 %v2061, 127
        %v2070 = vpop.permute.xlu0 %2069
        %2071 = vrot.lane.b32.xlu0 %v2062, 127
        %v2072 = vpop.permute.xlu0 %2071
        %2073 = vrot.lane.b32.xlu0 %v2063, 127
        %v2074 = vpop.permute.xlu0 %2073
        %2075 = vrot.lane.b32.xlu0 %v2064, 127
        %v2076 = vpop.permute.xlu0 %2075
        %v2077 = vsel %vm391, %v2070, %v2072
        %v2078 = vsel %vm391, %v2074, %v2076
        %v2083 = vmax.f32 %v2061, %v2077
        %v2084 = vmax.f32 %v2062, %v2072
        %v2085 = vmax.f32 %v2063, %v2078
        %v2086 = vmax.f32 %v2064, %v2076
        %2091 = vrot.lane.b32.xlu0 %v2083, 112
        %v2092 = vpop.permute.xlu0 %2091
        %2093 = vrot.lane.b32.xlu0 %v2084, 112
        %v2094 = vpop.permute.xlu0 %2093
        %2095 = vrot.lane.b32.xlu0 %v2085, 112
        %v2096 = vpop.permute.xlu0 %2095
        %2097 = vrot.lane.b32.xlu0 %v2086, 112
        %v2098 = vpop.permute.xlu0 %2097
        %v2099 = vsel %vm1643, %v2092, %v2094
        %v2100 = vsel %vm1643, %v2096, %v2098
        %v2105 = vmax.f32 %v2083, %v2099
        %v2106 = vmax.f32 %v2084, %v2094
        %v2107 = vmax.f32 %v2085, %v2100
        %v2108 = vmax.f32 %v2086, %v2098
        %v2109 = vld [vmem:[%s6] sm:$0xff]
        %v2110 = vld [vmem:[%s6 + $0x8] sm:$0xff]
        %v2111 = vld [vmem:[%s6 + $0x10] sm:$0xff]
        %v2112 = vld [vmem:[%s6 + $0x18] sm:$0xff]
        %v2113 = vld [vmem:[%s6 + $0x20] sm:$0xff]
        %v2114 = vld [vmem:[%s6 + $0x28] sm:$0xff]
        %v2115 = vld [vmem:[%s6 + $0x30] sm:$0xff]
        %v2116 = vld [vmem:[%s6 + $0x38] sm:$0xff]
        %v2117 = vld [vmem:[%s6 + $0x40] sm:$0xff]
        %v2118 = vld [vmem:[%s6 + $0x48] sm:$0xff]
        %v2119 = vld [vmem:[%s6 + $0x50] sm:$0xff]
        %v2120 = vld [vmem:[%s6 + $0x58] sm:$0xff]
        %v2121 = vld [vmem:[%s6 + $0x60] sm:$0xff]
        %v2122 = vld [vmem:[%s6 + $0x68] sm:$0xff]
        %v2123 = vld [vmem:[%s6 + $0x70] sm:$0xff]
        %v2124 = vld [vmem:[%s6 + $0x78] sm:$0xff]
        %v2125 = vld [vmem:[%s6 + $0x80] sm:$0xff]
        %v2126 = vld [vmem:[%s6 + $0x88] sm:$0xff]
        %v2127 = vld [vmem:[%s6 + $0x90] sm:$0xff]
        %v2128 = vld [vmem:[%s6 + $0x98] sm:$0xff]
        %v2129 = vld [vmem:[%s6 + $0xa0] sm:$0xff]
        %v2130 = vld [vmem:[%s6 + $0xa8] sm:$0xff]
        %v2131 = vld [vmem:[%s6 + $0xb0] sm:$0xff]
        %v2132 = vld [vmem:[%s6 + $0xb8] sm:$0xff]
        %v2133 = vld [vmem:[%s6 + $0xc0] sm:$0xff]
        %v2134 = vld [vmem:[%s6 + $0xc8] sm:$0x1f]
        %vm2135 = vcmask 629760
        %v2137 = vsel %vm2135, %v2106, 0
        %v2140 = vsel %vm2135, %v2108, 0
        %vm2142 = vcmask 1044480
        %v2144 = vsel %vm2142, %v2134, 0
        %2146 = vmatpush.msra.mxu0 %v2124
        %2147 = vmatpush.msra.mxu0 %v2123
        %2148 = vmatpush.msra.mxu0 %v2122
        %2149 = vmatpush.msra.mxu0 %v2121
        %2150 = vmatpush.msra.mxu0 %v2120
        %2151 = vmatpush.msra.mxu0 %v2119
        %2152 = vmatpush.msra.mxu0 %v2118
        %2153 = vmatpush.msra.mxu0 %v2117
        %2154 = vmatpush.msra.mxu0 %v2116
        %2155 = vmatpush.msra.mxu0 %v2115
        %2156 = vmatpush.msra.mxu0 %v2114
        %2157 = vmatpush.msra.mxu0 %v2113
        %2158 = vmatpush.msra.mxu0 %v2112
        %2159 = vmatpush.msra.mxu0 %v2111
        %2160 = vmatpush.msra.mxu0 %v2110
        %2161 = vmatpush.msra.mxu0 %v2109
        %2162 = vmatmul.f32.gmra.mxu0 %v2105
        %v2163 = vpop.f32.mrf.mxu0
        %v2164 = vadd.f32 0.0, %v2163
        %2165 = vmatmul.f32.gmra.mxu0 %v2107
        %v2166 = vpop.f32.mrf.mxu0
        %v2167 = vadd.f32 0.0, %v2166
        %2168 = vdwg.mxu0
        %2169 = vmatpush.msra.mxu0 0.0
        %2170 = vmatpush.msra.mxu0 0.0
        %2171 = vmatpush.msra.mxu0 0.0
        %2172 = vmatpush.msra.mxu0 0.0
        %2173 = vmatpush.msra.mxu0 0.0
        %2174 = vmatpush.msra.mxu0 0.0
        %2175 = vmatpush.msra.mxu0 %v2144
        %2176 = vmatpush.msra.mxu0 %v2133
        %2177 = vmatpush.msra.mxu0 %v2132
        %2178 = vmatpush.msra.mxu0 %v2131
        %2179 = vmatpush.msra.mxu0 %v2130
        %2180 = vmatpush.msra.mxu0 %v2129
        %2181 = vmatpush.msra.mxu0 %v2128
        %2182 = vmatpush.msra.mxu0 %v2127
        %2183 = vmatpush.msra.mxu0 %v2126
        %2184 = vmatpush.msra.mxu0 %v2125
        %2185 = vmatmul.f32.gmra.mxu0 %v2137
        %v2186 = vpop.f32.mrf.mxu0
        %v2187 = vadd.f32 %v2164, %v2186
        %2188 = vmatmul.f32.gmra.mxu0 %v2140
        %v2189 = vpop.f32.mrf.mxu0
        %v2190 = vadd.f32 %v2167, %v2189
        %2191 = vdwg.mxu0
        %vm2192 = vcmask 400384
        %2193 = vst.msk [vmem:[#allocation5] sm:$0xff] %vm2192, %v2187
        %2194 = vst.msk [vmem:[#allocation5 + $0x8] sm:$0xff] %vm2192, %v2190
        %v2195 = vld [vmem:[%s8] sm:$0x1]
        %v2196 = vld [vmem:[#allocation5] sm:$0x1]
        %v2197 = vld [vmem:[%s7] sm:$0xff]
        %v2198 = vld [vmem:[%s7 + $0x8] sm:$0xff]
        %v2199 = vld [vmem:[%s7 + $0x10] sm:$0xff]
        %v2200 = vld [vmem:[%s7 + $0x18] sm:$0xff]
        %v2201 = vld [vmem:[%s7 + $0x20] sm:$0xff]
        %v2202 = vld [vmem:[%s7 + $0x28] sm:$0xff]
        %v2203 = vld [vmem:[%s7 + $0x30] sm:$0x1]
        %v2205 = vsel %vm2192, %v2196, 0
        %vm2207 = vcmask 1040384
        %v2209 = vsel %vm2207, %v2203, 0
        %2211 = vmatpush.msra.mxu0 0.0
        %2212 = vmatpush.msra.mxu0 0.0
        %2213 = vmatpush.msra.mxu0 0.0
        %2214 = vmatpush.msra.mxu0 0.0
        %2215 = vmatpush.msra.mxu0 0.0
        %2216 = vmatpush.msra.mxu0 0.0
        %2217 = vmatpush.msra.mxu0 0.0
        %2218 = vmatpush.msra.mxu0 0.0
        %2219 = vmatpush.msra.mxu0 0.0
        %2220 = vmatpush.msra.mxu0 %v2209
        %2221 = vmatpush.msra.mxu0 %v2202
        %2222 = vmatpush.msra.mxu0 %v2201
        %2223 = vmatpush.msra.mxu0 %v2200
        %2224 = vmatpush.msra.mxu0 %v2199
        %2225 = vmatpush.msra.mxu0 %v2198
        %2226 = vmatpush.msra.mxu0 %v2197
        %2227 = vmatmul.f32.gmra.mxu0 %v2205
        %v2228 = vpop.f32.mrf.mxu0
        %v2229 = vadd.f32 0.0, %v2228
        %2230 = vdwg.mxu0
        %v2231 = vadd.f32 %v2195, %v2229
        %v2232 = vld [vmem:[#allocation5 + $0x1] sm:$0x1]
        %s2233 = scalar_lea.vmem %s7, 56
        %v2234 = vld [vmem:[%s2233] sm:$0xff]
        %v2235 = vld [vmem:[%s2233 + $0x8] sm:$0xff]
        %v2236 = vld [vmem:[%s2233 + $0x10] sm:$0xff]
        %v2237 = vld [vmem:[%s2233 + $0x18] sm:$0xff]
        %v2238 = vld [vmem:[%s2233 + $0x20] sm:$0xff]
        %v2239 = vld [vmem:[%s2233 + $0x28] sm:$0xff]
        %v2240 = vld [vmem:[%s2233 + $0x30] sm:$0x1]
        %v2242 = vsel %vm2192, %v2232, 0
        %v2245 = vsel %vm2207, %v2240, 0
        %2247 = vmatpush.msra.mxu0 0.0
        %2248 = vmatpush.msra.mxu0 0.0
        %2249 = vmatpush.msra.mxu0 0.0
        %2250 = vmatpush.msra.mxu0 0.0
        %2251 = vmatpush.msra.mxu0 0.0
        %2252 = vmatpush.msra.mxu0 0.0
        %2253 = vmatpush.msra.mxu0 0.0
        %2254 = vmatpush.msra.mxu0 0.0
        %2255 = vmatpush.msra.mxu0 0.0
        %2256 = vmatpush.msra.mxu0 %v2245
        %2257 = vmatpush.msra.mxu0 %v2239
        %2258 = vmatpush.msra.mxu0 %v2238
        %2259 = vmatpush.msra.mxu0 %v2237
        %2260 = vmatpush.msra.mxu0 %v2236
        %2261 = vmatpush.msra.mxu0 %v2235
        %2262 = vmatpush.msra.mxu0 %v2234
        %2263 = vmatmul.f32.gmra.mxu0 %v2242
        %v2264 = vpop.f32.mrf.mxu0
        %v2265 = vadd.f32 0.0, %v2264
        %2266 = vdwg.mxu0
        %v2267 = vadd.f32 %v2231, %v2265
        %v2268 = vld [vmem:[#allocation5 + $0x2] sm:$0x1]
        %s2269 = scalar_lea.vmem %s7, 112
        %v2270 = vld [vmem:[%s2269] sm:$0xff]
        %v2271 = vld [vmem:[%s2269 + $0x8] sm:$0xff]
        %v2272 = vld [vmem:[%s2269 + $0x10] sm:$0xff]
        %v2273 = vld [vmem:[%s2269 + $0x18] sm:$0xff]
        %v2274 = vld [vmem:[%s2269 + $0x20] sm:$0xff]
        %v2275 = vld [vmem:[%s2269 + $0x28] sm:$0xff]
        %v2276 = vld [vmem:[%s2269 + $0x30] sm:$0x1]
        %v2278 = vsel %vm2192, %v2268, 0
        %v2281 = vsel %vm2207, %v2276, 0
        %2283 = vmatpush.msra.mxu0 0.0
        %2284 = vmatpush.msra.mxu0 0.0
        %2285 = vmatpush.msra.mxu0 0.0
        %2286 = vmatpush.msra.mxu0 0.0
        %2287 = vmatpush.msra.mxu0 0.0
        %2288 = vmatpush.msra.mxu0 0.0
        %2289 = vmatpush.msra.mxu0 0.0
        %2290 = vmatpush.msra.mxu0 0.0
        %2291 = vmatpush.msra.mxu0 0.0
        %2292 = vmatpush.msra.mxu0 %v2281
        %2293 = vmatpush.msra.mxu0 %v2275
        %2294 = vmatpush.msra.mxu0 %v2274
        %2295 = vmatpush.msra.mxu0 %v2273
        %2296 = vmatpush.msra.mxu0 %v2272
        %2297 = vmatpush.msra.mxu0 %v2271
        %2298 = vmatpush.msra.mxu0 %v2270
        %2299 = vmatmul.f32.gmra.mxu0 %v2278
        %v2300 = vpop.f32.mrf.mxu0
        %v2301 = vadd.f32 0.0, %v2300
        %2302 = vdwg.mxu0
        %v2303 = vadd.f32 %v2267, %v2301
        %v2304 = vld [vmem:[#allocation5 + $0x3] sm:$0x1]
        %s2305 = scalar_lea.vmem %s7, 168
        %v2306 = vld [vmem:[%s2305] sm:$0xff]
        %v2307 = vld [vmem:[%s2305 + $0x8] sm:$0xff]
        %v2308 = vld [vmem:[%s2305 + $0x10] sm:$0xff]
        %v2309 = vld [vmem:[%s2305 + $0x18] sm:$0xff]
        %v2310 = vld [vmem:[%s2305 + $0x20] sm:$0xff]
        %v2311 = vld [vmem:[%s2305 + $0x28] sm:$0xff]
        %v2312 = vld [vmem:[%s2305 + $0x30] sm:$0x1]
        %v2314 = vsel %vm2192, %v2304, 0
        %v2317 = vsel %vm2207, %v2312, 0
        %2319 = vmatpush.msra.mxu0 0.0
        %2320 = vmatpush.msra.mxu0 0.0
        %2321 = vmatpush.msra.mxu0 0.0
        %2322 = vmatpush.msra.mxu0 0.0
        %2323 = vmatpush.msra.mxu0 0.0
        %2324 = vmatpush.msra.mxu0 0.0
        %2325 = vmatpush.msra.mxu0 0.0
        %2326 = vmatpush.msra.mxu0 0.0
        %2327 = vmatpush.msra.mxu0 0.0
        %2328 = vmatpush.msra.mxu0 %v2317
        %2329 = vmatpush.msra.mxu0 %v2311
        %2330 = vmatpush.msra.mxu0 %v2310
        %2331 = vmatpush.msra.mxu0 %v2309
        %2332 = vmatpush.msra.mxu0 %v2308
        %2333 = vmatpush.msra.mxu0 %v2307
        %2334 = vmatpush.msra.mxu0 %v2306
        %2335 = vmatmul.f32.gmra.mxu0 %v2314
        %v2336 = vpop.f32.mrf.mxu0
        %v2337 = vadd.f32 0.0, %v2336
        %2338 = vdwg.mxu0
        %v2339 = vadd.f32 %v2303, %v2337
        %v2340 = vld [vmem:[#allocation5 + $0x4] sm:$0x1]
        %s2341 = scalar_lea.vmem %s7, 224
        %v2342 = vld [vmem:[%s2341] sm:$0xff]
        %v2343 = vld [vmem:[%s2341 + $0x8] sm:$0xff]
        %v2344 = vld [vmem:[%s2341 + $0x10] sm:$0xff]
        %v2345 = vld [vmem:[%s2341 + $0x18] sm:$0xff]
        %v2346 = vld [vmem:[%s2341 + $0x20] sm:$0xff]
        %v2347 = vld [vmem:[%s2341 + $0x28] sm:$0xff]
        %v2348 = vld [vmem:[%s2341 + $0x30] sm:$0x1]
        %v2350 = vsel %vm2192, %v2340, 0
        %v2353 = vsel %vm2207, %v2348, 0
        %2355 = vmatpush.msra.mxu0 0.0
        %2356 = vmatpush.msra.mxu0 0.0
        %2357 = vmatpush.msra.mxu0 0.0
        %2358 = vmatpush.msra.mxu0 0.0
        %2359 = vmatpush.msra.mxu0 0.0
        %2360 = vmatpush.msra.mxu0 0.0
        %2361 = vmatpush.msra.mxu0 0.0
        %2362 = vmatpush.msra.mxu0 0.0
        %2363 = vmatpush.msra.mxu0 0.0
        %2364 = vmatpush.msra.mxu0 %v2353
        %2365 = vmatpush.msra.mxu0 %v2347
        %2366 = vmatpush.msra.mxu0 %v2346
        %2367 = vmatpush.msra.mxu0 %v2345
        %2368 = vmatpush.msra.mxu0 %v2344
        %2369 = vmatpush.msra.mxu0 %v2343
        %2370 = vmatpush.msra.mxu0 %v2342
        %2371 = vmatmul.f32.gmra.mxu0 %v2350
        %v2372 = vpop.f32.mrf.mxu0
        %v2373 = vadd.f32 0.0, %v2372
        %2374 = vdwg.mxu0
        %v2375 = vadd.f32 %v2339, %v2373
        %v2376 = vld [vmem:[#allocation5 + $0x5] sm:$0x1]
        %s2377 = scalar_lea.vmem %s7, 280
        %v2378 = vld [vmem:[%s2377] sm:$0xff]
        %v2379 = vld [vmem:[%s2377 + $0x8] sm:$0xff]
        %v2380 = vld [vmem:[%s2377 + $0x10] sm:$0xff]
        %v2381 = vld [vmem:[%s2377 + $0x18] sm:$0xff]
        %v2382 = vld [vmem:[%s2377 + $0x20] sm:$0xff]
        %v2383 = vld [vmem:[%s2377 + $0x28] sm:$0xff]
        %v2384 = vld [vmem:[%s2377 + $0x30] sm:$0x1]
        %v2386 = vsel %vm2192, %v2376, 0
        %v2389 = vsel %vm2207, %v2384, 0
        %2391 = vmatpush.msra.mxu0 0.0
        %2392 = vmatpush.msra.mxu0 0.0
        %2393 = vmatpush.msra.mxu0 0.0
        %2394 = vmatpush.msra.mxu0 0.0
        %2395 = vmatpush.msra.mxu0 0.0
        %2396 = vmatpush.msra.mxu0 0.0
        %2397 = vmatpush.msra.mxu0 0.0
        %2398 = vmatpush.msra.mxu0 0.0
        %2399 = vmatpush.msra.mxu0 0.0
        %2400 = vmatpush.msra.mxu0 %v2389
        %2401 = vmatpush.msra.mxu0 %v2383
        %2402 = vmatpush.msra.mxu0 %v2382
        %2403 = vmatpush.msra.mxu0 %v2381
        %2404 = vmatpush.msra.mxu0 %v2380
        %2405 = vmatpush.msra.mxu0 %v2379
        %2406 = vmatpush.msra.mxu0 %v2378
        %2407 = vmatmul.f32.gmra.mxu0 %v2386
        %v2408 = vpop.f32.mrf.mxu0
        %v2409 = vadd.f32 0.0, %v2408
        %2410 = vdwg.mxu0
        %v2411 = vadd.f32 %v2375, %v2409
        %v2412 = vld [vmem:[#allocation5 + $0x6] sm:$0x1]
        %s2413 = scalar_lea.vmem %s7, 336
        %v2414 = vld [vmem:[%s2413] sm:$0xff]
        %v2415 = vld [vmem:[%s2413 + $0x8] sm:$0xff]
        %v2416 = vld [vmem:[%s2413 + $0x10] sm:$0xff]
        %v2417 = vld [vmem:[%s2413 + $0x18] sm:$0xff]
        %v2418 = vld [vmem:[%s2413 + $0x20] sm:$0xff]
        %v2419 = vld [vmem:[%s2413 + $0x28] sm:$0xff]
        %v2420 = vld [vmem:[%s2413 + $0x30] sm:$0x1]
        %v2422 = vsel %vm2192, %v2412, 0
        %v2425 = vsel %vm2207, %v2420, 0
        %2427 = vmatpush.msra.mxu0 0.0
        %2428 = vmatpush.msra.mxu0 0.0
        %2429 = vmatpush.msra.mxu0 0.0
        %2430 = vmatpush.msra.mxu0 0.0
        %2431 = vmatpush.msra.mxu0 0.0
        %2432 = vmatpush.msra.mxu0 0.0
        %2433 = vmatpush.msra.mxu0 0.0
        %2434 = vmatpush.msra.mxu0 0.0
        %2435 = vmatpush.msra.mxu0 0.0
        %2436 = vmatpush.msra.mxu0 %v2425
        %2437 = vmatpush.msra.mxu0 %v2419
        %2438 = vmatpush.msra.mxu0 %v2418
        %2439 = vmatpush.msra.mxu0 %v2417
        %2440 = vmatpush.msra.mxu0 %v2416
        %2441 = vmatpush.msra.mxu0 %v2415
        %2442 = vmatpush.msra.mxu0 %v2414
        %2443 = vmatmul.f32.gmra.mxu0 %v2422
        %v2444 = vpop.f32.mrf.mxu0
        %v2445 = vadd.f32 0.0, %v2444
        %2446 = vdwg.mxu0
        %v2447 = vadd.f32 %v2411, %v2445
        %v2448 = vld [vmem:[#allocation5 + $0x7] sm:$0x1]
        %s2449 = scalar_lea.vmem %s7, 392
        %v2450 = vld [vmem:[%s2449] sm:$0xff]
        %v2451 = vld [vmem:[%s2449 + $0x8] sm:$0xff]
        %v2452 = vld [vmem:[%s2449 + $0x10] sm:$0xff]
        %v2453 = vld [vmem:[%s2449 + $0x18] sm:$0xff]
        %v2454 = vld [vmem:[%s2449 + $0x20] sm:$0xff]
        %v2455 = vld [vmem:[%s2449 + $0x28] sm:$0xff]
        %v2456 = vld [vmem:[%s2449 + $0x30] sm:$0x1]
        %v2458 = vsel %vm2192, %v2448, 0
        %v2461 = vsel %vm2207, %v2456, 0
        %2463 = vmatpush.msra.mxu0 0.0
        %2464 = vmatpush.msra.mxu0 0.0
        %2465 = vmatpush.msra.mxu0 0.0
        %2466 = vmatpush.msra.mxu0 0.0
        %2467 = vmatpush.msra.mxu0 0.0
        %2468 = vmatpush.msra.mxu0 0.0
        %2469 = vmatpush.msra.mxu0 0.0
        %2470 = vmatpush.msra.mxu0 0.0
        %2471 = vmatpush.msra.mxu0 0.0
        %2472 = vmatpush.msra.mxu0 %v2461
        %2473 = vmatpush.msra.mxu0 %v2455
        %2474 = vmatpush.msra.mxu0 %v2454
        %2475 = vmatpush.msra.mxu0 %v2453
        %2476 = vmatpush.msra.mxu0 %v2452
        %2477 = vmatpush.msra.mxu0 %v2451
        %2478 = vmatpush.msra.mxu0 %v2450
        %2479 = vmatmul.f32.gmra.mxu0 %v2458
        %v2480 = vpop.f32.mrf.mxu0
        %v2481 = vadd.f32 0.0, %v2480
        %2482 = vdwg.mxu0
        %v2483 = vadd.f32 %v2447, %v2481
        %v2484 = vld [vmem:[#allocation5 + $0x8] sm:$0x1]
        %s2485 = scalar_lea.vmem %s7, 448
        %v2486 = vld [vmem:[%s2485] sm:$0xff]
        %v2487 = vld [vmem:[%s2485 + $0x8] sm:$0xff]
        %v2488 = vld [vmem:[%s2485 + $0x10] sm:$0xff]
        %v2489 = vld [vmem:[%s2485 + $0x18] sm:$0xff]
        %v2490 = vld [vmem:[%s2485 + $0x20] sm:$0xff]
        %v2491 = vld [vmem:[%s2485 + $0x28] sm:$0xff]
        %v2492 = vld [vmem:[%s2485 + $0x30] sm:$0x1]
        %v2494 = vsel %vm2192, %v2484, 0
        %v2497 = vsel %vm2207, %v2492, 0
        %2499 = vmatpush.msra.mxu0 0.0
        %2500 = vmatpush.msra.mxu0 0.0
        %2501 = vmatpush.msra.mxu0 0.0
        %2502 = vmatpush.msra.mxu0 0.0
        %2503 = vmatpush.msra.mxu0 0.0
        %2504 = vmatpush.msra.mxu0 0.0
        %2505 = vmatpush.msra.mxu0 0.0
        %2506 = vmatpush.msra.mxu0 0.0
        %2507 = vmatpush.msra.mxu0 0.0
        %2508 = vmatpush.msra.mxu0 %v2497
        %2509 = vmatpush.msra.mxu0 %v2491
        %2510 = vmatpush.msra.mxu0 %v2490
        %2511 = vmatpush.msra.mxu0 %v2489
        %2512 = vmatpush.msra.mxu0 %v2488
        %2513 = vmatpush.msra.mxu0 %v2487
        %2514 = vmatpush.msra.mxu0 %v2486
        %2515 = vmatmul.f32.gmra.mxu0 %v2494
        %v2516 = vpop.f32.mrf.mxu0
        %v2517 = vadd.f32 0.0, %v2516
        %2518 = vdwg.mxu0
        %v2519 = vadd.f32 %v2483, %v2517
        %v2520 = vld [vmem:[#allocation5 + $0x9] sm:$0x1]
        %s2521 = scalar_lea.vmem %s7, 504
        %v2522 = vld [vmem:[%s2521] sm:$0xff]
        %v2523 = vld [vmem:[%s2521 + $0x8] sm:$0xff]
        %v2524 = vld [vmem:[%s2521 + $0x10] sm:$0xff]
        %v2525 = vld [vmem:[%s2521 + $0x18] sm:$0xff]
        %v2526 = vld [vmem:[%s2521 + $0x20] sm:$0xff]
        %v2527 = vld [vmem:[%s2521 + $0x28] sm:$0xff]
        %v2528 = vld [vmem:[%s2521 + $0x30] sm:$0x1]
        %v2530 = vsel %vm2192, %v2520, 0
        %v2533 = vsel %vm2207, %v2528, 0
        %2535 = vmatpush.msra.mxu0 0.0
        %2536 = vmatpush.msra.mxu0 0.0
        %2537 = vmatpush.msra.mxu0 0.0
        %2538 = vmatpush.msra.mxu0 0.0
        %2539 = vmatpush.msra.mxu0 0.0
        %2540 = vmatpush.msra.mxu0 0.0
        %2541 = vmatpush.msra.mxu0 0.0
        %2542 = vmatpush.msra.mxu0 0.0
        %2543 = vmatpush.msra.mxu0 0.0
        %2544 = vmatpush.msra.mxu0 %v2533
        %2545 = vmatpush.msra.mxu0 %v2527
        %2546 = vmatpush.msra.mxu0 %v2526
        %2547 = vmatpush.msra.mxu0 %v2525
        %2548 = vmatpush.msra.mxu0 %v2524
        %2549 = vmatpush.msra.mxu0 %v2523
        %2550 = vmatpush.msra.mxu0 %v2522
        %2551 = vmatmul.f32.gmra.mxu0 %v2530
        %v2552 = vpop.f32.mrf.mxu0
        %v2553 = vadd.f32 0.0, %v2552
        %2554 = vdwg.mxu0
        %v2555 = vadd.f32 %v2519, %v2553
        %v2556 = vld [vmem:[#allocation5 + $0xa] sm:$0x1]
        %s2557 = scalar_lea.vmem %s7, 560
        %v2558 = vld [vmem:[%s2557] sm:$0xff]
        %v2559 = vld [vmem:[%s2557 + $0x8] sm:$0xff]
        %v2560 = vld [vmem:[%s2557 + $0x10] sm:$0xff]
        %v2561 = vld [vmem:[%s2557 + $0x18] sm:$0xff]
        %v2562 = vld [vmem:[%s2557 + $0x20] sm:$0xff]
        %v2563 = vld [vmem:[%s2557 + $0x28] sm:$0xff]
        %v2564 = vld [vmem:[%s2557 + $0x30] sm:$0x1]
        %v2566 = vsel %vm2192, %v2556, 0
        %v2569 = vsel %vm2207, %v2564, 0
        %2571 = vmatpush.msra.mxu0 0.0
        %2572 = vmatpush.msra.mxu0 0.0
        %2573 = vmatpush.msra.mxu0 0.0
        %2574 = vmatpush.msra.mxu0 0.0
        %2575 = vmatpush.msra.mxu0 0.0
        %2576 = vmatpush.msra.mxu0 0.0
        %2577 = vmatpush.msra.mxu0 0.0
        %2578 = vmatpush.msra.mxu0 0.0
        %2579 = vmatpush.msra.mxu0 0.0
        %2580 = vmatpush.msra.mxu0 %v2569
        %2581 = vmatpush.msra.mxu0 %v2563
        %2582 = vmatpush.msra.mxu0 %v2562
        %2583 = vmatpush.msra.mxu0 %v2561
        %2584 = vmatpush.msra.mxu0 %v2560
        %2585 = vmatpush.msra.mxu0 %v2559
        %2586 = vmatpush.msra.mxu0 %v2558
        %2587 = vmatmul.f32.gmra.mxu0 %v2566
        %v2588 = vpop.f32.mrf.mxu0
        %v2589 = vadd.f32 0.0, %v2588
        %2590 = vdwg.mxu0
        %v2591 = vadd.f32 %v2555, %v2589
        %v2592 = vld [vmem:[#allocation5 + $0xb] sm:$0x1]
        %s2593 = scalar_lea.vmem %s7, 616
        %v2594 = vld [vmem:[%s2593] sm:$0xff]
        %v2595 = vld [vmem:[%s2593 + $0x8] sm:$0xff]
        %v2596 = vld [vmem:[%s2593 + $0x10] sm:$0xff]
        %v2597 = vld [vmem:[%s2593 + $0x18] sm:$0xff]
        %v2598 = vld [vmem:[%s2593 + $0x20] sm:$0xff]
        %v2599 = vld [vmem:[%s2593 + $0x28] sm:$0xff]
        %v2600 = vld [vmem:[%s2593 + $0x30] sm:$0x1]
        %v2602 = vsel %vm2192, %v2592, 0
        %v2605 = vsel %vm2207, %v2600, 0
        %2607 = vmatpush.msra.mxu0 0.0
        %2608 = vmatpush.msra.mxu0 0.0
        %2609 = vmatpush.msra.mxu0 0.0
        %2610 = vmatpush.msra.mxu0 0.0
        %2611 = vmatpush.msra.mxu0 0.0
        %2612 = vmatpush.msra.mxu0 0.0
        %2613 = vmatpush.msra.mxu0 0.0
        %2614 = vmatpush.msra.mxu0 0.0
        %2615 = vmatpush.msra.mxu0 0.0
        %2616 = vmatpush.msra.mxu0 %v2605
        %2617 = vmatpush.msra.mxu0 %v2599
        %2618 = vmatpush.msra.mxu0 %v2598
        %2619 = vmatpush.msra.mxu0 %v2597
        %2620 = vmatpush.msra.mxu0 %v2596
        %2621 = vmatpush.msra.mxu0 %v2595
        %2622 = vmatpush.msra.mxu0 %v2594
        %2623 = vmatmul.f32.gmra.mxu0 %v2602
        %v2624 = vpop.f32.mrf.mxu0
        %v2625 = vadd.f32 0.0, %v2624
        %2626 = vdwg.mxu0
        %v2627 = vadd.f32 %v2591, %v2625
        %v2628 = vld [vmem:[#allocation5 + $0xc] sm:$0x1]
        %s2629 = scalar_lea.vmem %s7, 672
        %v2630 = vld [vmem:[%s2629] sm:$0xff]
        %v2631 = vld [vmem:[%s2629 + $0x8] sm:$0xff]
        %v2632 = vld [vmem:[%s2629 + $0x10] sm:$0xff]
        %v2633 = vld [vmem:[%s2629 + $0x18] sm:$0xff]
        %v2634 = vld [vmem:[%s2629 + $0x20] sm:$0xff]
        %v2635 = vld [vmem:[%s2629 + $0x28] sm:$0xff]
        %v2636 = vld [vmem:[%s2629 + $0x30] sm:$0x1]
        %v2638 = vsel %vm2192, %v2628, 0
        %v2641 = vsel %vm2207, %v2636, 0
        %2643 = vmatpush.msra.mxu0 0.0
        %2644 = vmatpush.msra.mxu0 0.0
        %2645 = vmatpush.msra.mxu0 0.0
        %2646 = vmatpush.msra.mxu0 0.0
        %2647 = vmatpush.msra.mxu0 0.0
        %2648 = vmatpush.msra.mxu0 0.0
        %2649 = vmatpush.msra.mxu0 0.0
        %2650 = vmatpush.msra.mxu0 0.0
        %2651 = vmatpush.msra.mxu0 0.0
        %2652 = vmatpush.msra.mxu0 %v2641
        %2653 = vmatpush.msra.mxu0 %v2635
        %2654 = vmatpush.msra.mxu0 %v2634
        %2655 = vmatpush.msra.mxu0 %v2633
        %2656 = vmatpush.msra.mxu0 %v2632
        %2657 = vmatpush.msra.mxu0 %v2631
        %2658 = vmatpush.msra.mxu0 %v2630
        %2659 = vmatmul.f32.gmra.mxu0 %v2638
        %v2660 = vpop.f32.mrf.mxu0
        %v2661 = vadd.f32 0.0, %v2660
        %2662 = vdwg.mxu0
        %v2663 = vadd.f32 %v2627, %v2661
        %v2664 = vld [vmem:[#allocation5 + $0xd] sm:$0x1]
        %s2665 = scalar_lea.vmem %s7, 728
        %v2666 = vld [vmem:[%s2665] sm:$0xff]
        %v2667 = vld [vmem:[%s2665 + $0x8] sm:$0xff]
        %v2668 = vld [vmem:[%s2665 + $0x10] sm:$0xff]
        %v2669 = vld [vmem:[%s2665 + $0x18] sm:$0xff]
        %v2670 = vld [vmem:[%s2665 + $0x20] sm:$0xff]
        %v2671 = vld [vmem:[%s2665 + $0x28] sm:$0xff]
        %v2672 = vld [vmem:[%s2665 + $0x30] sm:$0x1]
        %v2674 = vsel %vm2192, %v2664, 0
        %v2677 = vsel %vm2207, %v2672, 0
        %2679 = vmatpush.msra.mxu0 0.0
        %2680 = vmatpush.msra.mxu0 0.0
        %2681 = vmatpush.msra.mxu0 0.0
        %2682 = vmatpush.msra.mxu0 0.0
        %2683 = vmatpush.msra.mxu0 0.0
        %2684 = vmatpush.msra.mxu0 0.0
        %2685 = vmatpush.msra.mxu0 0.0
        %2686 = vmatpush.msra.mxu0 0.0
        %2687 = vmatpush.msra.mxu0 0.0
        %2688 = vmatpush.msra.mxu0 %v2677
        %2689 = vmatpush.msra.mxu0 %v2671
        %2690 = vmatpush.msra.mxu0 %v2670
        %2691 = vmatpush.msra.mxu0 %v2669
        %2692 = vmatpush.msra.mxu0 %v2668
        %2693 = vmatpush.msra.mxu0 %v2667
        %2694 = vmatpush.msra.mxu0 %v2666
        %2695 = vmatmul.f32.gmra.mxu0 %v2674
        %v2696 = vpop.f32.mrf.mxu0
        %v2697 = vadd.f32 0.0, %v2696
        %2698 = vdwg.mxu0
        %v2699 = vadd.f32 %v2663, %v2697
        %v2700 = vld [vmem:[#allocation5 + $0xe] sm:$0x1]
        %s2701 = scalar_lea.vmem %s7, 784
        %v2702 = vld [vmem:[%s2701] sm:$0xff]
        %v2703 = vld [vmem:[%s2701 + $0x8] sm:$0xff]
        %v2704 = vld [vmem:[%s2701 + $0x10] sm:$0xff]
        %v2705 = vld [vmem:[%s2701 + $0x18] sm:$0xff]
        %v2706 = vld [vmem:[%s2701 + $0x20] sm:$0xff]
        %v2707 = vld [vmem:[%s2701 + $0x28] sm:$0xff]
        %v2708 = vld [vmem:[%s2701 + $0x30] sm:$0x1]
        %v2710 = vsel %vm2192, %v2700, 0
        %v2713 = vsel %vm2207, %v2708, 0
        %2715 = vmatpush.msra.mxu0 0.0
        %2716 = vmatpush.msra.mxu0 0.0
        %2717 = vmatpush.msra.mxu0 0.0
        %2718 = vmatpush.msra.mxu0 0.0
        %2719 = vmatpush.msra.mxu0 0.0
        %2720 = vmatpush.msra.mxu0 0.0
        %2721 = vmatpush.msra.mxu0 0.0
        %2722 = vmatpush.msra.mxu0 0.0
        %2723 = vmatpush.msra.mxu0 0.0
        %2724 = vmatpush.msra.mxu0 %v2713
        %2725 = vmatpush.msra.mxu0 %v2707
        %2726 = vmatpush.msra.mxu0 %v2706
        %2727 = vmatpush.msra.mxu0 %v2705
        %2728 = vmatpush.msra.mxu0 %v2704
        %2729 = vmatpush.msra.mxu0 %v2703
        %2730 = vmatpush.msra.mxu0 %v2702
        %2731 = vmatmul.f32.gmra.mxu0 %v2710
        %v2732 = vpop.f32.mrf.mxu0
        %v2733 = vadd.f32 0.0, %v2732
        %2734 = vdwg.mxu0
        %v2735 = vadd.f32 %v2699, %v2733
        %v2736 = vld [vmem:[#allocation5 + $0xf] sm:$0x1]
        %s2737 = scalar_lea.vmem %s7, 840
        %v2738 = vld [vmem:[%s2737] sm:$0xff]
        %v2739 = vld [vmem:[%s2737 + $0x8] sm:$0xff]
        %v2740 = vld [vmem:[%s2737 + $0x10] sm:$0xff]
        %v2741 = vld [vmem:[%s2737 + $0x18] sm:$0xff]
        %v2742 = vld [vmem:[%s2737 + $0x20] sm:$0xff]
        %v2743 = vld [vmem:[%s2737 + $0x28] sm:$0xff]
        %v2744 = vld [vmem:[%s2737 + $0x30] sm:$0x1]
        %v2746 = vsel %vm2192, %v2736, 0
        %v2749 = vsel %vm2207, %v2744, 0
        %2751 = vmatpush.msra.mxu0 0.0
        %2752 = vmatpush.msra.mxu0 0.0
        %2753 = vmatpush.msra.mxu0 0.0
        %2754 = vmatpush.msra.mxu0 0.0
        %2755 = vmatpush.msra.mxu0 0.0
        %2756 = vmatpush.msra.mxu0 0.0
        %2757 = vmatpush.msra.mxu0 0.0
        %2758 = vmatpush.msra.mxu0 0.0
        %2759 = vmatpush.msra.mxu0 0.0
        %2760 = vmatpush.msra.mxu0 %v2749
        %2761 = vmatpush.msra.mxu0 %v2743
        %2762 = vmatpush.msra.mxu0 %v2742
        %2763 = vmatpush.msra.mxu0 %v2741
        %2764 = vmatpush.msra.mxu0 %v2740
        %2765 = vmatpush.msra.mxu0 %v2739
        %2766 = vmatpush.msra.mxu0 %v2738
        %2767 = vmatmul.f32.gmra.mxu0 %v2746
        %v2768 = vpop.f32.mrf.mxu0
        %v2769 = vadd.f32 0.0, %v2768
        %2770 = vdwg.mxu0
        %v2771 = vadd.f32 %v2735, %v2769
        %2772 = vst [vmem:[%s322] sm:$0x1] %v2771
        %s2773 = sand.u32 %s225, 1
        %s2774 = scalar_lea.sflag [#allocation7], %s2773
        %s2775 = sand.u32 %s225, 1
        %s2776 = scalar_lea.vmem [#allocation6], %s2775
        // Predicated region
        $region57: #{cnn_forward.1} parent=55 // pred_check
          %p2777 = pneg %p235
        $region58: #{cnn_forward.1} parent=55 // pred_check_branch
          %2779 = sbr.rel (%p2777) target = $region60
        $region59: #{cnn_forward.1} parent=55 // pred_region
          %2781 = vsyncadd %s2774, 0
          %s2782 = scalar_lea.hbm %s9, %s23
          %s2784 = sshll.u32 %s2776, 4
          %s2785 = int_to_ptr.vmem [resolvable:$true] %s2784
          %s2786 = sshll.u32 %s2782, 4
          %s2787 = int_to_ptr.hbm [resolvable:$true] %s2786
          %2789 = dma.vmem_to_hbm [thread:$0]  %s2785, 16, %s2787, %s2774
        $region60: #{cnn_forward.1} parent=55 // pred_fallthru
          _
      $region56: #{cnn_forward.1} parent=5 // pred_fallthru
        _
      %p2790 = scmp.le.s32.totalorder 2, %s18
      // Predicated region
      $region61: #{cnn_forward.1} parent=5 // pred_check
        %p2791 = pneg %p2790
      $region62: #{cnn_forward.1} parent=5 // pred_check_branch
        %2793 = sbr.rel (%p2791) target = $region64
      $region63: #{cnn_forward.1} parent=5 // pred_region
        %s2794 = ssub.s32 %s18, 2
        // Predicated region
        $region65: #{cnn_forward.1} parent=63 // pred_check
          %p2795 = pneg %p241
        $region66: #{cnn_forward.1} parent=63 // pred_check_branch
          %2797 = sbr.rel (%p2795) target = $region68
        $region67: #{cnn_forward.1} parent=63 // pred_region
          %s2798 = sand.u32 %s226, 1
          %s2799 = scalar_lea.sflag [#allocation7], %s2798
          %s2800 = sand.u32 %s226, 1
          %s2801 = scalar_lea.vmem [#allocation6], %s2800
          %2803 = dma.done %s2799, 16
        $region68: #{cnn_forward.1} parent=63 // pred_fallthru
          _
      $region64: #{cnn_forward.1} parent=5 // pred_fallthru
        _
    $region6: #{cnn_forward.1} parent=1 // loop_footer
      %s22 = sadd.s32 1, %s18
    $region7: #{cnn_forward.1} parent=1 // loop_footer_branch
      %17 = sbr.rel target = $region3
    $region8: #{cnn_forward.1} parent=1 // loop_exit
      _
    %2804 = vsyncpa [#allocation7], 1
    %s2805 = scalar_lea.sflag [#allocation7], 1
    %2806 = vsyncpa %s2805, 1

</llo_original>
